<compile_context>
chip_gen: v7x
topology: tpu7x:2x2x1
jax: 0.10.0
libtpu: 0.0.40
codegen_flags: <defaults>
</compile_context>

<pallas_src>
import jax
import jax.numpy as jnp
from jax.experimental import pallas as pl
from jax.experimental.pallas import tpu as pltpu

TILE_Q = 1024  # output pixels (padded coords) per grid step; 128-aligned, lane-dense


def _make_kernel(tap_offsets, guard, tile_q):
    """Build the conv+hardswish kernel for static tap offsets / tile size."""

    def kernel(x_ref, w_ref, b_ref, o_ref):
        # x_ref: (1, Cin, tile_q + 2*guard)  haloed chunk of flattened padded image
        # w_ref: (9, Cout, Cin)              per-tap weight matrices
        # b_ref: (Cout, 1)                   bias
        # o_ref: (Cout, tile_q)              lane-dense output tile
        cout = w_ref.shape[1]
        acc = jnp.zeros((cout, tile_q), dtype=jnp.float32)
        for t, d in enumerate(tap_offsets):
            s = guard + d                              # static, in [0, 2*guard]
            xs = x_ref[0, :, s:s + tile_q]             # (Cin, tile_q) static slice
            acc = acc + jnp.dot(w_ref[t], xs,
                                preferred_element_type=jnp.float32)
        v1 = acc + b_ref[...]                          # conv output (+bias)
        v3 = jnp.clip(v1 + 3.0, 0.0, 6.0)
        o_ref[...] = (v1 * v3 * (1.0 / 6.0)).astype(o_ref.dtype)  # mul by 1/6

    return kernel


def conv2d_hardswish_pallas(x_nchw, weight, bias, *, tile_q=TILE_Q):
    """x_nchw: (N, Cin, H, W); weight: (Cout, Cin, 3, 3) [OIHW]; bias: (Cout,)."""
    N, Cin, H, W = x_nchw.shape
    Cout, _, KH, KW = weight.shape
    Hp, Wp = H + 2, W + 2

    # ---- layout prep (cheap, ~1x input bytes; no 9x im2col buffer) ----
    # channel-major, spatially zero-padded, flattened padded pixel coordinates
    xp = jnp.pad(jnp.transpose(x_nchw, (1, 0, 2, 3)),
                 ((0, 0), (0, 0), (1, 1), (1, 1)))          # (Cin, N, Hp, Wp)
    Q = N * Hp * Wp
    xflat = xp.reshape(Cin, Q)                              # (Cin, Q)

    # halo so every tap of every pixel in a tile is an in-chunk static slice
    guard = ((Wp + 1 + 127) // 128) * 128                   # 128-aligned halo
    nq = -(-Q // tile_q)                                    # grid size (>=2 for 64x64)
    chunk = tile_q + 2 * guard
    xsrc = jnp.pad(xflat, ((0, 0), (guard, nq * tile_q + guard - Q)))
    # overlapping chunks: only ~2*guard/tile_q extra bytes (~25%), not 9x
    chunks = jnp.stack(
        [xsrc[:, b * tile_q: b * tile_q + chunk] for b in range(nq)], axis=0)

    # per-tap (Cout, Cin) weight matrices, tap order (kh, kw)
    wtaps = jnp.transpose(weight, (2, 3, 0, 1)).reshape(KH * KW, Cout, Cin)
    bmat = bias.reshape(Cout, 1)
    tap_offsets = tuple((kh - 1) * Wp + (kw - 1)
                        for kh in range(KH) for kw in range(KW))

    kernel = _make_kernel(tap_offsets, guard, tile_q)

    out_flat = pl.pallas_call(
        kernel,
        out_shape=jax.ShapeDtypeStruct((Cout, nq * tile_q), jnp.float32),
        grid_spec=pltpu.PrefetchScalarGridSpec(
            num_scalar_prefetch=0,
            grid=(nq,),
            in_specs=[
                pl.BlockSpec((1, Cin, chunk), lambda b: (b, 0, 0)),       # chunk
                pl.BlockSpec((KH * KW, Cout, Cin), lambda b: (0, 0, 0)),  # weights
                pl.BlockSpec((Cout, 1), lambda b: (0, 0)),                # bias
            ],
            out_specs=pl.BlockSpec((Cout, tile_q), lambda b: (0, b)),
        ),
        compiler_params=pltpu.CompilerParams(
            dimension_semantics=("parallel",)),
    )(chunks, wtaps, bmat)

    # drop padded-coordinate rows/cols and return NCHW
    out = out_flat[:, :Q].reshape(Cout, N, Hp, Wp)[:, :, 1:1 + H, 1:1 + W]
    return jnp.transpose(out, (1, 0, 2, 3))


def _reference(x_nchw, weight, bias):
    v1 = jax.lax.conv_general_dilated(
        x_nchw, weight, window_strides=(1, 1), padding=((1, 1), (1, 1)),
        dimension_numbers=("NCHW", "OIHW", "NCHW"))
    v1 = v1 + bias.reshape(1, -1, 1, 1)
    v3 = jnp.clip(v1 + 3.0, 0.0, 6.0)
    return v1 * v3 / 6.0


if __name__ == "__main__":
    key = jax.random.PRNGKey(0)
    kx, kw, kb = jax.random.split(key, 3)

    # Shapes matching the module's own example input (1, 3, 64, 64); Cout=8.
    N, Cin, H, W, Cout = 1, 3, 64, 64, 8
    x = jax.random.normal(kx, (N, Cin, H, W), dtype=jnp.float32)

    # Deterministic Conv2d-style init: uniform(-1/sqrt(fan_in), 1/sqrt(fan_in))
    fan_in = Cin * 3 * 3
    bound = 1.0 / (fan_in ** 0.5)
    weight = jax.random.uniform(kw, (Cout, Cin, 3, 3), jnp.float32, -bound, bound)
    bias = jax.random.uniform(kb, (Cout,), jnp.float32, -bound, bound)

    out = jax.jit(conv2d_hardswish_pallas)(x, weight, bias)
    out = jax.block_until_ready(out)

    ref = _reference(x, weight, bias)
    assert out.shape == (N, Cout, H, W)
    assert jnp.allclose(out, ref, atol=1e-4, rtol=1e-4), "mismatch vs reference"
    print("KERNEL_OK")
</pallas_src>

<mosaic_0001>
module attributes {stable_mosaic.version = 11 : i64} {
  func.func @kernel(%arg0: i32, %arg1: memref<1x3x1280xf32, #tpu.memory_space<vmem>>, %arg2: memref<9x8x3xf32, #tpu.memory_space<vmem>>, %arg3: memref<8x1xf32, #tpu.memory_space<vmem>>, %arg4: memref<8x1024xf32, #tpu.memory_space<vmem>>) attributes {dimension_semantics = [#tpu.dimension_semantics<parallel>], iteration_bounds = array<i64: 5>, scalar_prefetch = 0 : i64, scratch_operands = 0 : i64, tpu.core_type = #tpu.core_type<tc>, window_params = [{transform_indices = @transform_0, window_bounds = array<i64: 1, 3, 1280>}, {pipeline_mode = #tpu.pipeline_mode<synchronous>, transform_indices = @transform_1, window_bounds = array<i64: 9, 8, 3>}, {pipeline_mode = #tpu.pipeline_mode<synchronous>, transform_indices = @transform_2, window_bounds = array<i64: 8, 1>}, {transform_indices = @transform_3, window_bounds = array<i64: 8, 1024>}]} {
    %cst = arith.constant 0.000000e+00 : f32
    %0 = vector.broadcast %cst : f32 to vector<8x1024xf32>
    %c0 = arith.constant 0 : index
    %c0_0 = arith.constant 0 : index
    %c61 = arith.constant 61 : index
    %1 = vector.load %arg1[%c0, %c0_0, %c61] : memref<1x3x1280xf32, #tpu.memory_space<vmem>>, vector<1x3x1024xf32>
    %2 = vector.shape_cast %1 : vector<1x3x1024xf32> to vector<3x1024xf32>
    %c0_1 = arith.constant 0 : index
    %c0_2 = arith.constant 0 : index
    %c0_3 = arith.constant 0 : index
    %3 = vector.load %arg2[%c0_1, %c0_2, %c0_3] : memref<9x8x3xf32, #tpu.memory_space<vmem>>, vector<1x8x3xf32>
    %4 = vector.shape_cast %3 : vector<1x8x3xf32> to vector<8x3xf32>
    %cst_4 = arith.constant dense<0.000000e+00> : vector<8x1024xf32>
    %5 = tpu.matmul %4, %2, %cst_4 {dimension_numbers = #tpu.dot_dimension_numbers<[1], [0], [0], [1], [0, 0, 1, 1], [], []>} : vector<8x3xf32>, vector<3x1024xf32>, vector<8x1024xf32> -> vector<8x1024xf32>
    %6 = arith.addf %0, %5 : vector<8x1024xf32>
    %c0_5 = arith.constant 0 : index
    %c0_6 = arith.constant 0 : index
    %c62 = arith.constant 62 : index
    %7 = vector.load %arg1[%c0_5, %c0_6, %c62] : memref<1x3x1280xf32, #tpu.memory_space<vmem>>, vector<1x3x1024xf32>
    %8 = vector.shape_cast %7 : vector<1x3x1024xf32> to vector<3x1024xf32>
    %c1 = arith.constant 1 : index
    %c0_7 = arith.constant 0 : index
    %c0_8 = arith.constant 0 : index
    %9 = vector.load %arg2[%c1, %c0_7, %c0_8] : memref<9x8x3xf32, #tpu.memory_space<vmem>>, vector<1x8x3xf32>
    %10 = vector.shape_cast %9 : vector<1x8x3xf32> to vector<8x3xf32>
    %cst_9 = arith.constant dense<0.000000e+00> : vector<8x1024xf32>
    %11 = tpu.matmul %10, %8, %cst_9 {dimension_numbers = #tpu.dot_dimension_numbers<[1], [0], [0], [1], [0, 0, 1, 1], [], []>} : vector<8x3xf32>, vector<3x1024xf32>, vector<8x1024xf32> -> vector<8x1024xf32>
    %12 = arith.addf %6, %11 : vector<8x1024xf32>
    %c0_10 = arith.constant 0 : index
    %c0_11 = arith.constant 0 : index
    %c63 = arith.constant 63 : index
    %13 = vector.load %arg1[%c0_10, %c0_11, %c63] : memref<1x3x1280xf32, #tpu.memory_space<vmem>>, vector<1x3x1024xf32>
    %14 = vector.shape_cast %13 : vector<1x3x1024xf32> to vector<3x1024xf32>
    %c2 = arith.constant 2 : index
    %c0_12 = arith.constant 0 : index
    %c0_13 = arith.constant 0 : index
    %15 = vector.load %arg2[%c2, %c0_12, %c0_13] : memref<9x8x3xf32, #tpu.memory_space<vmem>>, vector<1x8x3xf32>
    %16 = vector.shape_cast %15 : vector<1x8x3xf32> to vector<8x3xf32>
    %cst_14 = arith.constant dense<0.000000e+00> : vector<8x1024xf32>
    %17 = tpu.matmul %16, %14, %cst_14 {dimension_numbers = #tpu.dot_dimension_numbers<[1], [0], [0], [1], [0, 0, 1, 1], [], []>} : vector<8x3xf32>, vector<3x1024xf32>, vector<8x1024xf32> -> vector<8x1024xf32>
    %18 = arith.addf %12, %17 : vector<8x1024xf32>
    %c0_15 = arith.constant 0 : index
    %c0_16 = arith.constant 0 : index
    %c127 = arith.constant 127 : index
    %19 = vector.load %arg1[%c0_15, %c0_16, %c127] : memref<1x3x1280xf32, #tpu.memory_space<vmem>>, vector<1x3x1024xf32>
    %20 = vector.shape_cast %19 : vector<1x3x1024xf32> to vector<3x1024xf32>
    %c3 = arith.constant 3 : index
    %c0_17 = arith.constant 0 : index
    %c0_18 = arith.constant 0 : index
    %21 = vector.load %arg2[%c3, %c0_17, %c0_18] : memref<9x8x3xf32, #tpu.memory_space<vmem>>, vector<1x8x3xf32>
    %22 = vector.shape_cast %21 : vector<1x8x3xf32> to vector<8x3xf32>
    %cst_19 = arith.constant dense<0.000000e+00> : vector<8x1024xf32>
    %23 = tpu.matmul %22, %20, %cst_19 {dimension_numbers = #tpu.dot_dimension_numbers<[1], [0], [0], [1], [0, 0, 1, 1], [], []>} : vector<8x3xf32>, vector<3x1024xf32>, vector<8x1024xf32> -> vector<8x1024xf32>
    %24 = arith.addf %18, %23 : vector<8x1024xf32>
    %c0_20 = arith.constant 0 : index
    %c0_21 = arith.constant 0 : index
    %c128 = arith.constant 128 : index
    %25 = vector.load %arg1[%c0_20, %c0_21, %c128] : memref<1x3x1280xf32, #tpu.memory_space<vmem>>, vector<1x3x1024xf32>
    %26 = vector.shape_cast %25 : vector<1x3x1024xf32> to vector<3x1024xf32>
    %c4 = arith.constant 4 : index
    %c0_22 = arith.constant 0 : index
    %c0_23 = arith.constant 0 : index
    %27 = vector.load %arg2[%c4, %c0_22, %c0_23] : memref<9x8x3xf32, #tpu.memory_space<vmem>>, vector<1x8x3xf32>
    %28 = vector.shape_cast %27 : vector<1x8x3xf32> to vector<8x3xf32>
    %cst_24 = arith.constant dense<0.000000e+00> : vector<8x1024xf32>
    %29 = tpu.matmul %28, %26, %cst_24 {dimension_numbers = #tpu.dot_dimension_numbers<[1], [0], [0], [1], [0, 0, 1, 1], [], []>} : vector<8x3xf32>, vector<3x1024xf32>, vector<8x1024xf32> -> vector<8x1024xf32>
    %30 = arith.addf %24, %29 : vector<8x1024xf32>
    %c0_25 = arith.constant 0 : index
    %c0_26 = arith.constant 0 : index
    %c129 = arith.constant 129 : index
    %31 = vector.load %arg1[%c0_25, %c0_26, %c129] : memref<1x3x1280xf32, #tpu.memory_space<vmem>>, vector<1x3x1024xf32>
    %32 = vector.shape_cast %31 : vector<1x3x1024xf32> to vector<3x1024xf32>
    %c5 = arith.constant 5 : index
    %c0_27 = arith.constant 0 : index
    %c0_28 = arith.constant 0 : index
    %33 = vector.load %arg2[%c5, %c0_27, %c0_28] : memref<9x8x3xf32, #tpu.memory_space<vmem>>, vector<1x8x3xf32>
    %34 = vector.shape_cast %33 : vector<1x8x3xf32> to vector<8x3xf32>
    %cst_29 = arith.constant dense<0.000000e+00> : vector<8x1024xf32>
    %35 = tpu.matmul %34, %32, %cst_29 {dimension_numbers = #tpu.dot_dimension_numbers<[1], [0], [0], [1], [0, 0, 1, 1], [], []>} : vector<8x3xf32>, vector<3x1024xf32>, vector<8x1024xf32> -> vector<8x1024xf32>
    %36 = arith.addf %30, %35 : vector<8x1024xf32>
    %c0_30 = arith.constant 0 : index
    %c0_31 = arith.constant 0 : index
    %c193 = arith.constant 193 : index
    %37 = vector.load %arg1[%c0_30, %c0_31, %c193] : memref<1x3x1280xf32, #tpu.memory_space<vmem>>, vector<1x3x1024xf32>
    %38 = vector.shape_cast %37 : vector<1x3x1024xf32> to vector<3x1024xf32>
    %c6 = arith.constant 6 : index
    %c0_32 = arith.constant 0 : index
    %c0_33 = arith.constant 0 : index
    %39 = vector.load %arg2[%c6, %c0_32, %c0_33] : memref<9x8x3xf32, #tpu.memory_space<vmem>>, vector<1x8x3xf32>
    %40 = vector.shape_cast %39 : vector<1x8x3xf32> to vector<8x3xf32>
    %cst_34 = arith.constant dense<0.000000e+00> : vector<8x1024xf32>
    %41 = tpu.matmul %40, %38, %cst_34 {dimension_numbers = #tpu.dot_dimension_numbers<[1], [0], [0], [1], [0, 0, 1, 1], [], []>} : vector<8x3xf32>, vector<3x1024xf32>, vector<8x1024xf32> -> vector<8x1024xf32>
    %42 = arith.addf %36, %41 : vector<8x1024xf32>
    %c0_35 = arith.constant 0 : index
    %c0_36 = arith.constant 0 : index
    %c194 = arith.constant 194 : index
    %43 = vector.load %arg1[%c0_35, %c0_36, %c194] : memref<1x3x1280xf32, #tpu.memory_space<vmem>>, vector<1x3x1024xf32>
    %44 = vector.shape_cast %43 : vector<1x3x1024xf32> to vector<3x1024xf32>
    %c7 = arith.constant 7 : index
    %c0_37 = arith.constant 0 : index
    %c0_38 = arith.constant 0 : index
    %45 = vector.load %arg2[%c7, %c0_37, %c0_38] : memref<9x8x3xf32, #tpu.memory_space<vmem>>, vector<1x8x3xf32>
    %46 = vector.shape_cast %45 : vector<1x8x3xf32> to vector<8x3xf32>
    %cst_39 = arith.constant dense<0.000000e+00> : vector<8x1024xf32>
    %47 = tpu.matmul %46, %44, %cst_39 {dimension_numbers = #tpu.dot_dimension_numbers<[1], [0], [0], [1], [0, 0, 1, 1], [], []>} : vector<8x3xf32>, vector<3x1024xf32>, vector<8x1024xf32> -> vector<8x1024xf32>
    %48 = arith.addf %42, %47 : vector<8x1024xf32>
    %c0_40 = arith.constant 0 : index
    %c0_41 = arith.constant 0 : index
    %c195 = arith.constant 195 : index
    %49 = vector.load %arg1[%c0_40, %c0_41, %c195] : memref<1x3x1280xf32, #tpu.memory_space<vmem>>, vector<1x3x1024xf32>
    %50 = vector.shape_cast %49 : vector<1x3x1024xf32> to vector<3x1024xf32>
    %c8 = arith.constant 8 : index
    %c0_42 = arith.constant 0 : index
    %c0_43 = arith.constant 0 : index
    %51 = vector.load %arg2[%c8, %c0_42, %c0_43] : memref<9x8x3xf32, #tpu.memory_space<vmem>>, vector<1x8x3xf32>
    %52 = vector.shape_cast %51 : vector<1x8x3xf32> to vector<8x3xf32>
    %cst_44 = arith.constant dense<0.000000e+00> : vector<8x1024xf32>
    %53 = tpu.matmul %52, %50, %cst_44 {dimension_numbers = #tpu.dot_dimension_numbers<[1], [0], [0], [1], [0, 0, 1, 1], [], []>} : vector<8x3xf32>, vector<3x1024xf32>, vector<8x1024xf32> -> vector<8x1024xf32>
    %54 = arith.addf %48, %53 : vector<8x1024xf32>
    %c0_45 = arith.constant 0 : index
    %c0_46 = arith.constant 0 : index
    %55 = vector.load %arg3[%c0_45, %c0_46] : memref<8x1xf32, #tpu.memory_space<vmem>>, vector<8x1xf32>
    %56 = vector.broadcast %55 : vector<8x1xf32> to vector<8x1024xf32>
    %57 = arith.addf %54, %56 : vector<8x1024xf32>
    %cst_47 = arith.constant 3.000000e+00 : f32
    %58 = vector.broadcast %cst_47 : f32 to vector<8x1024xf32>
    %59 = arith.addf %57, %58 : vector<8x1024xf32>
    %cst_48 = arith.constant 0.000000e+00 : f32
    %cst_49 = arith.constant 6.000000e+00 : f32
    %60 = vector.broadcast %cst_48 : f32 to vector<8x1024xf32>
    %61 = arith.maximumf %60, %59 : vector<8x1024xf32>
    %62 = vector.broadcast %cst_49 : f32 to vector<8x1024xf32>
    %63 = arith.minimumf %62, %61 : vector<8x1024xf32>
    %64 = arith.mulf %57, %63 : vector<8x1024xf32>
    %cst_50 = arith.constant 0.166666672 : f32
    %65 = vector.broadcast %cst_50 : f32 to vector<8x1024xf32>
    %66 = arith.mulf %64, %65 : vector<8x1024xf32>
    %c0_51 = arith.constant 0 : index
    %c0_52 = arith.constant 0 : index
    %67 = vector.load %arg4[%c0_51, %c0_52] : memref<8x1024xf32, #tpu.memory_space<vmem>>, vector<8x1024xf32>
    tpu.vector_store %arg4[%c0_51, %c0_52], %66 {strides = array<i32>} : memref<8x1024xf32, #tpu.memory_space<vmem>>, vector<8x1024xf32>,
    return
  }
  func.func @transform_0(%arg0: i32) -> (i32, i32, i32) {
    %c0_i32 = arith.constant 0 : i32
    %c0_i32_0 = arith.constant 0 : i32
    %c0_i32_1 = arith.constant 0 : i32
    return %arg0, %c0_i32, %c0_i32_0 : i32, i32, i32
  }
  func.func @transform_1(%arg0: i32) -> (i32, i32, i32) {
    %c0_i32 = arith.constant 0 : i32
    %c0_i32_0 = arith.constant 0 : i32
    %c0_i32_1 = arith.constant 0 : i32
    %c0_i32_2 = arith.constant 0 : i32
    return %c0_i32, %c0_i32_0, %c0_i32_1 : i32, i32, i32
  }
  func.func @transform_2(%arg0: i32) -> (i32, i32) {
    %c0_i32 = arith.constant 0 : i32
    %c0_i32_0 = arith.constant 0 : i32
    %c0_i32_1 = arith.constant 0 : i32
    return %c0_i32, %c0_i32_0 : i32, i32
  }
  func.func @transform_3(%arg0: i32) -> (i32, i32) {
    %c0_i32 = arith.constant 0 : i32
    %c0_i32_0 = arith.constant 0 : i32
    return %c0_i32, %arg0 : i32, i32
  }
}

</mosaic_0001>

<llo_original>
// kernel: conv2d_hardswish_pallas.1
$region0: #{conv2d_hardswish_pallas.1}
  #allocation0 [shape = 'u32[]', space=smem, size = 0x4, offset = 0x4, fixed_abs, tag = 'smem constant byte address 0x4 - core index']
  #allocation1 [shape = 'u32[144,128]{1,0:T(1,128)}', space=vmem, size = 0x12000, scoped, tag = 'internal scratch']
  %s0 = inlined_call_operand.vmem [shape: f32[5,3,1280], index: 0, kind: input, shape index: {}]
  %s1 = inlined_call_operand.vmem [shape: f32[9,8,3], index: 1, kind: input, shape index: {}]
  %s2 = inlined_call_operand.vmem [shape: f32[8,1], index: 2, kind: input, shape index: {}]
  %s3 = inlined_call_operand.vmem [shape: f32[8,5120], index: 3, kind: output, shape index: {}]
  %s4 = sld [smem:[#allocation0]]
  $region45: #{conv2d_hardswish_pallas.1} parent=0
    _
  %s6 = ssub.s32 1, %s4
  %s7 = scalar_select 0, %s6, %s4
  loop: start=0, step=1, limit=7
  $region2: #{conv2d_hardswish_pallas.1} parent=0 // loop_pre_header
    _
  $region3: #{conv2d_hardswish_pallas.1} parent=0 // loop_header
    %s9 = sphi 0, %s13
    %p10 = scmp.ge.s32.totalorder %s9, 7
    %s19 = sphi 0, %s21
    %s22 = sphi 0, %s19
    %s23 = sphi 0, %s22
    %s39 = sphi 0, %s23
    %s43 = sphi 0, %s43
    %s45 = sphi 0, %s43
    %s46 = sphi 0, %s45
    %s60 = sphi 0, %s46
    %s64 = sphi 0, %s64
    %s66 = sphi 0, %s64
    %s67 = sphi 0, %s66
    %s81 = sphi 0, %s67
    %s87 = sphi 0, %s89
    %s90 = sphi 0, %s87
    %s91 = sphi 0, %s90
    %s107 = sphi 0, %s91
  $region4: #{conv2d_hardswish_pallas.1} parent=0 // loop_header_branch
    %12 = sbr.rel (%p10) target = $region8
  $region5: #{conv2d_hardswish_pallas.1} parent=0 // loop_body
    %s14 = ssub.s32 %s9, 1
    %s15 = ssub.s32 %s9, 2
    %s16 = sadd.s32 %s9, 1
    %s17 = ssub.s32 %s9, %s16
    %p18 = scmp.eq.s32.totalorder %s17, 0
    %s20 = sadd.s32 %s19, 1
    %s21 = scalar_select %p18, %s19, %s20
    %p24 = pneg %p18
    %p25 = scmp.eq.s32.totalorder %s9, 4
    %p26 = por %p24, %p25
    %p27 = scmp.ne.s32.totalorder %s19, %s22
    %p28 = scmp.eq.s32.totalorder %s9, 0
    %p29 = por %p27, %p28
    %p30 = scmp.ne.s32.totalorder %s19, %s22
    %p31 = scmp.eq.s32.totalorder %s14, 4
    %p32 = por %p30, %p31
    %p33 = scmp.ne.s32.totalorder %s22, %s23
    %p34 = scmp.eq.s32.totalorder %s14, 0
    %p35 = por %p33, %p34
    %p36 = scmp.ne.s32.totalorder %s22, %s23
    %p37 = scmp.eq.s32.totalorder %s15, 4
    %p38 = por %p36, %p37
    %p40 = scmp.ne.s32.totalorder %s23, %s39
    %p41 = scmp.eq.s32.totalorder %s15, 0
    %p42 = por %p40, %p41
    %s44 = sadd.s32 %s43, 1
    %p47 = scmp.eq.s32.totalorder %s9, 4
    %p48 = scmp.ne.s32.totalorder %s43, %s45
    %p49 = scmp.eq.s32.totalorder %s9, 0
    %p50 = por %p48, %p49
    %p51 = scmp.ne.s32.totalorder %s43, %s45
    %p52 = scmp.eq.s32.totalorder %s14, 4
    %p53 = por %p51, %p52
    %p54 = scmp.ne.s32.totalorder %s45, %s46
    %p55 = scmp.eq.s32.totalorder %s14, 0
    %p56 = por %p54, %p55
    %p57 = scmp.ne.s32.totalorder %s45, %s46
    %p58 = scmp.eq.s32.totalorder %s15, 4
    %p59 = por %p57, %p58
    %p61 = scmp.ne.s32.totalorder %s46, %s60
    %p62 = scmp.eq.s32.totalorder %s15, 0
    %p63 = por %p61, %p62
    %s65 = sadd.s32 %s64, 1
    %p68 = scmp.eq.s32.totalorder %s9, 4
    %p69 = scmp.ne.s32.totalorder %s64, %s66
    %p70 = scmp.eq.s32.totalorder %s9, 0
    %p71 = por %p69, %p70
    %p72 = scmp.ne.s32.totalorder %s64, %s66
    %p73 = scmp.eq.s32.totalorder %s14, 4
    %p74 = por %p72, %p73
    %p75 = scmp.ne.s32.totalorder %s66, %s67
    %p76 = scmp.eq.s32.totalorder %s14, 0
    %p77 = por %p75, %p76
    %p78 = scmp.ne.s32.totalorder %s66, %s67
    %p79 = scmp.eq.s32.totalorder %s15, 4
    %p80 = por %p78, %p79
    %p82 = scmp.ne.s32.totalorder %s67, %s81
    %p83 = scmp.eq.s32.totalorder %s15, 0
    %p84 = por %p82, %p83
    %s85 = ssub.s32 %s9, %s16
    %p86 = scmp.eq.s32.totalorder %s85, 0
    %s88 = sadd.s32 %s87, 1
    %s89 = scalar_select %p86, %s87, %s88
    %p92 = pneg %p86
    %p93 = scmp.eq.s32.totalorder %s9, 4
    %p94 = por %p92, %p93
    %p95 = scmp.ne.s32.totalorder %s87, %s90
    %p96 = scmp.eq.s32.totalorder %s9, 0
    %p97 = por %p95, %p96
    %p98 = scmp.ne.s32.totalorder %s87, %s90
    %p99 = scmp.eq.s32.totalorder %s14, 4
    %p100 = por %p98, %p99
    %p101 = scmp.ne.s32.totalorder %s90, %s91
    %p102 = scmp.eq.s32.totalorder %s14, 0
    %p103 = por %p101, %p102
    %p104 = scmp.ne.s32.totalorder %s90, %s91
    %p105 = scmp.eq.s32.totalorder %s15, 4
    %p106 = por %p104, %p105
    %p108 = scmp.ne.s32.totalorder %s91, %s107
    %p109 = scmp.eq.s32.totalorder %s15, 0
    %p110 = por %p108, %p109
    %p111 = scmp.le.s32.totalorder 1, %s9
    %p112 = scmp.lt.s32.totalorder %s9, 6
    %p113 = pnand %p111, %p112
    %p114 = pneg %p113
    // Predicated region
    $region9: #{conv2d_hardswish_pallas.1} parent=5 // pred_check
      _
    $region10: #{conv2d_hardswish_pallas.1} parent=5 // pred_check_branch
      %116 = sbr.rel (%p113) target = $region12
    $region11: #{conv2d_hardswish_pallas.1} parent=5 // pred_region
      %s117 = ssub.s32 %s9, 1
      // Predicated region
      $region13: #{conv2d_hardswish_pallas.1} parent=11 // pred_check
        %p118 = pneg %p56
      $region14: #{conv2d_hardswish_pallas.1} parent=11 // pred_check_branch
        %120 = sbr.rel (%p118) target = $region16
      $region15: #{conv2d_hardswish_pallas.1} parent=11 // pred_region
        _
      $region16: #{conv2d_hardswish_pallas.1} parent=11 // pred_fallthru
        _
      // Predicated region
      $region17: #{conv2d_hardswish_pallas.1} parent=11 // pred_check
        %p121 = pneg %p77
      $region18: #{conv2d_hardswish_pallas.1} parent=11 // pred_check_branch
        %123 = sbr.rel (%p121) target = $region20
      $region19: #{conv2d_hardswish_pallas.1} parent=11 // pred_region
        _
      $region20: #{conv2d_hardswish_pallas.1} parent=11 // pred_fallthru
        _
    $region12: #{conv2d_hardswish_pallas.1} parent=5 // pred_fallthru
      _
    %p124 = scmp.lt.s32.totalorder %s9, 5
    // Predicated region
    $region21: #{conv2d_hardswish_pallas.1} parent=5 // pred_check
      %p125 = pneg %p124
    $region22: #{conv2d_hardswish_pallas.1} parent=5 // pred_check_branch
      %127 = sbr.rel (%p125) target = $region24
    $region23: #{conv2d_hardswish_pallas.1} parent=5 // pred_region
      // Predicated region
      $region25: #{conv2d_hardswish_pallas.1} parent=23 // pred_check
        %p128 = pneg %p29
      $region26: #{conv2d_hardswish_pallas.1} parent=23 // pred_check_branch
        %130 = sbr.rel (%p128) target = $region28
      $region27: #{conv2d_hardswish_pallas.1} parent=23 // pred_region
        %p131 = scmp.lt.s32.totalorder %s9, 4
        %s132 = scalar_select %p131, %s9, 4
        %s133 = smul.addr %s132, 10
        %s134 = smul.addr %s133, 4
        %s135 = scalar_lea.vmem %s0, %s134
      $region28: #{conv2d_hardswish_pallas.1} parent=23 // pred_fallthru
        _
    $region24: #{conv2d_hardswish_pallas.1} parent=5 // pred_fallthru
      _
    %p136 = scmp.le.s32.totalorder 1, %s9
    %p137 = scmp.lt.s32.totalorder %s9, 6
    %p138 = pnand %p136, %p137
    %p139 = pneg %p138
    // Predicated region
    $region29: #{conv2d_hardswish_pallas.1} parent=5 // pred_check
      _
    $region30: #{conv2d_hardswish_pallas.1} parent=5 // pred_check_branch
      %141 = sbr.rel (%p138) target = $region32
    $region31: #{conv2d_hardswish_pallas.1} parent=5 // pred_region
      %s142 = ssub.s32 %s9, 1
      %p143 = scmp.lt.s32.totalorder %s14, 4
      %s144 = scalar_select %p143, %s14, 4
      %s145 = smul.addr %s144, 10
      %s146 = smul.addr %s145, 4
      %s147 = scalar_lea.vmem %s0, %s146
      %p148 = pneg %p35
      %p149 = pneg %p32
      %p150 = pneg %p56
      %p151 = pneg %p53
      %p152 = pneg %p77
      %p153 = pneg %p74
      %p154 = pneg %p103
      %p155 = pneg %p100
      %s156 = smul.u32 8, %s14
      %p157 = scmp.lt.s32.totalorder %s156, 39
      %s158 = scalar_select %p157, %s156, 39
      %s159 = smul.addr %s158, 8
      %s160 = scalar_lea.vmem %s3, %s159
      %p161 = scmp.lt.s32.totalorder %s14, 4
      %s162 = scalar_select %p161, %s14, 4
      %s163 = smul.addr %s162, 10
      %s164 = smul.addr %s163, 4
      %s165 = scalar_lea.vmem %s0, %s164
      %s166 = smul.u32 8, %s14
      %p167 = scmp.lt.s32.totalorder %s166, 39
      %s168 = scalar_select %p167, %s166, 39
      %s169 = smul.addr %s168, 8
      %s170 = scalar_lea.vmem %s3, %s169
      %s171 = smul.u32 8, %s14
      %v172 = vld [vmem:[%s165] sm:$0x77]
      %v173 = vld [vmem:[%s165 + $0x8] sm:$0x77]
      %v174 = vld [vmem:[%s165 + $0x10] sm:$0x77]
      %v175 = vld [vmem:[%s165 + $0x18] sm:$0x77]
      %v176 = vld [vmem:[%s165 + $0x20] sm:$0x7]
      %v177 = vld [vmem:[%s1] sm:$0xff]
      %s178 = scalar_lea.vmem %s1, 8
      %v179 = vld [vmem:[%s178] sm:$0xff]
      %v185 = vcombine.high %v172, %v172
      %v186 = vcombine.high %v173, %v173
      %v187 = vcombine.high %v174, %v174
      %v188 = vcombine.high %v175, %v175
      %189 = vrot.lane.b32.xlu0 %v172, 66
      %v190 = vpop.permute.xlu0 %189
      %191 = vrot.lane.b32.xlu0 %v185, 66
      %v192 = vpop.permute.xlu0 %191
      %193 = vrot.lane.b32.xlu0 %v173, 66
      %v194 = vpop.permute.xlu0 %193
      %195 = vrot.lane.b32.xlu0 %v186, 66
      %v196 = vpop.permute.xlu0 %195
      %197 = vrot.lane.b32.xlu0 %v174, 66
      %v198 = vpop.permute.xlu0 %197
      %199 = vrot.lane.b32.xlu0 %v187, 66
      %v200 = vpop.permute.xlu0 %199
      %201 = vrot.lane.b32.xlu0 %v175, 66
      %v202 = vpop.permute.xlu0 %201
      %203 = vrot.lane.b32.xlu0 %v188, 66
      %v204 = vpop.permute.xlu0 %203
      %205 = vrot.lane.b32.xlu0 %v176, 66
      %v206 = vpop.permute.xlu0 %205
      %vm207 = vcmask 539648
      %v208 = vsel %vm207, %v190, %v192
      %v209 = vsel %vm207, %v192, %v194
      %v210 = vsel %vm207, %v194, %v196
      %v211 = vsel %vm207, %v196, %v198
      %v212 = vsel %vm207, %v198, %v200
      %v213 = vsel %vm207, %v200, %v202
      %v214 = vsel %vm207, %v202, %v204
      %v215 = vsel %vm207, %v204, %v206
      %vm216 = vcmask 23552
      %v218 = vsel %vm216, %v179, 0
      %vm220 = vcmask 1042432
      %v221 = vsel %vm220, %v208, 0
      %v223 = vsel %vm220, %v209, 0
      %v225 = vsel %vm220, %v210, 0
      %v227 = vsel %vm220, %v211, 0
      %v229 = vsel %vm220, %v212, 0
      %v231 = vsel %vm220, %v213, 0
      %v233 = vsel %vm220, %v214, 0
      %v235 = vsel %vm220, %v215, 0
      %237 = vmatprep.subr.mxu0 %v223
      %238 = vmatpush1.msra.mxu0 %v221
      %239 = vmatprep.subr.mxu0 0.0
      %240 = vmatpush1.msra.mxu0 0.0
      %241 = vmatprep.subr.mxu0 0.0
      %242 = vmatpush1.msra.mxu0 0.0
      %243 = vmatprep.subr.mxu0 0.0
      %244 = vmatpush1.msra.mxu0 0.0
      %245 = vmatprep.subr.mxu0 0.0
      %246 = vmatpush1.msra.mxu0 0.0
      %247 = vmatprep.subr.mxu0 0.0
      %248 = vmatpush1.msra.mxu0 0.0
      %249 = vmatprep.subr.mxu0 0.0
      %250 = vmatpush1.msra.mxu0 0.0
      %251 = vmatprep.subr.mxu0 0.0
      %252 = vmatpush1.msra.mxu0 0.0
      %253 = vmatprep.subr.mxu0 0.0
      %254 = vmatpush1.msra.mxu0 0.0
      %255 = vmatprep.subr.mxu0 0.0
      %256 = vmatpush1.msra.mxu0 0.0
      %257 = vmatprep.subr.mxu0 0.0
      %258 = vmatpush1.msra.mxu0 0.0
      %259 = vmatprep.subr.mxu0 0.0
      %260 = vmatpush1.msra.mxu0 0.0
      %261 = vmatprep.subr.mxu0 0.0
      %262 = vmatpush1.msra.mxu0 0.0
      %263 = vmatprep.subr.mxu0 0.0
      %264 = vmatpush1.msra.mxu0 0.0
      %265 = vmatprep.subr.mxu0 0.0
      %266 = vmatpush1.msra.mxu0 0.0
      %267 = vmatprep.subr.mxu0 0.0
      %268 = vmatpush1.msra.mxu0 0.0
      %269 = vmatprep.subr.mxu0 0.0
      %270 = vmatpush1.msra.mxu0 0.0
      %271 = vmatprep.subr.mxu0 0.0
      %272 = vmatpush1.msra.mxu0 0.0
      %273 = vmatprep.subr.mxu0 0.0
      %274 = vmatpush1.msra.mxu0 0.0
      %275 = vmatprep.subr.mxu0 0.0
      %276 = vmatpush1.msra.mxu0 0.0
      %277 = vmatprep.subr.mxu0 0.0
      %278 = vmatpush1.msra.mxu0 0.0
      %279 = vmatprep.subr.mxu0 0.0
      %280 = vmatpush1.msra.mxu0 0.0
      %281 = vmatprep.subr.mxu0 0.0
      %282 = vmatpush1.msra.mxu0 0.0
      %283 = vmatprep.subr.mxu0 0.0
      %284 = vmatpush1.msra.mxu0 0.0
      %285 = vmatprep.subr.mxu0 0.0
      %286 = vmatpush1.msra.mxu0 0.0
      %287 = vmatprep.subr.mxu0 0.0
      %288 = vmatpush1.msra.mxu0 0.0
      %289 = vmatprep.subr.mxu0 0.0
      %290 = vmatpush1.msra.mxu0 0.0
      %291 = vmatprep.subr.mxu0 0.0
      %292 = vmatpush1.msra.mxu0 0.0
      %293 = vmatprep.subr.mxu0 0.0
      %294 = vmatpush1.msra.mxu0 0.0
      %295 = vmatprep.subr.mxu0 0.0
      %296 = vmatpush1.msra.mxu0 0.0
      %297 = vmatprep.subr.mxu0 0.0
      %298 = vmatpush1.msra.mxu0 0.0
      %299 = vmatprep.subr.mxu0 0.0
      %300 = vmatpush1.msra.mxu0 0.0
      %301 = vmatprep.mubr.f32.mxu0 0.0
      %302 = vmatmul.mubr.f32.gmra.mrb[0].mxu0 %v218
      %v303 = vpop.f32.mrb[0].mxu0
      %v304 = vadd.f32 0.0, %v303
      %v305 = vpop.f32.mrb[0].mxu0
      %v306 = vadd.f32 0.0, %v305
      %307 = vdwg.mxu0
      %308 = vmatprep.subr.mxu0 %v227
      %309 = vmatpush1.msra.mxu0 %v225
      %310 = vmatprep.subr.mxu0 0.0
      %311 = vmatpush1.msra.mxu0 0.0
      %312 = vmatprep.subr.mxu0 0.0
      %313 = vmatpush1.msra.mxu0 0.0
      %314 = vmatprep.subr.mxu0 0.0
      %315 = vmatpush1.msra.mxu0 0.0
      %316 = vmatprep.subr.mxu0 0.0
      %317 = vmatpush1.msra.mxu0 0.0
      %318 = vmatprep.subr.mxu0 0.0
      %319 = vmatpush1.msra.mxu0 0.0
      %320 = vmatprep.subr.mxu0 0.0
      %321 = vmatpush1.msra.mxu0 0.0
      %322 = vmatprep.subr.mxu0 0.0
      %323 = vmatpush1.msra.mxu0 0.0
      %324 = vmatprep.subr.mxu0 0.0
      %325 = vmatpush1.msra.mxu0 0.0
      %326 = vmatprep.subr.mxu0 0.0
      %327 = vmatpush1.msra.mxu0 0.0
      %328 = vmatprep.subr.mxu0 0.0
      %329 = vmatpush1.msra.mxu0 0.0
      %330 = vmatprep.subr.mxu0 0.0
      %331 = vmatpush1.msra.mxu0 0.0
      %332 = vmatprep.subr.mxu0 0.0
      %333 = vmatpush1.msra.mxu0 0.0
      %334 = vmatprep.subr.mxu0 0.0
      %335 = vmatpush1.msra.mxu0 0.0
      %336 = vmatprep.subr.mxu0 0.0
      %337 = vmatpush1.msra.mxu0 0.0
      %338 = vmatprep.subr.mxu0 0.0
      %339 = vmatpush1.msra.mxu0 0.0
      %340 = vmatprep.subr.mxu0 0.0
      %341 = vmatpush1.msra.mxu0 0.0
      %342 = vmatprep.subr.mxu0 0.0
      %343 = vmatpush1.msra.mxu0 0.0
      %344 = vmatprep.subr.mxu0 0.0
      %345 = vmatpush1.msra.mxu0 0.0
      %346 = vmatprep.subr.mxu0 0.0
      %347 = vmatpush1.msra.mxu0 0.0
      %348 = vmatprep.subr.mxu0 0.0
      %349 = vmatpush1.msra.mxu0 0.0
      %350 = vmatprep.subr.mxu0 0.0
      %351 = vmatpush1.msra.mxu0 0.0
      %352 = vmatprep.subr.mxu0 0.0
      %353 = vmatpush1.msra.mxu0 0.0
      %354 = vmatprep.subr.mxu0 0.0
      %355 = vmatpush1.msra.mxu0 0.0
      %356 = vmatprep.subr.mxu0 0.0
      %357 = vmatpush1.msra.mxu0 0.0
      %358 = vmatprep.subr.mxu0 0.0
      %359 = vmatpush1.msra.mxu0 0.0
      %360 = vmatprep.subr.mxu0 0.0
      %361 = vmatpush1.msra.mxu0 0.0
      %362 = vmatprep.subr.mxu0 0.0
      %363 = vmatpush1.msra.mxu0 0.0
      %364 = vmatprep.subr.mxu0 0.0
      %365 = vmatpush1.msra.mxu0 0.0
      %366 = vmatprep.subr.mxu0 0.0
      %367 = vmatpush1.msra.mxu0 0.0
      %368 = vmatprep.subr.mxu0 0.0
      %369 = vmatpush1.msra.mxu0 0.0
      %370 = vmatprep.subr.mxu0 0.0
      %371 = vmatpush1.msra.mxu0 0.0
      %372 = vmatprep.mubr.f32.mxu0 0.0
      %373 = vmatmul.mubr.f32.gmra.mrb[0].mxu0 %v218
      %v374 = vpop.f32.mrb[0].mxu0
      %v375 = vadd.f32 0.0, %v374
      %v376 = vpop.f32.mrb[0].mxu0
      %v377 = vadd.f32 0.0, %v376
      %378 = vdwg.mxu0
      %379 = vmatprep.subr.mxu0 %v231
      %380 = vmatpush1.msra.mxu0 %v229
      %381 = vmatprep.subr.mxu0 0.0
      %382 = vmatpush1.msra.mxu0 0.0
      %383 = vmatprep.subr.mxu0 0.0
      %384 = vmatpush1.msra.mxu0 0.0
      %385 = vmatprep.subr.mxu0 0.0
      %386 = vmatpush1.msra.mxu0 0.0
      %387 = vmatprep.subr.mxu0 0.0
      %388 = vmatpush1.msra.mxu0 0.0
      %389 = vmatprep.subr.mxu0 0.0
      %390 = vmatpush1.msra.mxu0 0.0
      %391 = vmatprep.subr.mxu0 0.0
      %392 = vmatpush1.msra.mxu0 0.0
      %393 = vmatprep.subr.mxu0 0.0
      %394 = vmatpush1.msra.mxu0 0.0
      %395 = vmatprep.subr.mxu0 0.0
      %396 = vmatpush1.msra.mxu0 0.0
      %397 = vmatprep.subr.mxu0 0.0
      %398 = vmatpush1.msra.mxu0 0.0
      %399 = vmatprep.subr.mxu0 0.0
      %400 = vmatpush1.msra.mxu0 0.0
      %401 = vmatprep.subr.mxu0 0.0
      %402 = vmatpush1.msra.mxu0 0.0
      %403 = vmatprep.subr.mxu0 0.0
      %404 = vmatpush1.msra.mxu0 0.0
      %405 = vmatprep.subr.mxu0 0.0
      %406 = vmatpush1.msra.mxu0 0.0
      %407 = vmatprep.subr.mxu0 0.0
      %408 = vmatpush1.msra.mxu0 0.0
      %409 = vmatprep.subr.mxu0 0.0
      %410 = vmatpush1.msra.mxu0 0.0
      %411 = vmatprep.subr.mxu0 0.0
      %412 = vmatpush1.msra.mxu0 0.0
      %413 = vmatprep.subr.mxu0 0.0
      %414 = vmatpush1.msra.mxu0 0.0
      %415 = vmatprep.subr.mxu0 0.0
      %416 = vmatpush1.msra.mxu0 0.0
      %417 = vmatprep.subr.mxu0 0.0
      %418 = vmatpush1.msra.mxu0 0.0
      %419 = vmatprep.subr.mxu0 0.0
      %420 = vmatpush1.msra.mxu0 0.0
      %421 = vmatprep.subr.mxu0 0.0
      %422 = vmatpush1.msra.mxu0 0.0
      %423 = vmatprep.subr.mxu0 0.0
      %424 = vmatpush1.msra.mxu0 0.0
      %425 = vmatprep.subr.mxu0 0.0
      %426 = vmatpush1.msra.mxu0 0.0
      %427 = vmatprep.subr.mxu0 0.0
      %428 = vmatpush1.msra.mxu0 0.0
      %429 = vmatprep.subr.mxu0 0.0
      %430 = vmatpush1.msra.mxu0 0.0
      %431 = vmatprep.subr.mxu0 0.0
      %432 = vmatpush1.msra.mxu0 0.0
      %433 = vmatprep.subr.mxu0 0.0
      %434 = vmatpush1.msra.mxu0 0.0
      %435 = vmatprep.subr.mxu0 0.0
      %436 = vmatpush1.msra.mxu0 0.0
      %437 = vmatprep.subr.mxu0 0.0
      %438 = vmatpush1.msra.mxu0 0.0
      %439 = vmatprep.subr.mxu0 0.0
      %440 = vmatpush1.msra.mxu0 0.0
      %441 = vmatprep.subr.mxu0 0.0
      %442 = vmatpush1.msra.mxu0 0.0
      %443 = vmatprep.mubr.f32.mxu0 0.0
      %444 = vmatmul.mubr.f32.gmra.mrb[0].mxu0 %v218
      %v445 = vpop.f32.mrb[0].mxu0
      %v446 = vadd.f32 0.0, %v445
      %v447 = vpop.f32.mrb[0].mxu0
      %v448 = vadd.f32 0.0, %v447
      %449 = vdwg.mxu0
      %450 = vmatprep.subr.mxu0 %v235
      %451 = vmatpush1.msra.mxu0 %v233
      %452 = vmatprep.subr.mxu0 0.0
      %453 = vmatpush1.msra.mxu0 0.0
      %454 = vmatprep.subr.mxu0 0.0
      %455 = vmatpush1.msra.mxu0 0.0
      %456 = vmatprep.subr.mxu0 0.0
      %457 = vmatpush1.msra.mxu0 0.0
      %458 = vmatprep.subr.mxu0 0.0
      %459 = vmatpush1.msra.mxu0 0.0
      %460 = vmatprep.subr.mxu0 0.0
      %461 = vmatpush1.msra.mxu0 0.0
      %462 = vmatprep.subr.mxu0 0.0
      %463 = vmatpush1.msra.mxu0 0.0
      %464 = vmatprep.subr.mxu0 0.0
      %465 = vmatpush1.msra.mxu0 0.0
      %466 = vmatprep.subr.mxu0 0.0
      %467 = vmatpush1.msra.mxu0 0.0
      %468 = vmatprep.subr.mxu0 0.0
      %469 = vmatpush1.msra.mxu0 0.0
      %470 = vmatprep.subr.mxu0 0.0
      %471 = vmatpush1.msra.mxu0 0.0
      %472 = vmatprep.subr.mxu0 0.0
      %473 = vmatpush1.msra.mxu0 0.0
      %474 = vmatprep.subr.mxu0 0.0
      %475 = vmatpush1.msra.mxu0 0.0
      %476 = vmatprep.subr.mxu0 0.0
      %477 = vmatpush1.msra.mxu0 0.0
      %478 = vmatprep.subr.mxu0 0.0
      %479 = vmatpush1.msra.mxu0 0.0
      %480 = vmatprep.subr.mxu0 0.0
      %481 = vmatpush1.msra.mxu0 0.0
      %482 = vmatprep.subr.mxu0 0.0
      %483 = vmatpush1.msra.mxu0 0.0
      %484 = vmatprep.subr.mxu0 0.0
      %485 = vmatpush1.msra.mxu0 0.0
      %486 = vmatprep.subr.mxu0 0.0
      %487 = vmatpush1.msra.mxu0 0.0
      %488 = vmatprep.subr.mxu0 0.0
      %489 = vmatpush1.msra.mxu0 0.0
      %490 = vmatprep.subr.mxu0 0.0
      %491 = vmatpush1.msra.mxu0 0.0
      %492 = vmatprep.subr.mxu0 0.0
      %493 = vmatpush1.msra.mxu0 0.0
      %494 = vmatprep.subr.mxu0 0.0
      %495 = vmatpush1.msra.mxu0 0.0
      %496 = vmatprep.subr.mxu0 0.0
      %497 = vmatpush1.msra.mxu0 0.0
      %498 = vmatprep.subr.mxu0 0.0
      %499 = vmatpush1.msra.mxu0 0.0
      %500 = vmatprep.subr.mxu0 0.0
      %501 = vmatpush1.msra.mxu0 0.0
      %502 = vmatprep.subr.mxu0 0.0
      %503 = vmatpush1.msra.mxu0 0.0
      %504 = vmatprep.subr.mxu0 0.0
      %505 = vmatpush1.msra.mxu0 0.0
      %506 = vmatprep.subr.mxu0 0.0
      %507 = vmatpush1.msra.mxu0 0.0
      %508 = vmatprep.subr.mxu0 0.0
      %509 = vmatpush1.msra.mxu0 0.0
      %510 = vmatprep.subr.mxu0 0.0
      %511 = vmatpush1.msra.mxu0 0.0
      %512 = vmatprep.subr.mxu0 0.0
      %513 = vmatpush1.msra.mxu0 0.0
      %514 = vmatprep.mubr.f32.mxu0 0.0
      %515 = vmatmul.mubr.f32.gmra.mrb[0].mxu0 %v218
      %v516 = vpop.f32.mrb[0].mxu0
      %v517 = vadd.f32 0.0, %v516
      %v518 = vpop.f32.mrb[0].mxu0
      %v519 = vadd.f32 0.0, %v518
      %520 = vdwg.mxu0
      %521 = vrot.lane.b32.xlu0 %v172, 67
      %v522 = vpop.permute.xlu0 %521
      %523 = vrot.lane.b32.xlu0 %v185, 67
      %v524 = vpop.permute.xlu0 %523
      %525 = vrot.lane.b32.xlu0 %v173, 67
      %v526 = vpop.permute.xlu0 %525
      %527 = vrot.lane.b32.xlu0 %v186, 67
      %v528 = vpop.permute.xlu0 %527
      %529 = vrot.lane.b32.xlu0 %v174, 67
      %v530 = vpop.permute.xlu0 %529
      %531 = vrot.lane.b32.xlu0 %v187, 67
      %v532 = vpop.permute.xlu0 %531
      %533 = vrot.lane.b32.xlu0 %v175, 67
      %v534 = vpop.permute.xlu0 %533
      %535 = vrot.lane.b32.xlu0 %v188, 67
      %v536 = vpop.permute.xlu0 %535
      %537 = vrot.lane.b32.xlu0 %v176, 67
      %v538 = vpop.permute.xlu0 %537
      %vm539 = vcmask 547840
      %v540 = vsel %vm539, %v522, %v524
      %v541 = vsel %vm539, %v524, %v526
      %v542 = vsel %vm539, %v526, %v528
      %v543 = vsel %vm539, %v528, %v530
      %v544 = vsel %vm539, %v530, %v532
      %v545 = vsel %vm539, %v532, %v534
      %v546 = vsel %vm539, %v534, %v536
      %v547 = vsel %vm539, %v536, %v538
      %v549 = vsel %vm216, %v177, 0
      %v551 = vsel %vm220, %v540, 0
      %v553 = vsel %vm220, %v541, 0
      %v555 = vsel %vm220, %v542, 0
      %v557 = vsel %vm220, %v543, 0
      %v559 = vsel %vm220, %v544, 0
      %v561 = vsel %vm220, %v545, 0
      %v563 = vsel %vm220, %v546, 0
      %v565 = vsel %vm220, %v547, 0
      %567 = vmatprep.subr.mxu0 %v553
      %568 = vmatpush1.msra.mxu0 %v551
      %569 = vmatprep.subr.mxu0 0.0
      %570 = vmatpush1.msra.mxu0 0.0
      %571 = vmatprep.subr.mxu0 0.0
      %572 = vmatpush1.msra.mxu0 0.0
      %573 = vmatprep.subr.mxu0 0.0
      %574 = vmatpush1.msra.mxu0 0.0
      %575 = vmatprep.subr.mxu0 0.0
      %576 = vmatpush1.msra.mxu0 0.0
      %577 = vmatprep.subr.mxu0 0.0
      %578 = vmatpush1.msra.mxu0 0.0
      %579 = vmatprep.subr.mxu0 0.0
      %580 = vmatpush1.msra.mxu0 0.0
      %581 = vmatprep.subr.mxu0 0.0
      %582 = vmatpush1.msra.mxu0 0.0
      %583 = vmatprep.subr.mxu0 0.0
      %584 = vmatpush1.msra.mxu0 0.0
      %585 = vmatprep.subr.mxu0 0.0
      %586 = vmatpush1.msra.mxu0 0.0
      %587 = vmatprep.subr.mxu0 0.0
      %588 = vmatpush1.msra.mxu0 0.0
      %589 = vmatprep.subr.mxu0 0.0
      %590 = vmatpush1.msra.mxu0 0.0
      %591 = vmatprep.subr.mxu0 0.0
      %592 = vmatpush1.msra.mxu0 0.0
      %593 = vmatprep.subr.mxu0 0.0
      %594 = vmatpush1.msra.mxu0 0.0
      %595 = vmatprep.subr.mxu0 0.0
      %596 = vmatpush1.msra.mxu0 0.0
      %597 = vmatprep.subr.mxu0 0.0
      %598 = vmatpush1.msra.mxu0 0.0
      %599 = vmatprep.subr.mxu0 0.0
      %600 = vmatpush1.msra.mxu0 0.0
      %601 = vmatprep.subr.mxu0 0.0
      %602 = vmatpush1.msra.mxu0 0.0
      %603 = vmatprep.subr.mxu0 0.0
      %604 = vmatpush1.msra.mxu0 0.0
      %605 = vmatprep.subr.mxu0 0.0
      %606 = vmatpush1.msra.mxu0 0.0
      %607 = vmatprep.subr.mxu0 0.0
      %608 = vmatpush1.msra.mxu0 0.0
      %609 = vmatprep.subr.mxu0 0.0
      %610 = vmatpush1.msra.mxu0 0.0
      %611 = vmatprep.subr.mxu0 0.0
      %612 = vmatpush1.msra.mxu0 0.0
      %613 = vmatprep.subr.mxu0 0.0
      %614 = vmatpush1.msra.mxu0 0.0
      %615 = vmatprep.subr.mxu0 0.0
      %616 = vmatpush1.msra.mxu0 0.0
      %617 = vmatprep.subr.mxu0 0.0
      %618 = vmatpush1.msra.mxu0 0.0
      %619 = vmatprep.subr.mxu0 0.0
      %620 = vmatpush1.msra.mxu0 0.0
      %621 = vmatprep.subr.mxu0 0.0
      %622 = vmatpush1.msra.mxu0 0.0
      %623 = vmatprep.subr.mxu0 0.0
      %624 = vmatpush1.msra.mxu0 0.0
      %625 = vmatprep.subr.mxu0 0.0
      %626 = vmatpush1.msra.mxu0 0.0
      %627 = vmatprep.subr.mxu0 0.0
      %628 = vmatpush1.msra.mxu0 0.0
      %629 = vmatprep.subr.mxu0 0.0
      %630 = vmatpush1.msra.mxu0 0.0
      %631 = vmatprep.mubr.f32.mxu0 0.0
      %632 = vmatmul.mubr.f32.gmra.mrb[0].mxu0 %v549
      %v633 = vpop.f32.mrb[0].mxu0
      %v634 = vadd.f32 %v304, %v633
      %v635 = vpop.f32.mrb[0].mxu0
      %v636 = vadd.f32 %v306, %v635
      %637 = vdwg.mxu0
      %638 = vmatprep.subr.mxu0 %v557
      %639 = vmatpush1.msra.mxu0 %v555
      %640 = vmatprep.subr.mxu0 0.0
      %641 = vmatpush1.msra.mxu0 0.0
      %642 = vmatprep.subr.mxu0 0.0
      %643 = vmatpush1.msra.mxu0 0.0
      %644 = vmatprep.subr.mxu0 0.0
      %645 = vmatpush1.msra.mxu0 0.0
      %646 = vmatprep.subr.mxu0 0.0
      %647 = vmatpush1.msra.mxu0 0.0
      %648 = vmatprep.subr.mxu0 0.0
      %649 = vmatpush1.msra.mxu0 0.0
      %650 = vmatprep.subr.mxu0 0.0
      %651 = vmatpush1.msra.mxu0 0.0
      %652 = vmatprep.subr.mxu0 0.0
      %653 = vmatpush1.msra.mxu0 0.0
      %654 = vmatprep.subr.mxu0 0.0
      %655 = vmatpush1.msra.mxu0 0.0
      %656 = vmatprep.subr.mxu0 0.0
      %657 = vmatpush1.msra.mxu0 0.0
      %658 = vmatprep.subr.mxu0 0.0
      %659 = vmatpush1.msra.mxu0 0.0
      %660 = vmatprep.subr.mxu0 0.0
      %661 = vmatpush1.msra.mxu0 0.0
      %662 = vmatprep.subr.mxu0 0.0
      %663 = vmatpush1.msra.mxu0 0.0
      %664 = vmatprep.subr.mxu0 0.0
      %665 = vmatpush1.msra.mxu0 0.0
      %666 = vmatprep.subr.mxu0 0.0
      %667 = vmatpush1.msra.mxu0 0.0
      %668 = vmatprep.subr.mxu0 0.0
      %669 = vmatpush1.msra.mxu0 0.0
      %670 = vmatprep.subr.mxu0 0.0
      %671 = vmatpush1.msra.mxu0 0.0
      %672 = vmatprep.subr.mxu0 0.0
      %673 = vmatpush1.msra.mxu0 0.0
      %674 = vmatprep.subr.mxu0 0.0
      %675 = vmatpush1.msra.mxu0 0.0
      %676 = vmatprep.subr.mxu0 0.0
      %677 = vmatpush1.msra.mxu0 0.0
      %678 = vmatprep.subr.mxu0 0.0
      %679 = vmatpush1.msra.mxu0 0.0
      %680 = vmatprep.subr.mxu0 0.0
      %681 = vmatpush1.msra.mxu0 0.0
      %682 = vmatprep.subr.mxu0 0.0
      %683 = vmatpush1.msra.mxu0 0.0
      %684 = vmatprep.subr.mxu0 0.0
      %685 = vmatpush1.msra.mxu0 0.0
      %686 = vmatprep.subr.mxu0 0.0
      %687 = vmatpush1.msra.mxu0 0.0
      %688 = vmatprep.subr.mxu0 0.0
      %689 = vmatpush1.msra.mxu0 0.0
      %690 = vmatprep.subr.mxu0 0.0
      %691 = vmatpush1.msra.mxu0 0.0
      %692 = vmatprep.subr.mxu0 0.0
      %693 = vmatpush1.msra.mxu0 0.0
      %694 = vmatprep.subr.mxu0 0.0
      %695 = vmatpush1.msra.mxu0 0.0
      %696 = vmatprep.subr.mxu0 0.0
      %697 = vmatpush1.msra.mxu0 0.0
      %698 = vmatprep.subr.mxu0 0.0
      %699 = vmatpush1.msra.mxu0 0.0
      %700 = vmatprep.subr.mxu0 0.0
      %701 = vmatpush1.msra.mxu0 0.0
      %702 = vmatprep.mubr.f32.mxu0 0.0
      %703 = vmatmul.mubr.f32.gmra.mrb[0].mxu0 %v549
      %v704 = vpop.f32.mrb[0].mxu0
      %v705 = vadd.f32 %v375, %v704
      %v706 = vpop.f32.mrb[0].mxu0
      %v707 = vadd.f32 %v377, %v706
      %708 = vdwg.mxu0
      %709 = vmatprep.subr.mxu0 %v561
      %710 = vmatpush1.msra.mxu0 %v559
      %711 = vmatprep.subr.mxu0 0.0
      %712 = vmatpush1.msra.mxu0 0.0
      %713 = vmatprep.subr.mxu0 0.0
      %714 = vmatpush1.msra.mxu0 0.0
      %715 = vmatprep.subr.mxu0 0.0
      %716 = vmatpush1.msra.mxu0 0.0
      %717 = vmatprep.subr.mxu0 0.0
      %718 = vmatpush1.msra.mxu0 0.0
      %719 = vmatprep.subr.mxu0 0.0
      %720 = vmatpush1.msra.mxu0 0.0
      %721 = vmatprep.subr.mxu0 0.0
      %722 = vmatpush1.msra.mxu0 0.0
      %723 = vmatprep.subr.mxu0 0.0
      %724 = vmatpush1.msra.mxu0 0.0
      %725 = vmatprep.subr.mxu0 0.0
      %726 = vmatpush1.msra.mxu0 0.0
      %727 = vmatprep.subr.mxu0 0.0
      %728 = vmatpush1.msra.mxu0 0.0
      %729 = vmatprep.subr.mxu0 0.0
      %730 = vmatpush1.msra.mxu0 0.0
      %731 = vmatprep.subr.mxu0 0.0
      %732 = vmatpush1.msra.mxu0 0.0
      %733 = vmatprep.subr.mxu0 0.0
      %734 = vmatpush1.msra.mxu0 0.0
      %735 = vmatprep.subr.mxu0 0.0
      %736 = vmatpush1.msra.mxu0 0.0
      %737 = vmatprep.subr.mxu0 0.0
      %738 = vmatpush1.msra.mxu0 0.0
      %739 = vmatprep.subr.mxu0 0.0
      %740 = vmatpush1.msra.mxu0 0.0
      %741 = vmatprep.subr.mxu0 0.0
      %742 = vmatpush1.msra.mxu0 0.0
      %743 = vmatprep.subr.mxu0 0.0
      %744 = vmatpush1.msra.mxu0 0.0
      %745 = vmatprep.subr.mxu0 0.0
      %746 = vmatpush1.msra.mxu0 0.0
      %747 = vmatprep.subr.mxu0 0.0
      %748 = vmatpush1.msra.mxu0 0.0
      %749 = vmatprep.subr.mxu0 0.0
      %750 = vmatpush1.msra.mxu0 0.0
      %751 = vmatprep.subr.mxu0 0.0
      %752 = vmatpush1.msra.mxu0 0.0
      %753 = vmatprep.subr.mxu0 0.0
      %754 = vmatpush1.msra.mxu0 0.0
      %755 = vmatprep.subr.mxu0 0.0
      %756 = vmatpush1.msra.mxu0 0.0
      %757 = vmatprep.subr.mxu0 0.0
      %758 = vmatpush1.msra.mxu0 0.0
      %759 = vmatprep.subr.mxu0 0.0
      %760 = vmatpush1.msra.mxu0 0.0
      %761 = vmatprep.subr.mxu0 0.0
      %762 = vmatpush1.msra.mxu0 0.0
      %763 = vmatprep.subr.mxu0 0.0
      %764 = vmatpush1.msra.mxu0 0.0
      %765 = vmatprep.subr.mxu0 0.0
      %766 = vmatpush1.msra.mxu0 0.0
      %767 = vmatprep.subr.mxu0 0.0
      %768 = vmatpush1.msra.mxu0 0.0
      %769 = vmatprep.subr.mxu0 0.0
      %770 = vmatpush1.msra.mxu0 0.0
      %771 = vmatprep.subr.mxu0 0.0
      %772 = vmatpush1.msra.mxu0 0.0
      %773 = vmatprep.mubr.f32.mxu0 0.0
      %774 = vmatmul.mubr.f32.gmra.mrb[0].mxu0 %v549
      %v775 = vpop.f32.mrb[0].mxu0
      %v776 = vadd.f32 %v446, %v775
      %v777 = vpop.f32.mrb[0].mxu0
      %v778 = vadd.f32 %v448, %v777
      %779 = vdwg.mxu0
      %780 = vmatprep.subr.mxu0 %v565
      %781 = vmatpush1.msra.mxu0 %v563
      %782 = vmatprep.subr.mxu0 0.0
      %783 = vmatpush1.msra.mxu0 0.0
      %784 = vmatprep.subr.mxu0 0.0
      %785 = vmatpush1.msra.mxu0 0.0
      %786 = vmatprep.subr.mxu0 0.0
      %787 = vmatpush1.msra.mxu0 0.0
      %788 = vmatprep.subr.mxu0 0.0
      %789 = vmatpush1.msra.mxu0 0.0
      %790 = vmatprep.subr.mxu0 0.0
      %791 = vmatpush1.msra.mxu0 0.0
      %792 = vmatprep.subr.mxu0 0.0
      %793 = vmatpush1.msra.mxu0 0.0
      %794 = vmatprep.subr.mxu0 0.0
      %795 = vmatpush1.msra.mxu0 0.0
      %796 = vmatprep.subr.mxu0 0.0
      %797 = vmatpush1.msra.mxu0 0.0
      %798 = vmatprep.subr.mxu0 0.0
      %799 = vmatpush1.msra.mxu0 0.0
      %800 = vmatprep.subr.mxu0 0.0
      %801 = vmatpush1.msra.mxu0 0.0
      %802 = vmatprep.subr.mxu0 0.0
      %803 = vmatpush1.msra.mxu0 0.0
      %804 = vmatprep.subr.mxu0 0.0
      %805 = vmatpush1.msra.mxu0 0.0
      %806 = vmatprep.subr.mxu0 0.0
      %807 = vmatpush1.msra.mxu0 0.0
      %808 = vmatprep.subr.mxu0 0.0
      %809 = vmatpush1.msra.mxu0 0.0
      %810 = vmatprep.subr.mxu0 0.0
      %811 = vmatpush1.msra.mxu0 0.0
      %812 = vmatprep.subr.mxu0 0.0
      %813 = vmatpush1.msra.mxu0 0.0
      %814 = vmatprep.subr.mxu0 0.0
      %815 = vmatpush1.msra.mxu0 0.0
      %816 = vmatprep.subr.mxu0 0.0
      %817 = vmatpush1.msra.mxu0 0.0
      %818 = vmatprep.subr.mxu0 0.0
      %819 = vmatpush1.msra.mxu0 0.0
      %820 = vmatprep.subr.mxu0 0.0
      %821 = vmatpush1.msra.mxu0 0.0
      %822 = vmatprep.subr.mxu0 0.0
      %823 = vmatpush1.msra.mxu0 0.0
      %824 = vmatprep.subr.mxu0 0.0
      %825 = vmatpush1.msra.mxu0 0.0
      %826 = vmatprep.subr.mxu0 0.0
      %827 = vmatpush1.msra.mxu0 0.0
      %828 = vmatprep.subr.mxu0 0.0
      %829 = vmatpush1.msra.mxu0 0.0
      %830 = vmatprep.subr.mxu0 0.0
      %831 = vmatpush1.msra.mxu0 0.0
      %832 = vmatprep.subr.mxu0 0.0
      %833 = vmatpush1.msra.mxu0 0.0
      %834 = vmatprep.subr.mxu0 0.0
      %835 = vmatpush1.msra.mxu0 0.0
      %836 = vmatprep.subr.mxu0 0.0
      %837 = vmatpush1.msra.mxu0 0.0
      %838 = vmatprep.subr.mxu0 0.0
      %839 = vmatpush1.msra.mxu0 0.0
      %840 = vmatprep.subr.mxu0 0.0
      %841 = vmatpush1.msra.mxu0 0.0
      %842 = vmatprep.subr.mxu0 0.0
      %843 = vmatpush1.msra.mxu0 0.0
      %844 = vmatprep.mubr.f32.mxu0 0.0
      %845 = vmatmul.mubr.f32.gmra.mrb[0].mxu0 %v549
      %v846 = vpop.f32.mrb[0].mxu0
      %v847 = vadd.f32 %v517, %v846
      %v848 = vpop.f32.mrb[0].mxu0
      %v849 = vadd.f32 %v519, %v848
      %850 = vdwg.mxu0
      %v851 = vld [vmem:[%s165] sm:$0x77]
      %v852 = vld [vmem:[%s165 + $0x8] sm:$0x77]
      %v853 = vld [vmem:[%s165 + $0x10] sm:$0x77]
      %v854 = vld [vmem:[%s165 + $0x18] sm:$0x77]
      %v855 = vld [vmem:[%s165 + $0x20] sm:$0x7]
      %s856 = scalar_lea.vmem %s1, 16
      %v857 = vld [vmem:[%s856] sm:$0xff]
      %v863 = vcombine.high %v851, %v851
      %v864 = vcombine.high %v852, %v852
      %v865 = vcombine.high %v853, %v853
      %v866 = vcombine.high %v854, %v854
      %867 = vrot.lane.b32.xlu0 %v851, 65
      %v868 = vpop.permute.xlu0 %867
      %869 = vrot.lane.b32.xlu0 %v863, 65
      %v870 = vpop.permute.xlu0 %869
      %871 = vrot.lane.b32.xlu0 %v852, 65
      %v872 = vpop.permute.xlu0 %871
      %873 = vrot.lane.b32.xlu0 %v864, 65
      %v874 = vpop.permute.xlu0 %873
      %875 = vrot.lane.b32.xlu0 %v853, 65
      %v876 = vpop.permute.xlu0 %875
      %877 = vrot.lane.b32.xlu0 %v865, 65
      %v878 = vpop.permute.xlu0 %877
      %879 = vrot.lane.b32.xlu0 %v854, 65
      %v880 = vpop.permute.xlu0 %879
      %881 = vrot.lane.b32.xlu0 %v866, 65
      %v882 = vpop.permute.xlu0 %881
      %883 = vrot.lane.b32.xlu0 %v855, 65
      %v884 = vpop.permute.xlu0 %883
      %vm885 = vcmask 531456
      %v886 = vsel %vm885, %v868, %v870
      %v887 = vsel %vm885, %v870, %v872
      %v888 = vsel %vm885, %v872, %v874
      %v889 = vsel %vm885, %v874, %v876
      %v890 = vsel %vm885, %v876, %v878
      %v891 = vsel %vm885, %v878, %v880
      %v892 = vsel %vm885, %v880, %v882
      %v893 = vsel %vm885, %v882, %v884
      %v895 = vsel %vm216, %v857, 0
      %v897 = vsel %vm220, %v886, 0
      %v899 = vsel %vm220, %v887, 0
      %v901 = vsel %vm220, %v888, 0
      %v903 = vsel %vm220, %v889, 0
      %v905 = vsel %vm220, %v890, 0
      %v907 = vsel %vm220, %v891, 0
      %v909 = vsel %vm220, %v892, 0
      %v911 = vsel %vm220, %v893, 0
      %913 = vmatprep.subr.mxu0 %v899
      %914 = vmatpush1.msra.mxu0 %v897
      %915 = vmatprep.subr.mxu0 0.0
      %916 = vmatpush1.msra.mxu0 0.0
      %917 = vmatprep.subr.mxu0 0.0
      %918 = vmatpush1.msra.mxu0 0.0
      %919 = vmatprep.subr.mxu0 0.0
      %920 = vmatpush1.msra.mxu0 0.0
      %921 = vmatprep.subr.mxu0 0.0
      %922 = vmatpush1.msra.mxu0 0.0
      %923 = vmatprep.subr.mxu0 0.0
      %924 = vmatpush1.msra.mxu0 0.0
      %925 = vmatprep.subr.mxu0 0.0
      %926 = vmatpush1.msra.mxu0 0.0
      %927 = vmatprep.subr.mxu0 0.0
      %928 = vmatpush1.msra.mxu0 0.0
      %929 = vmatprep.subr.mxu0 0.0
      %930 = vmatpush1.msra.mxu0 0.0
      %931 = vmatprep.subr.mxu0 0.0
      %932 = vmatpush1.msra.mxu0 0.0
      %933 = vmatprep.subr.mxu0 0.0
      %934 = vmatpush1.msra.mxu0 0.0
      %935 = vmatprep.subr.mxu0 0.0
      %936 = vmatpush1.msra.mxu0 0.0
      %937 = vmatprep.subr.mxu0 0.0
      %938 = vmatpush1.msra.mxu0 0.0
      %939 = vmatprep.subr.mxu0 0.0
      %940 = vmatpush1.msra.mxu0 0.0
      %941 = vmatprep.subr.mxu0 0.0
      %942 = vmatpush1.msra.mxu0 0.0
      %943 = vmatprep.subr.mxu0 0.0
      %944 = vmatpush1.msra.mxu0 0.0
      %945 = vmatprep.subr.mxu0 0.0
      %946 = vmatpush1.msra.mxu0 0.0
      %947 = vmatprep.subr.mxu0 0.0
      %948 = vmatpush1.msra.mxu0 0.0
      %949 = vmatprep.subr.mxu0 0.0
      %950 = vmatpush1.msra.mxu0 0.0
      %951 = vmatprep.subr.mxu0 0.0
      %952 = vmatpush1.msra.mxu0 0.0
      %953 = vmatprep.subr.mxu0 0.0
      %954 = vmatpush1.msra.mxu0 0.0
      %955 = vmatprep.subr.mxu0 0.0
      %956 = vmatpush1.msra.mxu0 0.0
      %957 = vmatprep.subr.mxu0 0.0
      %958 = vmatpush1.msra.mxu0 0.0
      %959 = vmatprep.subr.mxu0 0.0
      %960 = vmatpush1.msra.mxu0 0.0
      %961 = vmatprep.subr.mxu0 0.0
      %962 = vmatpush1.msra.mxu0 0.0
      %963 = vmatprep.subr.mxu0 0.0
      %964 = vmatpush1.msra.mxu0 0.0
      %965 = vmatprep.subr.mxu0 0.0
      %966 = vmatpush1.msra.mxu0 0.0
      %967 = vmatprep.subr.mxu0 0.0
      %968 = vmatpush1.msra.mxu0 0.0
      %969 = vmatprep.subr.mxu0 0.0
      %970 = vmatpush1.msra.mxu0 0.0
      %971 = vmatprep.subr.mxu0 0.0
      %972 = vmatpush1.msra.mxu0 0.0
      %973 = vmatprep.subr.mxu0 0.0
      %974 = vmatpush1.msra.mxu0 0.0
      %975 = vmatprep.subr.mxu0 0.0
      %976 = vmatpush1.msra.mxu0 0.0
      %977 = vmatprep.mubr.f32.mxu0 0.0
      %978 = vmatmul.mubr.f32.gmra.mrb[0].mxu0 %v895
      %v979 = vpop.f32.mrb[0].mxu0
      %v980 = vadd.f32 0.0, %v979
      %v981 = vpop.f32.mrb[0].mxu0
      %v982 = vadd.f32 0.0, %v981
      %983 = vdwg.mxu0
      %984 = vmatprep.subr.mxu0 %v903
      %985 = vmatpush1.msra.mxu0 %v901
      %986 = vmatprep.subr.mxu0 0.0
      %987 = vmatpush1.msra.mxu0 0.0
      %988 = vmatprep.subr.mxu0 0.0
      %989 = vmatpush1.msra.mxu0 0.0
      %990 = vmatprep.subr.mxu0 0.0
      %991 = vmatpush1.msra.mxu0 0.0
      %992 = vmatprep.subr.mxu0 0.0
      %993 = vmatpush1.msra.mxu0 0.0
      %994 = vmatprep.subr.mxu0 0.0
      %995 = vmatpush1.msra.mxu0 0.0
      %996 = vmatprep.subr.mxu0 0.0
      %997 = vmatpush1.msra.mxu0 0.0
      %998 = vmatprep.subr.mxu0 0.0
      %999 = vmatpush1.msra.mxu0 0.0
      %1000 = vmatprep.subr.mxu0 0.0
      %1001 = vmatpush1.msra.mxu0 0.0
      %1002 = vmatprep.subr.mxu0 0.0
      %1003 = vmatpush1.msra.mxu0 0.0
      %1004 = vmatprep.subr.mxu0 0.0
      %1005 = vmatpush1.msra.mxu0 0.0
      %1006 = vmatprep.subr.mxu0 0.0
      %1007 = vmatpush1.msra.mxu0 0.0
      %1008 = vmatprep.subr.mxu0 0.0
      %1009 = vmatpush1.msra.mxu0 0.0
      %1010 = vmatprep.subr.mxu0 0.0
      %1011 = vmatpush1.msra.mxu0 0.0
      %1012 = vmatprep.subr.mxu0 0.0
      %1013 = vmatpush1.msra.mxu0 0.0
      %1014 = vmatprep.subr.mxu0 0.0
      %1015 = vmatpush1.msra.mxu0 0.0
      %1016 = vmatprep.subr.mxu0 0.0
      %1017 = vmatpush1.msra.mxu0 0.0
      %1018 = vmatprep.subr.mxu0 0.0
      %1019 = vmatpush1.msra.mxu0 0.0
      %1020 = vmatprep.subr.mxu0 0.0
      %1021 = vmatpush1.msra.mxu0 0.0
      %1022 = vmatprep.subr.mxu0 0.0
      %1023 = vmatpush1.msra.mxu0 0.0
      %1024 = vmatprep.subr.mxu0 0.0
      %1025 = vmatpush1.msra.mxu0 0.0
      %1026 = vmatprep.subr.mxu0 0.0
      %1027 = vmatpush1.msra.mxu0 0.0
      %1028 = vmatprep.subr.mxu0 0.0
      %1029 = vmatpush1.msra.mxu0 0.0
      %1030 = vmatprep.subr.mxu0 0.0
      %1031 = vmatpush1.msra.mxu0 0.0
      %1032 = vmatprep.subr.mxu0 0.0
      %1033 = vmatpush1.msra.mxu0 0.0
      %1034 = vmatprep.subr.mxu0 0.0
      %1035 = vmatpush1.msra.mxu0 0.0
      %1036 = vmatprep.subr.mxu0 0.0
      %1037 = vmatpush1.msra.mxu0 0.0
      %1038 = vmatprep.subr.mxu0 0.0
      %1039 = vmatpush1.msra.mxu0 0.0
      %1040 = vmatprep.subr.mxu0 0.0
      %1041 = vmatpush1.msra.mxu0 0.0
      %1042 = vmatprep.subr.mxu0 0.0
      %1043 = vmatpush1.msra.mxu0 0.0
      %1044 = vmatprep.subr.mxu0 0.0
      %1045 = vmatpush1.msra.mxu0 0.0
      %1046 = vmatprep.subr.mxu0 0.0
      %1047 = vmatpush1.msra.mxu0 0.0
      %1048 = vmatprep.mubr.f32.mxu0 0.0
      %1049 = vmatmul.mubr.f32.gmra.mrb[0].mxu0 %v895
      %v1050 = vpop.f32.mrb[0].mxu0
      %v1051 = vadd.f32 0.0, %v1050
      %v1052 = vpop.f32.mrb[0].mxu0
      %v1053 = vadd.f32 0.0, %v1052
      %1054 = vdwg.mxu0
      %1055 = vmatprep.subr.mxu0 %v907
      %1056 = vmatpush1.msra.mxu0 %v905
      %1057 = vmatprep.subr.mxu0 0.0
      %1058 = vmatpush1.msra.mxu0 0.0
      %1059 = vmatprep.subr.mxu0 0.0
      %1060 = vmatpush1.msra.mxu0 0.0
      %1061 = vmatprep.subr.mxu0 0.0
      %1062 = vmatpush1.msra.mxu0 0.0
      %1063 = vmatprep.subr.mxu0 0.0
      %1064 = vmatpush1.msra.mxu0 0.0
      %1065 = vmatprep.subr.mxu0 0.0
      %1066 = vmatpush1.msra.mxu0 0.0
      %1067 = vmatprep.subr.mxu0 0.0
      %1068 = vmatpush1.msra.mxu0 0.0
      %1069 = vmatprep.subr.mxu0 0.0
      %1070 = vmatpush1.msra.mxu0 0.0
      %1071 = vmatprep.subr.mxu0 0.0
      %1072 = vmatpush1.msra.mxu0 0.0
      %1073 = vmatprep.subr.mxu0 0.0
      %1074 = vmatpush1.msra.mxu0 0.0
      %1075 = vmatprep.subr.mxu0 0.0
      %1076 = vmatpush1.msra.mxu0 0.0
      %1077 = vmatprep.subr.mxu0 0.0
      %1078 = vmatpush1.msra.mxu0 0.0
      %1079 = vmatprep.subr.mxu0 0.0
      %1080 = vmatpush1.msra.mxu0 0.0
      %1081 = vmatprep.subr.mxu0 0.0
      %1082 = vmatpush1.msra.mxu0 0.0
      %1083 = vmatprep.subr.mxu0 0.0
      %1084 = vmatpush1.msra.mxu0 0.0
      %1085 = vmatprep.subr.mxu0 0.0
      %1086 = vmatpush1.msra.mxu0 0.0
      %1087 = vmatprep.subr.mxu0 0.0
      %1088 = vmatpush1.msra.mxu0 0.0
      %1089 = vmatprep.subr.mxu0 0.0
      %1090 = vmatpush1.msra.mxu0 0.0
      %1091 = vmatprep.subr.mxu0 0.0
      %1092 = vmatpush1.msra.mxu0 0.0
      %1093 = vmatprep.subr.mxu0 0.0
      %1094 = vmatpush1.msra.mxu0 0.0
      %1095 = vmatprep.subr.mxu0 0.0
      %1096 = vmatpush1.msra.mxu0 0.0
      %1097 = vmatprep.subr.mxu0 0.0
      %1098 = vmatpush1.msra.mxu0 0.0
      %1099 = vmatprep.subr.mxu0 0.0
      %1100 = vmatpush1.msra.mxu0 0.0
      %1101 = vmatprep.subr.mxu0 0.0
      %1102 = vmatpush1.msra.mxu0 0.0
      %1103 = vmatprep.subr.mxu0 0.0
      %1104 = vmatpush1.msra.mxu0 0.0
      %1105 = vmatprep.subr.mxu0 0.0
      %1106 = vmatpush1.msra.mxu0 0.0
      %1107 = vmatprep.subr.mxu0 0.0
      %1108 = vmatpush1.msra.mxu0 0.0
      %1109 = vmatprep.subr.mxu0 0.0
      %1110 = vmatpush1.msra.mxu0 0.0
      %1111 = vmatprep.subr.mxu0 0.0
      %1112 = vmatpush1.msra.mxu0 0.0
      %1113 = vmatprep.subr.mxu0 0.0
      %1114 = vmatpush1.msra.mxu0 0.0
      %1115 = vmatprep.subr.mxu0 0.0
      %1116 = vmatpush1.msra.mxu0 0.0
      %1117 = vmatprep.subr.mxu0 0.0
      %1118 = vmatpush1.msra.mxu0 0.0
      %1119 = vmatprep.mubr.f32.mxu0 0.0
      %1120 = vmatmul.mubr.f32.gmra.mrb[0].mxu0 %v895
      %v1121 = vpop.f32.mrb[0].mxu0
      %v1122 = vadd.f32 0.0, %v1121
      %v1123 = vpop.f32.mrb[0].mxu0
      %v1124 = vadd.f32 0.0, %v1123
      %1125 = vdwg.mxu0
      %1126 = vmatprep.subr.mxu0 %v911
      %1127 = vmatpush1.msra.mxu0 %v909
      %1128 = vmatprep.subr.mxu0 0.0
      %1129 = vmatpush1.msra.mxu0 0.0
      %1130 = vmatprep.subr.mxu0 0.0
      %1131 = vmatpush1.msra.mxu0 0.0
      %1132 = vmatprep.subr.mxu0 0.0
      %1133 = vmatpush1.msra.mxu0 0.0
      %1134 = vmatprep.subr.mxu0 0.0
      %1135 = vmatpush1.msra.mxu0 0.0
      %1136 = vmatprep.subr.mxu0 0.0
      %1137 = vmatpush1.msra.mxu0 0.0
      %1138 = vmatprep.subr.mxu0 0.0
      %1139 = vmatpush1.msra.mxu0 0.0
      %1140 = vmatprep.subr.mxu0 0.0
      %1141 = vmatpush1.msra.mxu0 0.0
      %1142 = vmatprep.subr.mxu0 0.0
      %1143 = vmatpush1.msra.mxu0 0.0
      %1144 = vmatprep.subr.mxu0 0.0
      %1145 = vmatpush1.msra.mxu0 0.0
      %1146 = vmatprep.subr.mxu0 0.0
      %1147 = vmatpush1.msra.mxu0 0.0
      %1148 = vmatprep.subr.mxu0 0.0
      %1149 = vmatpush1.msra.mxu0 0.0
      %1150 = vmatprep.subr.mxu0 0.0
      %1151 = vmatpush1.msra.mxu0 0.0
      %1152 = vmatprep.subr.mxu0 0.0
      %1153 = vmatpush1.msra.mxu0 0.0
      %1154 = vmatprep.subr.mxu0 0.0
      %1155 = vmatpush1.msra.mxu0 0.0
      %1156 = vmatprep.subr.mxu0 0.0
      %1157 = vmatpush1.msra.mxu0 0.0
      %1158 = vmatprep.subr.mxu0 0.0
      %1159 = vmatpush1.msra.mxu0 0.0
      %1160 = vmatprep.subr.mxu0 0.0
      %1161 = vmatpush1.msra.mxu0 0.0
      %1162 = vmatprep.subr.mxu0 0.0
      %1163 = vmatpush1.msra.mxu0 0.0
      %1164 = vmatprep.subr.mxu0 0.0
      %1165 = vmatpush1.msra.mxu0 0.0
      %1166 = vmatprep.subr.mxu0 0.0
      %1167 = vmatpush1.msra.mxu0 0.0
      %1168 = vmatprep.subr.mxu0 0.0
      %1169 = vmatpush1.msra.mxu0 0.0
      %1170 = vmatprep.subr.mxu0 0.0
      %1171 = vmatpush1.msra.mxu0 0.0
      %1172 = vmatprep.subr.mxu0 0.0
      %1173 = vmatpush1.msra.mxu0 0.0
      %1174 = vmatprep.subr.mxu0 0.0
      %1175 = vmatpush1.msra.mxu0 0.0
      %1176 = vmatprep.subr.mxu0 0.0
      %1177 = vmatpush1.msra.mxu0 0.0
      %1178 = vmatprep.subr.mxu0 0.0
      %1179 = vmatpush1.msra.mxu0 0.0
      %1180 = vmatprep.subr.mxu0 0.0
      %1181 = vmatpush1.msra.mxu0 0.0
      %1182 = vmatprep.subr.mxu0 0.0
      %1183 = vmatpush1.msra.mxu0 0.0
      %1184 = vmatprep.subr.mxu0 0.0
      %1185 = vmatpush1.msra.mxu0 0.0
      %1186 = vmatprep.subr.mxu0 0.0
      %1187 = vmatpush1.msra.mxu0 0.0
      %1188 = vmatprep.subr.mxu0 0.0
      %1189 = vmatpush1.msra.mxu0 0.0
      %1190 = vmatprep.mubr.f32.mxu0 0.0
      %1191 = vmatmul.mubr.f32.gmra.mrb[0].mxu0 %v895
      %v1192 = vpop.f32.mrb[0].mxu0
      %v1193 = vadd.f32 0.0, %v1192
      %v1194 = vpop.f32.mrb[0].mxu0
      %v1195 = vadd.f32 0.0, %v1194
      %1196 = vdwg.mxu0
      %v1197 = vadd.f32 %v634, %v980
      %v1198 = vadd.f32 %v636, %v982
      %v1199 = vadd.f32 %v705, %v1051
      %v1200 = vadd.f32 %v707, %v1053
      %v1201 = vadd.f32 %v776, %v1122
      %v1202 = vadd.f32 %v778, %v1124
      %v1203 = vadd.f32 %v847, %v1193
      %v1204 = vadd.f32 %v849, %v1195
      %v1205 = vld [vmem:[%s165] sm:$0x77]
      %v1206 = vld [vmem:[%s165 + $0x8] sm:$0x77]
      %v1207 = vld [vmem:[%s165 + $0x10] sm:$0x77]
      %v1208 = vld [vmem:[%s165 + $0x18] sm:$0x77]
      %v1209 = vld [vmem:[%s165 + $0x20] sm:$0x7]
      %s1210 = scalar_lea.vmem %s1, 24
      %v1211 = vld [vmem:[%s1210] sm:$0xff]
      %v1217 = vcombine.high %v1205, %v1205
      %v1218 = vcombine.high %v1206, %v1206
      %v1219 = vcombine.high %v1207, %v1207
      %v1220 = vcombine.high %v1208, %v1208
      %1221 = vrot.lane.b32.xlu0 %v1205, 1
      %v1222 = vpop.permute.xlu0 %1221
      %1223 = vrot.lane.b32.xlu0 %v1217, 1
      %v1224 = vpop.permute.xlu0 %1223
      %1225 = vrot.lane.b32.xlu0 %v1206, 1
      %v1226 = vpop.permute.xlu0 %1225
      %1227 = vrot.lane.b32.xlu0 %v1218, 1
      %v1228 = vpop.permute.xlu0 %1227
      %1229 = vrot.lane.b32.xlu0 %v1207, 1
      %v1230 = vpop.permute.xlu0 %1229
      %1231 = vrot.lane.b32.xlu0 %v1219, 1
      %v1232 = vpop.permute.xlu0 %1231
      %1233 = vrot.lane.b32.xlu0 %v1208, 1
      %v1234 = vpop.permute.xlu0 %1233
      %1235 = vrot.lane.b32.xlu0 %v1220, 1
      %v1236 = vpop.permute.xlu0 %1235
      %1237 = vrot.lane.b32.xlu0 %v1209, 1
      %v1238 = vpop.permute.xlu0 %1237
      %vm1239 = vcmask 7168
      %v1240 = vsel %vm1239, %v1222, %v1224
      %v1241 = vsel %vm1239, %v1224, %v1226
      %v1242 = vsel %vm1239, %v1226, %v1228
      %v1243 = vsel %vm1239, %v1228, %v1230
      %v1244 = vsel %vm1239, %v1230, %v1232
      %v1245 = vsel %vm1239, %v1232, %v1234
      %v1246 = vsel %vm1239, %v1234, %v1236
      %v1247 = vsel %vm1239, %v1236, %v1238
      %v1249 = vsel %vm216, %v1211, 0
      %v1251 = vsel %vm220, %v1240, 0
      %v1253 = vsel %vm220, %v1241, 0
      %v1255 = vsel %vm220, %v1242, 0
      %v1257 = vsel %vm220, %v1243, 0
      %v1259 = vsel %vm220, %v1244, 0
      %v1261 = vsel %vm220, %v1245, 0
      %v1263 = vsel %vm220, %v1246, 0
      %v1265 = vsel %vm220, %v1247, 0
      %1267 = vmatprep.subr.mxu0 %v1253
      %1268 = vmatpush1.msra.mxu0 %v1251
      %1269 = vmatprep.subr.mxu0 0.0
      %1270 = vmatpush1.msra.mxu0 0.0
      %1271 = vmatprep.subr.mxu0 0.0
      %1272 = vmatpush1.msra.mxu0 0.0
      %1273 = vmatprep.subr.mxu0 0.0
      %1274 = vmatpush1.msra.mxu0 0.0
      %1275 = vmatprep.subr.mxu0 0.0
      %1276 = vmatpush1.msra.mxu0 0.0
      %1277 = vmatprep.subr.mxu0 0.0
      %1278 = vmatpush1.msra.mxu0 0.0
      %1279 = vmatprep.subr.mxu0 0.0
      %1280 = vmatpush1.msra.mxu0 0.0
      %1281 = vmatprep.subr.mxu0 0.0
      %1282 = vmatpush1.msra.mxu0 0.0
      %1283 = vmatprep.subr.mxu0 0.0
      %1284 = vmatpush1.msra.mxu0 0.0
      %1285 = vmatprep.subr.mxu0 0.0
      %1286 = vmatpush1.msra.mxu0 0.0
      %1287 = vmatprep.subr.mxu0 0.0
      %1288 = vmatpush1.msra.mxu0 0.0
      %1289 = vmatprep.subr.mxu0 0.0
      %1290 = vmatpush1.msra.mxu0 0.0
      %1291 = vmatprep.subr.mxu0 0.0
      %1292 = vmatpush1.msra.mxu0 0.0
      %1293 = vmatprep.subr.mxu0 0.0
      %1294 = vmatpush1.msra.mxu0 0.0
      %1295 = vmatprep.subr.mxu0 0.0
      %1296 = vmatpush1.msra.mxu0 0.0
      %1297 = vmatprep.subr.mxu0 0.0
      %1298 = vmatpush1.msra.mxu0 0.0
      %1299 = vmatprep.subr.mxu0 0.0
      %1300 = vmatpush1.msra.mxu0 0.0
      %1301 = vmatprep.subr.mxu0 0.0
      %1302 = vmatpush1.msra.mxu0 0.0
      %1303 = vmatprep.subr.mxu0 0.0
      %1304 = vmatpush1.msra.mxu0 0.0
      %1305 = vmatprep.subr.mxu0 0.0
      %1306 = vmatpush1.msra.mxu0 0.0
      %1307 = vmatprep.subr.mxu0 0.0
      %1308 = vmatpush1.msra.mxu0 0.0
      %1309 = vmatprep.subr.mxu0 0.0
      %1310 = vmatpush1.msra.mxu0 0.0
      %1311 = vmatprep.subr.mxu0 0.0
      %1312 = vmatpush1.msra.mxu0 0.0
      %1313 = vmatprep.subr.mxu0 0.0
      %1314 = vmatpush1.msra.mxu0 0.0
      %1315 = vmatprep.subr.mxu0 0.0
      %1316 = vmatpush1.msra.mxu0 0.0
      %1317 = vmatprep.subr.mxu0 0.0
      %1318 = vmatpush1.msra.mxu0 0.0
      %1319 = vmatprep.subr.mxu0 0.0
      %1320 = vmatpush1.msra.mxu0 0.0
      %1321 = vmatprep.subr.mxu0 0.0
      %1322 = vmatpush1.msra.mxu0 0.0
      %1323 = vmatprep.subr.mxu0 0.0
      %1324 = vmatpush1.msra.mxu0 0.0
      %1325 = vmatprep.subr.mxu0 0.0
      %1326 = vmatpush1.msra.mxu0 0.0
      %1327 = vmatprep.subr.mxu0 0.0
      %1328 = vmatpush1.msra.mxu0 0.0
      %1329 = vmatprep.subr.mxu0 0.0
      %1330 = vmatpush1.msra.mxu0 0.0
      %1331 = vmatprep.mubr.f32.mxu0 0.0
      %1332 = vmatmul.mubr.f32.gmra.mrb[0].mxu0 %v1249
      %v1333 = vpop.f32.mrb[0].mxu0
      %v1334 = vadd.f32 0.0, %v1333
      %v1335 = vpop.f32.mrb[0].mxu0
      %v1336 = vadd.f32 0.0, %v1335
      %1337 = vdwg.mxu0
      %1338 = vmatprep.subr.mxu0 %v1257
      %1339 = vmatpush1.msra.mxu0 %v1255
      %1340 = vmatprep.subr.mxu0 0.0
      %1341 = vmatpush1.msra.mxu0 0.0
      %1342 = vmatprep.subr.mxu0 0.0
      %1343 = vmatpush1.msra.mxu0 0.0
      %1344 = vmatprep.subr.mxu0 0.0
      %1345 = vmatpush1.msra.mxu0 0.0
      %1346 = vmatprep.subr.mxu0 0.0
      %1347 = vmatpush1.msra.mxu0 0.0
      %1348 = vmatprep.subr.mxu0 0.0
      %1349 = vmatpush1.msra.mxu0 0.0
      %1350 = vmatprep.subr.mxu0 0.0
      %1351 = vmatpush1.msra.mxu0 0.0
      %1352 = vmatprep.subr.mxu0 0.0
      %1353 = vmatpush1.msra.mxu0 0.0
      %1354 = vmatprep.subr.mxu0 0.0
      %1355 = vmatpush1.msra.mxu0 0.0
      %1356 = vmatprep.subr.mxu0 0.0
      %1357 = vmatpush1.msra.mxu0 0.0
      %1358 = vmatprep.subr.mxu0 0.0
      %1359 = vmatpush1.msra.mxu0 0.0
      %1360 = vmatprep.subr.mxu0 0.0
      %1361 = vmatpush1.msra.mxu0 0.0
      %1362 = vmatprep.subr.mxu0 0.0
      %1363 = vmatpush1.msra.mxu0 0.0
      %1364 = vmatprep.subr.mxu0 0.0
      %1365 = vmatpush1.msra.mxu0 0.0
      %1366 = vmatprep.subr.mxu0 0.0
      %1367 = vmatpush1.msra.mxu0 0.0
      %1368 = vmatprep.subr.mxu0 0.0
      %1369 = vmatpush1.msra.mxu0 0.0
      %1370 = vmatprep.subr.mxu0 0.0
      %1371 = vmatpush1.msra.mxu0 0.0
      %1372 = vmatprep.subr.mxu0 0.0
      %1373 = vmatpush1.msra.mxu0 0.0
      %1374 = vmatprep.subr.mxu0 0.0
      %1375 = vmatpush1.msra.mxu0 0.0
      %1376 = vmatprep.subr.mxu0 0.0
      %1377 = vmatpush1.msra.mxu0 0.0
      %1378 = vmatprep.subr.mxu0 0.0
      %1379 = vmatpush1.msra.mxu0 0.0
      %1380 = vmatprep.subr.mxu0 0.0
      %1381 = vmatpush1.msra.mxu0 0.0
      %1382 = vmatprep.subr.mxu0 0.0
      %1383 = vmatpush1.msra.mxu0 0.0
      %1384 = vmatprep.subr.mxu0 0.0
      %1385 = vmatpush1.msra.mxu0 0.0
      %1386 = vmatprep.subr.mxu0 0.0
      %1387 = vmatpush1.msra.mxu0 0.0
      %1388 = vmatprep.subr.mxu0 0.0
      %1389 = vmatpush1.msra.mxu0 0.0
      %1390 = vmatprep.subr.mxu0 0.0
      %1391 = vmatpush1.msra.mxu0 0.0
      %1392 = vmatprep.subr.mxu0 0.0
      %1393 = vmatpush1.msra.mxu0 0.0
      %1394 = vmatprep.subr.mxu0 0.0
      %1395 = vmatpush1.msra.mxu0 0.0
      %1396 = vmatprep.subr.mxu0 0.0
      %1397 = vmatpush1.msra.mxu0 0.0
      %1398 = vmatprep.subr.mxu0 0.0
      %1399 = vmatpush1.msra.mxu0 0.0
      %1400 = vmatprep.subr.mxu0 0.0
      %1401 = vmatpush1.msra.mxu0 0.0
      %1402 = vmatprep.mubr.f32.mxu0 0.0
      %1403 = vmatmul.mubr.f32.gmra.mrb[0].mxu0 %v1249
      %v1404 = vpop.f32.mrb[0].mxu0
      %v1405 = vadd.f32 0.0, %v1404
      %v1406 = vpop.f32.mrb[0].mxu0
      %v1407 = vadd.f32 0.0, %v1406
      %1408 = vdwg.mxu0
      %1409 = vmatprep.subr.mxu0 %v1261
      %1410 = vmatpush1.msra.mxu0 %v1259
      %1411 = vmatprep.subr.mxu0 0.0
      %1412 = vmatpush1.msra.mxu0 0.0
      %1413 = vmatprep.subr.mxu0 0.0
      %1414 = vmatpush1.msra.mxu0 0.0
      %1415 = vmatprep.subr.mxu0 0.0
      %1416 = vmatpush1.msra.mxu0 0.0
      %1417 = vmatprep.subr.mxu0 0.0
      %1418 = vmatpush1.msra.mxu0 0.0
      %1419 = vmatprep.subr.mxu0 0.0
      %1420 = vmatpush1.msra.mxu0 0.0
      %1421 = vmatprep.subr.mxu0 0.0
      %1422 = vmatpush1.msra.mxu0 0.0
      %1423 = vmatprep.subr.mxu0 0.0
      %1424 = vmatpush1.msra.mxu0 0.0
      %1425 = vmatprep.subr.mxu0 0.0
      %1426 = vmatpush1.msra.mxu0 0.0
      %1427 = vmatprep.subr.mxu0 0.0
      %1428 = vmatpush1.msra.mxu0 0.0
      %1429 = vmatprep.subr.mxu0 0.0
      %1430 = vmatpush1.msra.mxu0 0.0
      %1431 = vmatprep.subr.mxu0 0.0
      %1432 = vmatpush1.msra.mxu0 0.0
      %1433 = vmatprep.subr.mxu0 0.0
      %1434 = vmatpush1.msra.mxu0 0.0
      %1435 = vmatprep.subr.mxu0 0.0
      %1436 = vmatpush1.msra.mxu0 0.0
      %1437 = vmatprep.subr.mxu0 0.0
      %1438 = vmatpush1.msra.mxu0 0.0
      %1439 = vmatprep.subr.mxu0 0.0
      %1440 = vmatpush1.msra.mxu0 0.0
      %1441 = vmatprep.subr.mxu0 0.0
      %1442 = vmatpush1.msra.mxu0 0.0
      %1443 = vmatprep.subr.mxu0 0.0
      %1444 = vmatpush1.msra.mxu0 0.0
      %1445 = vmatprep.subr.mxu0 0.0
      %1446 = vmatpush1.msra.mxu0 0.0
      %1447 = vmatprep.subr.mxu0 0.0
      %1448 = vmatpush1.msra.mxu0 0.0
      %1449 = vmatprep.subr.mxu0 0.0
      %1450 = vmatpush1.msra.mxu0 0.0
      %1451 = vmatprep.subr.mxu0 0.0
      %1452 = vmatpush1.msra.mxu0 0.0
      %1453 = vmatprep.subr.mxu0 0.0
      %1454 = vmatpush1.msra.mxu0 0.0
      %1455 = vmatprep.subr.mxu0 0.0
      %1456 = vmatpush1.msra.mxu0 0.0
      %1457 = vmatprep.subr.mxu0 0.0
      %1458 = vmatpush1.msra.mxu0 0.0
      %1459 = vmatprep.subr.mxu0 0.0
      %1460 = vmatpush1.msra.mxu0 0.0
      %1461 = vmatprep.subr.mxu0 0.0
      %1462 = vmatpush1.msra.mxu0 0.0
      %1463 = vmatprep.subr.mxu0 0.0
      %1464 = vmatpush1.msra.mxu0 0.0
      %1465 = vmatprep.subr.mxu0 0.0
      %1466 = vmatpush1.msra.mxu0 0.0
      %1467 = vmatprep.subr.mxu0 0.0
      %1468 = vmatpush1.msra.mxu0 0.0
      %1469 = vmatprep.subr.mxu0 0.0
      %1470 = vmatpush1.msra.mxu0 0.0
      %1471 = vmatprep.subr.mxu0 0.0
      %1472 = vmatpush1.msra.mxu0 0.0
      %1473 = vmatprep.mubr.f32.mxu0 0.0
      %1474 = vmatmul.mubr.f32.gmra.mrb[0].mxu0 %v1249
      %v1475 = vpop.f32.mrb[0].mxu0
      %v1476 = vadd.f32 0.0, %v1475
      %v1477 = vpop.f32.mrb[0].mxu0
      %v1478 = vadd.f32 0.0, %v1477
      %1479 = vdwg.mxu0
      %1480 = vmatprep.subr.mxu0 %v1265
      %1481 = vmatpush1.msra.mxu0 %v1263
      %1482 = vmatprep.subr.mxu0 0.0
      %1483 = vmatpush1.msra.mxu0 0.0
      %1484 = vmatprep.subr.mxu0 0.0
      %1485 = vmatpush1.msra.mxu0 0.0
      %1486 = vmatprep.subr.mxu0 0.0
      %1487 = vmatpush1.msra.mxu0 0.0
      %1488 = vmatprep.subr.mxu0 0.0
      %1489 = vmatpush1.msra.mxu0 0.0
      %1490 = vmatprep.subr.mxu0 0.0
      %1491 = vmatpush1.msra.mxu0 0.0
      %1492 = vmatprep.subr.mxu0 0.0
      %1493 = vmatpush1.msra.mxu0 0.0
      %1494 = vmatprep.subr.mxu0 0.0
      %1495 = vmatpush1.msra.mxu0 0.0
      %1496 = vmatprep.subr.mxu0 0.0
      %1497 = vmatpush1.msra.mxu0 0.0
      %1498 = vmatprep.subr.mxu0 0.0
      %1499 = vmatpush1.msra.mxu0 0.0
      %1500 = vmatprep.subr.mxu0 0.0
      %1501 = vmatpush1.msra.mxu0 0.0
      %1502 = vmatprep.subr.mxu0 0.0
      %1503 = vmatpush1.msra.mxu0 0.0
      %1504 = vmatprep.subr.mxu0 0.0
      %1505 = vmatpush1.msra.mxu0 0.0
      %1506 = vmatprep.subr.mxu0 0.0
      %1507 = vmatpush1.msra.mxu0 0.0
      %1508 = vmatprep.subr.mxu0 0.0
      %1509 = vmatpush1.msra.mxu0 0.0
      %1510 = vmatprep.subr.mxu0 0.0
      %1511 = vmatpush1.msra.mxu0 0.0
      %1512 = vmatprep.subr.mxu0 0.0
      %1513 = vmatpush1.msra.mxu0 0.0
      %1514 = vmatprep.subr.mxu0 0.0
      %1515 = vmatpush1.msra.mxu0 0.0
      %1516 = vmatprep.subr.mxu0 0.0
      %1517 = vmatpush1.msra.mxu0 0.0
      %1518 = vmatprep.subr.mxu0 0.0
      %1519 = vmatpush1.msra.mxu0 0.0
      %1520 = vmatprep.subr.mxu0 0.0
      %1521 = vmatpush1.msra.mxu0 0.0
      %1522 = vmatprep.subr.mxu0 0.0
      %1523 = vmatpush1.msra.mxu0 0.0
      %1524 = vmatprep.subr.mxu0 0.0
      %1525 = vmatpush1.msra.mxu0 0.0
      %1526 = vmatprep.subr.mxu0 0.0
      %1527 = vmatpush1.msra.mxu0 0.0
      %1528 = vmatprep.subr.mxu0 0.0
      %1529 = vmatpush1.msra.mxu0 0.0
      %1530 = vmatprep.subr.mxu0 0.0
      %1531 = vmatpush1.msra.mxu0 0.0
      %1532 = vmatprep.subr.mxu0 0.0
      %1533 = vmatpush1.msra.mxu0 0.0
      %1534 = vmatprep.subr.mxu0 0.0
      %1535 = vmatpush1.msra.mxu0 0.0
      %1536 = vmatprep.subr.mxu0 0.0
      %1537 = vmatpush1.msra.mxu0 0.0
      %1538 = vmatprep.subr.mxu0 0.0
      %1539 = vmatpush1.msra.mxu0 0.0
      %1540 = vmatprep.subr.mxu0 0.0
      %1541 = vmatpush1.msra.mxu0 0.0
      %1542 = vmatprep.subr.mxu0 0.0
      %1543 = vmatpush1.msra.mxu0 0.0
      %1544 = vmatprep.mubr.f32.mxu0 0.0
      %1545 = vmatmul.mubr.f32.gmra.mrb[0].mxu0 %v1249
      %v1546 = vpop.f32.mrb[0].mxu0
      %v1547 = vadd.f32 0.0, %v1546
      %v1548 = vpop.f32.mrb[0].mxu0
      %v1549 = vadd.f32 0.0, %v1548
      %1550 = vdwg.mxu0
      %v1551 = vadd.f32 %v1197, %v1334
      %v1552 = vadd.f32 %v1198, %v1336
      %v1553 = vadd.f32 %v1199, %v1405
      %v1554 = vadd.f32 %v1200, %v1407
      %v1555 = vadd.f32 %v1201, %v1476
      %v1556 = vadd.f32 %v1202, %v1478
      %v1557 = vadd.f32 %v1203, %v1547
      %v1558 = vadd.f32 %v1204, %v1549
      %v1559 = vld [vmem:[%s165 + $0x4] sm:$0x77]
      %v1560 = vld [vmem:[%s165 + $0xc] sm:$0x77]
      %v1561 = vld [vmem:[%s165 + $0x14] sm:$0x77]
      %v1562 = vld [vmem:[%s165 + $0x1c] sm:$0x77]
      %s1563 = scalar_lea.vmem %s1, 32
      %v1564 = vld [vmem:[%s1563] sm:$0xff]
      %v1569 = vcombine.high %v1559, %v1559
      %v1570 = vcombine.high %v1560, %v1560
      %v1571 = vcombine.high %v1561, %v1561
      %v1572 = vcombine.high %v1562, %v1562
      %v1574 = vsel %vm216, %v1564, 0
      %v1576 = vsel %vm220, %v1559, 0
      %v1578 = vsel %vm220, %v1569, 0
      %v1580 = vsel %vm220, %v1560, 0
      %v1582 = vsel %vm220, %v1570, 0
      %v1584 = vsel %vm220, %v1561, 0
      %v1586 = vsel %vm220, %v1571, 0
      %v1588 = vsel %vm220, %v1562, 0
      %v1590 = vsel %vm220, %v1572, 0
      %1592 = vmatprep.subr.mxu0 %v1578
      %1593 = vmatpush1.msra.mxu0 %v1576
      %1594 = vmatprep.subr.mxu0 0.0
      %1595 = vmatpush1.msra.mxu0 0.0
      %1596 = vmatprep.subr.mxu0 0.0
      %1597 = vmatpush1.msra.mxu0 0.0
      %1598 = vmatprep.subr.mxu0 0.0
      %1599 = vmatpush1.msra.mxu0 0.0
      %1600 = vmatprep.subr.mxu0 0.0
      %1601 = vmatpush1.msra.mxu0 0.0
      %1602 = vmatprep.subr.mxu0 0.0
      %1603 = vmatpush1.msra.mxu0 0.0
      %1604 = vmatprep.subr.mxu0 0.0
      %1605 = vmatpush1.msra.mxu0 0.0
      %1606 = vmatprep.subr.mxu0 0.0
      %1607 = vmatpush1.msra.mxu0 0.0
      %1608 = vmatprep.subr.mxu0 0.0
      %1609 = vmatpush1.msra.mxu0 0.0
      %1610 = vmatprep.subr.mxu0 0.0
      %1611 = vmatpush1.msra.mxu0 0.0
      %1612 = vmatprep.subr.mxu0 0.0
      %1613 = vmatpush1.msra.mxu0 0.0
      %1614 = vmatprep.subr.mxu0 0.0
      %1615 = vmatpush1.msra.mxu0 0.0
      %1616 = vmatprep.subr.mxu0 0.0
      %1617 = vmatpush1.msra.mxu0 0.0
      %1618 = vmatprep.subr.mxu0 0.0
      %1619 = vmatpush1.msra.mxu0 0.0
      %1620 = vmatprep.subr.mxu0 0.0
      %1621 = vmatpush1.msra.mxu0 0.0
      %1622 = vmatprep.subr.mxu0 0.0
      %1623 = vmatpush1.msra.mxu0 0.0
      %1624 = vmatprep.subr.mxu0 0.0
      %1625 = vmatpush1.msra.mxu0 0.0
      %1626 = vmatprep.subr.mxu0 0.0
      %1627 = vmatpush1.msra.mxu0 0.0
      %1628 = vmatprep.subr.mxu0 0.0
      %1629 = vmatpush1.msra.mxu0 0.0
      %1630 = vmatprep.subr.mxu0 0.0
      %1631 = vmatpush1.msra.mxu0 0.0
      %1632 = vmatprep.subr.mxu0 0.0
      %1633 = vmatpush1.msra.mxu0 0.0
      %1634 = vmatprep.subr.mxu0 0.0
      %1635 = vmatpush1.msra.mxu0 0.0
      %1636 = vmatprep.subr.mxu0 0.0
      %1637 = vmatpush1.msra.mxu0 0.0
      %1638 = vmatprep.subr.mxu0 0.0
      %1639 = vmatpush1.msra.mxu0 0.0
      %1640 = vmatprep.subr.mxu0 0.0
      %1641 = vmatpush1.msra.mxu0 0.0
      %1642 = vmatprep.subr.mxu0 0.0
      %1643 = vmatpush1.msra.mxu0 0.0
      %1644 = vmatprep.subr.mxu0 0.0
      %1645 = vmatpush1.msra.mxu0 0.0
      %1646 = vmatprep.subr.mxu0 0.0
      %1647 = vmatpush1.msra.mxu0 0.0
      %1648 = vmatprep.subr.mxu0 0.0
      %1649 = vmatpush1.msra.mxu0 0.0
      %1650 = vmatprep.subr.mxu0 0.0
      %1651 = vmatpush1.msra.mxu0 0.0
      %1652 = vmatprep.subr.mxu0 0.0
      %1653 = vmatpush1.msra.mxu0 0.0
      %1654 = vmatprep.subr.mxu0 0.0
      %1655 = vmatpush1.msra.mxu0 0.0
      %1656 = vmatprep.mubr.f32.mxu0 0.0
      %1657 = vmatmul.mubr.f32.gmra.mrb[0].mxu0 %v1574
      %v1658 = vpop.f32.mrb[0].mxu0
      %v1659 = vadd.f32 0.0, %v1658
      %v1660 = vpop.f32.mrb[0].mxu0
      %v1661 = vadd.f32 0.0, %v1660
      %1662 = vdwg.mxu0
      %1663 = vmatprep.subr.mxu0 %v1582
      %1664 = vmatpush1.msra.mxu0 %v1580
      %1665 = vmatprep.subr.mxu0 0.0
      %1666 = vmatpush1.msra.mxu0 0.0
      %1667 = vmatprep.subr.mxu0 0.0
      %1668 = vmatpush1.msra.mxu0 0.0
      %1669 = vmatprep.subr.mxu0 0.0
      %1670 = vmatpush1.msra.mxu0 0.0
      %1671 = vmatprep.subr.mxu0 0.0
      %1672 = vmatpush1.msra.mxu0 0.0
      %1673 = vmatprep.subr.mxu0 0.0
      %1674 = vmatpush1.msra.mxu0 0.0
      %1675 = vmatprep.subr.mxu0 0.0
      %1676 = vmatpush1.msra.mxu0 0.0
      %1677 = vmatprep.subr.mxu0 0.0
      %1678 = vmatpush1.msra.mxu0 0.0
      %1679 = vmatprep.subr.mxu0 0.0
      %1680 = vmatpush1.msra.mxu0 0.0
      %1681 = vmatprep.subr.mxu0 0.0
      %1682 = vmatpush1.msra.mxu0 0.0
      %1683 = vmatprep.subr.mxu0 0.0
      %1684 = vmatpush1.msra.mxu0 0.0
      %1685 = vmatprep.subr.mxu0 0.0
      %1686 = vmatpush1.msra.mxu0 0.0
      %1687 = vmatprep.subr.mxu0 0.0
      %1688 = vmatpush1.msra.mxu0 0.0
      %1689 = vmatprep.subr.mxu0 0.0
      %1690 = vmatpush1.msra.mxu0 0.0
      %1691 = vmatprep.subr.mxu0 0.0
      %1692 = vmatpush1.msra.mxu0 0.0
      %1693 = vmatprep.subr.mxu0 0.0
      %1694 = vmatpush1.msra.mxu0 0.0
      %1695 = vmatprep.subr.mxu0 0.0
      %1696 = vmatpush1.msra.mxu0 0.0
      %1697 = vmatprep.subr.mxu0 0.0
      %1698 = vmatpush1.msra.mxu0 0.0
      %1699 = vmatprep.subr.mxu0 0.0
      %1700 = vmatpush1.msra.mxu0 0.0
      %1701 = vmatprep.subr.mxu0 0.0
      %1702 = vmatpush1.msra.mxu0 0.0
      %1703 = vmatprep.subr.mxu0 0.0
      %1704 = vmatpush1.msra.mxu0 0.0
      %1705 = vmatprep.subr.mxu0 0.0
      %1706 = vmatpush1.msra.mxu0 0.0
      %1707 = vmatprep.subr.mxu0 0.0
      %1708 = vmatpush1.msra.mxu0 0.0
      %1709 = vmatprep.subr.mxu0 0.0
      %1710 = vmatpush1.msra.mxu0 0.0
      %1711 = vmatprep.subr.mxu0 0.0
      %1712 = vmatpush1.msra.mxu0 0.0
      %1713 = vmatprep.subr.mxu0 0.0
      %1714 = vmatpush1.msra.mxu0 0.0
      %1715 = vmatprep.subr.mxu0 0.0
      %1716 = vmatpush1.msra.mxu0 0.0
      %1717 = vmatprep.subr.mxu0 0.0
      %1718 = vmatpush1.msra.mxu0 0.0
      %1719 = vmatprep.subr.mxu0 0.0
      %1720 = vmatpush1.msra.mxu0 0.0
      %1721 = vmatprep.subr.mxu0 0.0
      %1722 = vmatpush1.msra.mxu0 0.0
      %1723 = vmatprep.subr.mxu0 0.0
      %1724 = vmatpush1.msra.mxu0 0.0
      %1725 = vmatprep.subr.mxu0 0.0
      %1726 = vmatpush1.msra.mxu0 0.0
      %1727 = vmatprep.mubr.f32.mxu0 0.0
      %1728 = vmatmul.mubr.f32.gmra.mrb[0].mxu0 %v1574
      %v1729 = vpop.f32.mrb[0].mxu0
      %v1730 = vadd.f32 0.0, %v1729
      %v1731 = vpop.f32.mrb[0].mxu0
      %v1732 = vadd.f32 0.0, %v1731
      %1733 = vdwg.mxu0
      %1734 = vmatprep.subr.mxu0 %v1586
      %1735 = vmatpush1.msra.mxu0 %v1584
      %1736 = vmatprep.subr.mxu0 0.0
      %1737 = vmatpush1.msra.mxu0 0.0
      %1738 = vmatprep.subr.mxu0 0.0
      %1739 = vmatpush1.msra.mxu0 0.0
      %1740 = vmatprep.subr.mxu0 0.0
      %1741 = vmatpush1.msra.mxu0 0.0
      %1742 = vmatprep.subr.mxu0 0.0
      %1743 = vmatpush1.msra.mxu0 0.0
      %1744 = vmatprep.subr.mxu0 0.0
      %1745 = vmatpush1.msra.mxu0 0.0
      %1746 = vmatprep.subr.mxu0 0.0
      %1747 = vmatpush1.msra.mxu0 0.0
      %1748 = vmatprep.subr.mxu0 0.0
      %1749 = vmatpush1.msra.mxu0 0.0
      %1750 = vmatprep.subr.mxu0 0.0
      %1751 = vmatpush1.msra.mxu0 0.0
      %1752 = vmatprep.subr.mxu0 0.0
      %1753 = vmatpush1.msra.mxu0 0.0
      %1754 = vmatprep.subr.mxu0 0.0
      %1755 = vmatpush1.msra.mxu0 0.0
      %1756 = vmatprep.subr.mxu0 0.0
      %1757 = vmatpush1.msra.mxu0 0.0
      %1758 = vmatprep.subr.mxu0 0.0
      %1759 = vmatpush1.msra.mxu0 0.0
      %1760 = vmatprep.subr.mxu0 0.0
      %1761 = vmatpush1.msra.mxu0 0.0
      %1762 = vmatprep.subr.mxu0 0.0
      %1763 = vmatpush1.msra.mxu0 0.0
      %1764 = vmatprep.subr.mxu0 0.0
      %1765 = vmatpush1.msra.mxu0 0.0
      %1766 = vmatprep.subr.mxu0 0.0
      %1767 = vmatpush1.msra.mxu0 0.0
      %1768 = vmatprep.subr.mxu0 0.0
      %1769 = vmatpush1.msra.mxu0 0.0
      %1770 = vmatprep.subr.mxu0 0.0
      %1771 = vmatpush1.msra.mxu0 0.0
      %1772 = vmatprep.subr.mxu0 0.0
      %1773 = vmatpush1.msra.mxu0 0.0
      %1774 = vmatprep.subr.mxu0 0.0
      %1775 = vmatpush1.msra.mxu0 0.0
      %1776 = vmatprep.subr.mxu0 0.0
      %1777 = vmatpush1.msra.mxu0 0.0
      %1778 = vmatprep.subr.mxu0 0.0
      %1779 = vmatpush1.msra.mxu0 0.0
      %1780 = vmatprep.subr.mxu0 0.0
      %1781 = vmatpush1.msra.mxu0 0.0
      %1782 = vmatprep.subr.mxu0 0.0
      %1783 = vmatpush1.msra.mxu0 0.0
      %1784 = vmatprep.subr.mxu0 0.0
      %1785 = vmatpush1.msra.mxu0 0.0
      %1786 = vmatprep.subr.mxu0 0.0
      %1787 = vmatpush1.msra.mxu0 0.0
      %1788 = vmatprep.subr.mxu0 0.0
      %1789 = vmatpush1.msra.mxu0 0.0
      %1790 = vmatprep.subr.mxu0 0.0
      %1791 = vmatpush1.msra.mxu0 0.0
      %1792 = vmatprep.subr.mxu0 0.0
      %1793 = vmatpush1.msra.mxu0 0.0
      %1794 = vmatprep.subr.mxu0 0.0
      %1795 = vmatpush1.msra.mxu0 0.0
      %1796 = vmatprep.subr.mxu0 0.0
      %1797 = vmatpush1.msra.mxu0 0.0
      %1798 = vmatprep.mubr.f32.mxu0 0.0
      %1799 = vmatmul.mubr.f32.gmra.mrb[0].mxu0 %v1574
      %v1800 = vpop.f32.mrb[0].mxu0
      %v1801 = vadd.f32 0.0, %v1800
      %v1802 = vpop.f32.mrb[0].mxu0
      %v1803 = vadd.f32 0.0, %v1802
      %1804 = vdwg.mxu0
      %1805 = vmatprep.subr.mxu0 %v1590
      %1806 = vmatpush1.msra.mxu0 %v1588
      %1807 = vmatprep.subr.mxu0 0.0
      %1808 = vmatpush1.msra.mxu0 0.0
      %1809 = vmatprep.subr.mxu0 0.0
      %1810 = vmatpush1.msra.mxu0 0.0
      %1811 = vmatprep.subr.mxu0 0.0
      %1812 = vmatpush1.msra.mxu0 0.0
      %1813 = vmatprep.subr.mxu0 0.0
      %1814 = vmatpush1.msra.mxu0 0.0
      %1815 = vmatprep.subr.mxu0 0.0
      %1816 = vmatpush1.msra.mxu0 0.0
      %1817 = vmatprep.subr.mxu0 0.0
      %1818 = vmatpush1.msra.mxu0 0.0
      %1819 = vmatprep.subr.mxu0 0.0
      %1820 = vmatpush1.msra.mxu0 0.0
      %1821 = vmatprep.subr.mxu0 0.0
      %1822 = vmatpush1.msra.mxu0 0.0
      %1823 = vmatprep.subr.mxu0 0.0
      %1824 = vmatpush1.msra.mxu0 0.0
      %1825 = vmatprep.subr.mxu0 0.0
      %1826 = vmatpush1.msra.mxu0 0.0
      %1827 = vmatprep.subr.mxu0 0.0
      %1828 = vmatpush1.msra.mxu0 0.0
      %1829 = vmatprep.subr.mxu0 0.0
      %1830 = vmatpush1.msra.mxu0 0.0
      %1831 = vmatprep.subr.mxu0 0.0
      %1832 = vmatpush1.msra.mxu0 0.0
      %1833 = vmatprep.subr.mxu0 0.0
      %1834 = vmatpush1.msra.mxu0 0.0
      %1835 = vmatprep.subr.mxu0 0.0
      %1836 = vmatpush1.msra.mxu0 0.0
      %1837 = vmatprep.subr.mxu0 0.0
      %1838 = vmatpush1.msra.mxu0 0.0
      %1839 = vmatprep.subr.mxu0 0.0
      %1840 = vmatpush1.msra.mxu0 0.0
      %1841 = vmatprep.subr.mxu0 0.0
      %1842 = vmatpush1.msra.mxu0 0.0
      %1843 = vmatprep.subr.mxu0 0.0
      %1844 = vmatpush1.msra.mxu0 0.0
      %1845 = vmatprep.subr.mxu0 0.0
      %1846 = vmatpush1.msra.mxu0 0.0
      %1847 = vmatprep.subr.mxu0 0.0
      %1848 = vmatpush1.msra.mxu0 0.0
      %1849 = vmatprep.subr.mxu0 0.0
      %1850 = vmatpush1.msra.mxu0 0.0
      %1851 = vmatprep.subr.mxu0 0.0
      %1852 = vmatpush1.msra.mxu0 0.0
      %1853 = vmatprep.subr.mxu0 0.0
      %1854 = vmatpush1.msra.mxu0 0.0
      %1855 = vmatprep.subr.mxu0 0.0
      %1856 = vmatpush1.msra.mxu0 0.0
      %1857 = vmatprep.subr.mxu0 0.0
      %1858 = vmatpush1.msra.mxu0 0.0
      %1859 = vmatprep.subr.mxu0 0.0
      %1860 = vmatpush1.msra.mxu0 0.0
      %1861 = vmatprep.subr.mxu0 0.0
      %1862 = vmatpush1.msra.mxu0 0.0
      %1863 = vmatprep.subr.mxu0 0.0
      %1864 = vmatpush1.msra.mxu0 0.0
      %1865 = vmatprep.subr.mxu0 0.0
      %1866 = vmatpush1.msra.mxu0 0.0
      %1867 = vmatprep.subr.mxu0 0.0
      %1868 = vmatpush1.msra.mxu0 0.0
      %1869 = vmatprep.mubr.f32.mxu0 0.0
      %1870 = vmatmul.mubr.f32.gmra.mrb[0].mxu0 %v1574
      %v1871 = vpop.f32.mrb[0].mxu0
      %v1872 = vadd.f32 0.0, %v1871
      %v1873 = vpop.f32.mrb[0].mxu0
      %v1874 = vadd.f32 0.0, %v1873
      %1875 = vdwg.mxu0
      %v1876 = vadd.f32 %v1551, %v1659
      %v1877 = vadd.f32 %v1552, %v1661
      %v1878 = vadd.f32 %v1553, %v1730
      %v1879 = vadd.f32 %v1554, %v1732
      %v1880 = vadd.f32 %v1555, %v1801
      %v1881 = vadd.f32 %v1556, %v1803
      %v1882 = vadd.f32 %v1557, %v1872
      %v1883 = vadd.f32 %v1558, %v1874
      %v1884 = vld [vmem:[%s165 + $0x4] sm:$0x77]
      %v1885 = vld [vmem:[%s165 + $0xc] sm:$0x77]
      %v1886 = vld [vmem:[%s165 + $0x14] sm:$0x77]
      %v1887 = vld [vmem:[%s165 + $0x1c] sm:$0x77]
      %v1888 = vld [vmem:[%s165 + $0x24] sm:$0x7]
      %s1889 = scalar_lea.vmem %s1, 40
      %v1890 = vld [vmem:[%s1889] sm:$0xff]
      %v1896 = vcombine.high %v1884, %v1884
      %v1897 = vcombine.high %v1885, %v1885
      %v1898 = vcombine.high %v1886, %v1886
      %v1899 = vcombine.high %v1887, %v1887
      %1900 = vrot.lane.b32.xlu0 %v1884, 127
      %v1901 = vpop.permute.xlu0 %1900
      %1902 = vrot.lane.b32.xlu0 %v1896, 127
      %v1903 = vpop.permute.xlu0 %1902
      %1904 = vrot.lane.b32.xlu0 %v1885, 127
      %v1905 = vpop.permute.xlu0 %1904
      %1906 = vrot.lane.b32.xlu0 %v1897, 127
      %v1907 = vpop.permute.xlu0 %1906
      %1908 = vrot.lane.b32.xlu0 %v1886, 127
      %v1909 = vpop.permute.xlu0 %1908
      %1910 = vrot.lane.b32.xlu0 %v1898, 127
      %v1911 = vpop.permute.xlu0 %1910
      %1912 = vrot.lane.b32.xlu0 %v1887, 127
      %v1913 = vpop.permute.xlu0 %1912
      %1914 = vrot.lane.b32.xlu0 %v1899, 127
      %v1915 = vpop.permute.xlu0 %1914
      %1916 = vrot.lane.b32.xlu0 %v1888, 127
      %v1917 = vpop.permute.xlu0 %1916
      %vm1918 = vcmask 1039360
      %v1919 = vsel %vm1918, %v1901, %v1903
      %v1920 = vsel %vm1918, %v1903, %v1905
      %v1921 = vsel %vm1918, %v1905, %v1907
      %v1922 = vsel %vm1918, %v1907, %v1909
      %v1923 = vsel %vm1918, %v1909, %v1911
      %v1924 = vsel %vm1918, %v1911, %v1913
      %v1925 = vsel %vm1918, %v1913, %v1915
      %v1926 = vsel %vm1918, %v1915, %v1917
      %v1928 = vsel %vm216, %v1890, 0
      %v1930 = vsel %vm220, %v1919, 0
      %v1932 = vsel %vm220, %v1920, 0
      %v1934 = vsel %vm220, %v1921, 0
      %v1936 = vsel %vm220, %v1922, 0
      %v1938 = vsel %vm220, %v1923, 0
      %v1940 = vsel %vm220, %v1924, 0
      %v1942 = vsel %vm220, %v1925, 0
      %v1944 = vsel %vm220, %v1926, 0
      %1946 = vmatprep.subr.mxu0 %v1932
      %1947 = vmatpush1.msra.mxu0 %v1930
      %1948 = vmatprep.subr.mxu0 0.0
      %1949 = vmatpush1.msra.mxu0 0.0
      %1950 = vmatprep.subr.mxu0 0.0
      %1951 = vmatpush1.msra.mxu0 0.0
      %1952 = vmatprep.subr.mxu0 0.0
      %1953 = vmatpush1.msra.mxu0 0.0
      %1954 = vmatprep.subr.mxu0 0.0
      %1955 = vmatpush1.msra.mxu0 0.0
      %1956 = vmatprep.subr.mxu0 0.0
      %1957 = vmatpush1.msra.mxu0 0.0
      %1958 = vmatprep.subr.mxu0 0.0
      %1959 = vmatpush1.msra.mxu0 0.0
      %1960 = vmatprep.subr.mxu0 0.0
      %1961 = vmatpush1.msra.mxu0 0.0
      %1962 = vmatprep.subr.mxu0 0.0
      %1963 = vmatpush1.msra.mxu0 0.0
      %1964 = vmatprep.subr.mxu0 0.0
      %1965 = vmatpush1.msra.mxu0 0.0
      %1966 = vmatprep.subr.mxu0 0.0
      %1967 = vmatpush1.msra.mxu0 0.0
      %1968 = vmatprep.subr.mxu0 0.0
      %1969 = vmatpush1.msra.mxu0 0.0
      %1970 = vmatprep.subr.mxu0 0.0
      %1971 = vmatpush1.msra.mxu0 0.0
      %1972 = vmatprep.subr.mxu0 0.0
      %1973 = vmatpush1.msra.mxu0 0.0
      %1974 = vmatprep.subr.mxu0 0.0
      %1975 = vmatpush1.msra.mxu0 0.0
      %1976 = vmatprep.subr.mxu0 0.0
      %1977 = vmatpush1.msra.mxu0 0.0
      %1978 = vmatprep.subr.mxu0 0.0
      %1979 = vmatpush1.msra.mxu0 0.0
      %1980 = vmatprep.subr.mxu0 0.0
      %1981 = vmatpush1.msra.mxu0 0.0
      %1982 = vmatprep.subr.mxu0 0.0
      %1983 = vmatpush1.msra.mxu0 0.0
      %1984 = vmatprep.subr.mxu0 0.0
      %1985 = vmatpush1.msra.mxu0 0.0
      %1986 = vmatprep.subr.mxu0 0.0
      %1987 = vmatpush1.msra.mxu0 0.0
      %1988 = vmatprep.subr.mxu0 0.0
      %1989 = vmatpush1.msra.mxu0 0.0
      %1990 = vmatprep.subr.mxu0 0.0
      %1991 = vmatpush1.msra.mxu0 0.0
      %1992 = vmatprep.subr.mxu0 0.0
      %1993 = vmatpush1.msra.mxu0 0.0
      %1994 = vmatprep.subr.mxu0 0.0
      %1995 = vmatpush1.msra.mxu0 0.0
      %1996 = vmatprep.subr.mxu0 0.0
      %1997 = vmatpush1.msra.mxu0 0.0
      %1998 = vmatprep.subr.mxu0 0.0
      %1999 = vmatpush1.msra.mxu0 0.0
      %2000 = vmatprep.subr.mxu0 0.0
      %2001 = vmatpush1.msra.mxu0 0.0
      %2002 = vmatprep.subr.mxu0 0.0
      %2003 = vmatpush1.msra.mxu0 0.0
      %2004 = vmatprep.subr.mxu0 0.0
      %2005 = vmatpush1.msra.mxu0 0.0
      %2006 = vmatprep.subr.mxu0 0.0
      %2007 = vmatpush1.msra.mxu0 0.0
      %2008 = vmatprep.subr.mxu0 0.0
      %2009 = vmatpush1.msra.mxu0 0.0
      %2010 = vmatprep.mubr.f32.mxu0 0.0
      %2011 = vmatmul.mubr.f32.gmra.mrb[0].mxu0 %v1928
      %v2012 = vpop.f32.mrb[0].mxu0
      %v2013 = vadd.f32 0.0, %v2012
      %v2014 = vpop.f32.mrb[0].mxu0
      %v2015 = vadd.f32 0.0, %v2014
      %2016 = vdwg.mxu0
      %2017 = vmatprep.subr.mxu0 %v1936
      %2018 = vmatpush1.msra.mxu0 %v1934
      %2019 = vmatprep.subr.mxu0 0.0
      %2020 = vmatpush1.msra.mxu0 0.0
      %2021 = vmatprep.subr.mxu0 0.0
      %2022 = vmatpush1.msra.mxu0 0.0
      %2023 = vmatprep.subr.mxu0 0.0
      %2024 = vmatpush1.msra.mxu0 0.0
      %2025 = vmatprep.subr.mxu0 0.0
      %2026 = vmatpush1.msra.mxu0 0.0
      %2027 = vmatprep.subr.mxu0 0.0
      %2028 = vmatpush1.msra.mxu0 0.0
      %2029 = vmatprep.subr.mxu0 0.0
      %2030 = vmatpush1.msra.mxu0 0.0
      %2031 = vmatprep.subr.mxu0 0.0
      %2032 = vmatpush1.msra.mxu0 0.0
      %2033 = vmatprep.subr.mxu0 0.0
      %2034 = vmatpush1.msra.mxu0 0.0
      %2035 = vmatprep.subr.mxu0 0.0
      %2036 = vmatpush1.msra.mxu0 0.0
      %2037 = vmatprep.subr.mxu0 0.0
      %2038 = vmatpush1.msra.mxu0 0.0
      %2039 = vmatprep.subr.mxu0 0.0
      %2040 = vmatpush1.msra.mxu0 0.0
      %2041 = vmatprep.subr.mxu0 0.0
      %2042 = vmatpush1.msra.mxu0 0.0
      %2043 = vmatprep.subr.mxu0 0.0
      %2044 = vmatpush1.msra.mxu0 0.0
      %2045 = vmatprep.subr.mxu0 0.0
      %2046 = vmatpush1.msra.mxu0 0.0
      %2047 = vmatprep.subr.mxu0 0.0
      %2048 = vmatpush1.msra.mxu0 0.0
      %2049 = vmatprep.subr.mxu0 0.0
      %2050 = vmatpush1.msra.mxu0 0.0
      %2051 = vmatprep.subr.mxu0 0.0
      %2052 = vmatpush1.msra.mxu0 0.0
      %2053 = vmatprep.subr.mxu0 0.0
      %2054 = vmatpush1.msra.mxu0 0.0
      %2055 = vmatprep.subr.mxu0 0.0
      %2056 = vmatpush1.msra.mxu0 0.0
      %2057 = vmatprep.subr.mxu0 0.0
      %2058 = vmatpush1.msra.mxu0 0.0
      %2059 = vmatprep.subr.mxu0 0.0
      %2060 = vmatpush1.msra.mxu0 0.0
      %2061 = vmatprep.subr.mxu0 0.0
      %2062 = vmatpush1.msra.mxu0 0.0
      %2063 = vmatprep.subr.mxu0 0.0
      %2064 = vmatpush1.msra.mxu0 0.0
      %2065 = vmatprep.subr.mxu0 0.0
      %2066 = vmatpush1.msra.mxu0 0.0
      %2067 = vmatprep.subr.mxu0 0.0
      %2068 = vmatpush1.msra.mxu0 0.0
      %2069 = vmatprep.subr.mxu0 0.0
      %2070 = vmatpush1.msra.mxu0 0.0
      %2071 = vmatprep.subr.mxu0 0.0
      %2072 = vmatpush1.msra.mxu0 0.0
      %2073 = vmatprep.subr.mxu0 0.0
      %2074 = vmatpush1.msra.mxu0 0.0
      %2075 = vmatprep.subr.mxu0 0.0
      %2076 = vmatpush1.msra.mxu0 0.0
      %2077 = vmatprep.subr.mxu0 0.0
      %2078 = vmatpush1.msra.mxu0 0.0
      %2079 = vmatprep.subr.mxu0 0.0
      %2080 = vmatpush1.msra.mxu0 0.0
      %2081 = vmatprep.mubr.f32.mxu0 0.0
      %2082 = vmatmul.mubr.f32.gmra.mrb[0].mxu0 %v1928
      %v2083 = vpop.f32.mrb[0].mxu0
      %v2084 = vadd.f32 0.0, %v2083
      %v2085 = vpop.f32.mrb[0].mxu0
      %v2086 = vadd.f32 0.0, %v2085
      %2087 = vdwg.mxu0
      %2088 = vmatprep.subr.mxu0 %v1940
      %2089 = vmatpush1.msra.mxu0 %v1938
      %2090 = vmatprep.subr.mxu0 0.0
      %2091 = vmatpush1.msra.mxu0 0.0
      %2092 = vmatprep.subr.mxu0 0.0
      %2093 = vmatpush1.msra.mxu0 0.0
      %2094 = vmatprep.subr.mxu0 0.0
      %2095 = vmatpush1.msra.mxu0 0.0
      %2096 = vmatprep.subr.mxu0 0.0
      %2097 = vmatpush1.msra.mxu0 0.0
      %2098 = vmatprep.subr.mxu0 0.0
      %2099 = vmatpush1.msra.mxu0 0.0
      %2100 = vmatprep.subr.mxu0 0.0
      %2101 = vmatpush1.msra.mxu0 0.0
      %2102 = vmatprep.subr.mxu0 0.0
      %2103 = vmatpush1.msra.mxu0 0.0
      %2104 = vmatprep.subr.mxu0 0.0
      %2105 = vmatpush1.msra.mxu0 0.0
      %2106 = vmatprep.subr.mxu0 0.0
      %2107 = vmatpush1.msra.mxu0 0.0
      %2108 = vmatprep.subr.mxu0 0.0
      %2109 = vmatpush1.msra.mxu0 0.0
      %2110 = vmatprep.subr.mxu0 0.0
      %2111 = vmatpush1.msra.mxu0 0.0
      %2112 = vmatprep.subr.mxu0 0.0
      %2113 = vmatpush1.msra.mxu0 0.0
      %2114 = vmatprep.subr.mxu0 0.0
      %2115 = vmatpush1.msra.mxu0 0.0
      %2116 = vmatprep.subr.mxu0 0.0
      %2117 = vmatpush1.msra.mxu0 0.0
      %2118 = vmatprep.subr.mxu0 0.0
      %2119 = vmatpush1.msra.mxu0 0.0
      %2120 = vmatprep.subr.mxu0 0.0
      %2121 = vmatpush1.msra.mxu0 0.0
      %2122 = vmatprep.subr.mxu0 0.0
      %2123 = vmatpush1.msra.mxu0 0.0
      %2124 = vmatprep.subr.mxu0 0.0
      %2125 = vmatpush1.msra.mxu0 0.0
      %2126 = vmatprep.subr.mxu0 0.0
      %2127 = vmatpush1.msra.mxu0 0.0
      %2128 = vmatprep.subr.mxu0 0.0
      %2129 = vmatpush1.msra.mxu0 0.0
      %2130 = vmatprep.subr.mxu0 0.0
      %2131 = vmatpush1.msra.mxu0 0.0
      %2132 = vmatprep.subr.mxu0 0.0
      %2133 = vmatpush1.msra.mxu0 0.0
      %2134 = vmatprep.subr.mxu0 0.0
      %2135 = vmatpush1.msra.mxu0 0.0
      %2136 = vmatprep.subr.mxu0 0.0
      %2137 = vmatpush1.msra.mxu0 0.0
      %2138 = vmatprep.subr.mxu0 0.0
      %2139 = vmatpush1.msra.mxu0 0.0
      %2140 = vmatprep.subr.mxu0 0.0
      %2141 = vmatpush1.msra.mxu0 0.0
      %2142 = vmatprep.subr.mxu0 0.0
      %2143 = vmatpush1.msra.mxu0 0.0
      %2144 = vmatprep.subr.mxu0 0.0
      %2145 = vmatpush1.msra.mxu0 0.0
      %2146 = vmatprep.subr.mxu0 0.0
      %2147 = vmatpush1.msra.mxu0 0.0
      %2148 = vmatprep.subr.mxu0 0.0
      %2149 = vmatpush1.msra.mxu0 0.0
      %2150 = vmatprep.subr.mxu0 0.0
      %2151 = vmatpush1.msra.mxu0 0.0
      %2152 = vmatprep.mubr.f32.mxu0 0.0
      %2153 = vmatmul.mubr.f32.gmra.mrb[0].mxu0 %v1928
      %v2154 = vpop.f32.mrb[0].mxu0
      %v2155 = vadd.f32 0.0, %v2154
      %v2156 = vpop.f32.mrb[0].mxu0
      %v2157 = vadd.f32 0.0, %v2156
      %2158 = vdwg.mxu0
      %2159 = vmatprep.subr.mxu0 %v1944
      %2160 = vmatpush1.msra.mxu0 %v1942
      %2161 = vmatprep.subr.mxu0 0.0
      %2162 = vmatpush1.msra.mxu0 0.0
      %2163 = vmatprep.subr.mxu0 0.0
      %2164 = vmatpush1.msra.mxu0 0.0
      %2165 = vmatprep.subr.mxu0 0.0
      %2166 = vmatpush1.msra.mxu0 0.0
      %2167 = vmatprep.subr.mxu0 0.0
      %2168 = vmatpush1.msra.mxu0 0.0
      %2169 = vmatprep.subr.mxu0 0.0
      %2170 = vmatpush1.msra.mxu0 0.0
      %2171 = vmatprep.subr.mxu0 0.0
      %2172 = vmatpush1.msra.mxu0 0.0
      %2173 = vmatprep.subr.mxu0 0.0
      %2174 = vmatpush1.msra.mxu0 0.0
      %2175 = vmatprep.subr.mxu0 0.0
      %2176 = vmatpush1.msra.mxu0 0.0
      %2177 = vmatprep.subr.mxu0 0.0
      %2178 = vmatpush1.msra.mxu0 0.0
      %2179 = vmatprep.subr.mxu0 0.0
      %2180 = vmatpush1.msra.mxu0 0.0
      %2181 = vmatprep.subr.mxu0 0.0
      %2182 = vmatpush1.msra.mxu0 0.0
      %2183 = vmatprep.subr.mxu0 0.0
      %2184 = vmatpush1.msra.mxu0 0.0
      %2185 = vmatprep.subr.mxu0 0.0
      %2186 = vmatpush1.msra.mxu0 0.0
      %2187 = vmatprep.subr.mxu0 0.0
      %2188 = vmatpush1.msra.mxu0 0.0
      %2189 = vmatprep.subr.mxu0 0.0
      %2190 = vmatpush1.msra.mxu0 0.0
      %2191 = vmatprep.subr.mxu0 0.0
      %2192 = vmatpush1.msra.mxu0 0.0
      %2193 = vmatprep.subr.mxu0 0.0
      %2194 = vmatpush1.msra.mxu0 0.0
      %2195 = vmatprep.subr.mxu0 0.0
      %2196 = vmatpush1.msra.mxu0 0.0
      %2197 = vmatprep.subr.mxu0 0.0
      %2198 = vmatpush1.msra.mxu0 0.0
      %2199 = vmatprep.subr.mxu0 0.0
      %2200 = vmatpush1.msra.mxu0 0.0
      %2201 = vmatprep.subr.mxu0 0.0
      %2202 = vmatpush1.msra.mxu0 0.0
      %2203 = vmatprep.subr.mxu0 0.0
      %2204 = vmatpush1.msra.mxu0 0.0
      %2205 = vmatprep.subr.mxu0 0.0
      %2206 = vmatpush1.msra.mxu0 0.0
      %2207 = vmatprep.subr.mxu0 0.0
      %2208 = vmatpush1.msra.mxu0 0.0
      %2209 = vmatprep.subr.mxu0 0.0
      %2210 = vmatpush1.msra.mxu0 0.0
      %2211 = vmatprep.subr.mxu0 0.0
      %2212 = vmatpush1.msra.mxu0 0.0
      %2213 = vmatprep.subr.mxu0 0.0
      %2214 = vmatpush1.msra.mxu0 0.0
      %2215 = vmatprep.subr.mxu0 0.0
      %2216 = vmatpush1.msra.mxu0 0.0
      %2217 = vmatprep.subr.mxu0 0.0
      %2218 = vmatpush1.msra.mxu0 0.0
      %2219 = vmatprep.subr.mxu0 0.0
      %2220 = vmatpush1.msra.mxu0 0.0
      %2221 = vmatprep.subr.mxu0 0.0
      %2222 = vmatpush1.msra.mxu0 0.0
      %2223 = vmatprep.mubr.f32.mxu0 0.0
      %2224 = vmatmul.mubr.f32.gmra.mrb[0].mxu0 %v1928
      %v2225 = vpop.f32.mrb[0].mxu0
      %v2226 = vadd.f32 0.0, %v2225
      %v2227 = vpop.f32.mrb[0].mxu0
      %v2228 = vadd.f32 0.0, %v2227
      %2229 = vdwg.mxu0
      %v2230 = vadd.f32 %v1876, %v2013
      %v2231 = vadd.f32 %v1877, %v2015
      %v2232 = vadd.f32 %v1878, %v2084
      %v2233 = vadd.f32 %v1879, %v2086
      %v2234 = vadd.f32 %v1880, %v2155
      %v2235 = vadd.f32 %v1881, %v2157
      %v2236 = vadd.f32 %v1882, %v2226
      %v2237 = vadd.f32 %v1883, %v2228
      %v2238 = vld [vmem:[%s165 + $0x4] sm:$0x77]
      %v2239 = vld [vmem:[%s165 + $0xc] sm:$0x77]
      %v2240 = vld [vmem:[%s165 + $0x14] sm:$0x77]
      %v2241 = vld [vmem:[%s165 + $0x1c] sm:$0x77]
      %v2242 = vld [vmem:[%s165 + $0x24] sm:$0x7]
      %s2243 = scalar_lea.vmem %s1, 48
      %v2244 = vld [vmem:[%s2243] sm:$0xff]
      %v2250 = vcombine.high %v2238, %v2238
      %v2251 = vcombine.high %v2239, %v2239
      %v2252 = vcombine.high %v2240, %v2240
      %v2253 = vcombine.high %v2241, %v2241
      %2254 = vrot.lane.b32.xlu0 %v2238, 63
      %v2255 = vpop.permute.xlu0 %2254
      %2256 = vrot.lane.b32.xlu0 %v2250, 63
      %v2257 = vpop.permute.xlu0 %2256
      %2258 = vrot.lane.b32.xlu0 %v2239, 63
      %v2259 = vpop.permute.xlu0 %2258
      %2260 = vrot.lane.b32.xlu0 %v2251, 63
      %v2261 = vpop.permute.xlu0 %2260
      %2262 = vrot.lane.b32.xlu0 %v2240, 63
      %v2263 = vpop.permute.xlu0 %2262
      %2264 = vrot.lane.b32.xlu0 %v2252, 63
      %v2265 = vpop.permute.xlu0 %2264
      %2266 = vrot.lane.b32.xlu0 %v2241, 63
      %v2267 = vpop.permute.xlu0 %2266
      %2268 = vrot.lane.b32.xlu0 %v2253, 63
      %v2269 = vpop.permute.xlu0 %2268
      %2270 = vrot.lane.b32.xlu0 %v2242, 63
      %v2271 = vpop.permute.xlu0 %2270
      %vm2272 = vcmask 515072
      %v2273 = vsel %vm2272, %v2255, %v2257
      %v2274 = vsel %vm2272, %v2257, %v2259
      %v2275 = vsel %vm2272, %v2259, %v2261
      %v2276 = vsel %vm2272, %v2261, %v2263
      %v2277 = vsel %vm2272, %v2263, %v2265
      %v2278 = vsel %vm2272, %v2265, %v2267
      %v2279 = vsel %vm2272, %v2267, %v2269
      %v2280 = vsel %vm2272, %v2269, %v2271
      %v2282 = vsel %vm216, %v2244, 0
      %v2284 = vsel %vm220, %v2273, 0
      %v2286 = vsel %vm220, %v2274, 0
      %v2288 = vsel %vm220, %v2275, 0
      %v2290 = vsel %vm220, %v2276, 0
      %v2292 = vsel %vm220, %v2277, 0
      %v2294 = vsel %vm220, %v2278, 0
      %v2296 = vsel %vm220, %v2279, 0
      %v2298 = vsel %vm220, %v2280, 0
      %2300 = vmatprep.subr.mxu0 %v2286
      %2301 = vmatpush1.msra.mxu0 %v2284
      %2302 = vmatprep.subr.mxu0 0.0
      %2303 = vmatpush1.msra.mxu0 0.0
      %2304 = vmatprep.subr.mxu0 0.0
      %2305 = vmatpush1.msra.mxu0 0.0
      %2306 = vmatprep.subr.mxu0 0.0
      %2307 = vmatpush1.msra.mxu0 0.0
      %2308 = vmatprep.subr.mxu0 0.0
      %2309 = vmatpush1.msra.mxu0 0.0
      %2310 = vmatprep.subr.mxu0 0.0
      %2311 = vmatpush1.msra.mxu0 0.0
      %2312 = vmatprep.subr.mxu0 0.0
      %2313 = vmatpush1.msra.mxu0 0.0
      %2314 = vmatprep.subr.mxu0 0.0
      %2315 = vmatpush1.msra.mxu0 0.0
      %2316 = vmatprep.subr.mxu0 0.0
      %2317 = vmatpush1.msra.mxu0 0.0
      %2318 = vmatprep.subr.mxu0 0.0
      %2319 = vmatpush1.msra.mxu0 0.0
      %2320 = vmatprep.subr.mxu0 0.0
      %2321 = vmatpush1.msra.mxu0 0.0
      %2322 = vmatprep.subr.mxu0 0.0
      %2323 = vmatpush1.msra.mxu0 0.0
      %2324 = vmatprep.subr.mxu0 0.0
      %2325 = vmatpush1.msra.mxu0 0.0
      %2326 = vmatprep.subr.mxu0 0.0
      %2327 = vmatpush1.msra.mxu0 0.0
      %2328 = vmatprep.subr.mxu0 0.0
      %2329 = vmatpush1.msra.mxu0 0.0
      %2330 = vmatprep.subr.mxu0 0.0
      %2331 = vmatpush1.msra.mxu0 0.0
      %2332 = vmatprep.subr.mxu0 0.0
      %2333 = vmatpush1.msra.mxu0 0.0
      %2334 = vmatprep.subr.mxu0 0.0
      %2335 = vmatpush1.msra.mxu0 0.0
      %2336 = vmatprep.subr.mxu0 0.0
      %2337 = vmatpush1.msra.mxu0 0.0
      %2338 = vmatprep.subr.mxu0 0.0
      %2339 = vmatpush1.msra.mxu0 0.0
      %2340 = vmatprep.subr.mxu0 0.0
      %2341 = vmatpush1.msra.mxu0 0.0
      %2342 = vmatprep.subr.mxu0 0.0
      %2343 = vmatpush1.msra.mxu0 0.0
      %2344 = vmatprep.subr.mxu0 0.0
      %2345 = vmatpush1.msra.mxu0 0.0
      %2346 = vmatprep.subr.mxu0 0.0
      %2347 = vmatpush1.msra.mxu0 0.0
      %2348 = vmatprep.subr.mxu0 0.0
      %2349 = vmatpush1.msra.mxu0 0.0
      %2350 = vmatprep.subr.mxu0 0.0
      %2351 = vmatpush1.msra.mxu0 0.0
      %2352 = vmatprep.subr.mxu0 0.0
      %2353 = vmatpush1.msra.mxu0 0.0
      %2354 = vmatprep.subr.mxu0 0.0
      %2355 = vmatpush1.msra.mxu0 0.0
      %2356 = vmatprep.subr.mxu0 0.0
      %2357 = vmatpush1.msra.mxu0 0.0
      %2358 = vmatprep.subr.mxu0 0.0
      %2359 = vmatpush1.msra.mxu0 0.0
      %2360 = vmatprep.subr.mxu0 0.0
      %2361 = vmatpush1.msra.mxu0 0.0
      %2362 = vmatprep.subr.mxu0 0.0
      %2363 = vmatpush1.msra.mxu0 0.0
      %2364 = vmatprep.mubr.f32.mxu0 0.0
      %2365 = vmatmul.mubr.f32.gmra.mrb[0].mxu0 %v2282
      %v2366 = vpop.f32.mrb[0].mxu0
      %v2367 = vadd.f32 0.0, %v2366
      %v2368 = vpop.f32.mrb[0].mxu0
      %v2369 = vadd.f32 0.0, %v2368
      %2370 = vdwg.mxu0
      %2371 = vmatprep.subr.mxu0 %v2290
      %2372 = vmatpush1.msra.mxu0 %v2288
      %2373 = vmatprep.subr.mxu0 0.0
      %2374 = vmatpush1.msra.mxu0 0.0
      %2375 = vmatprep.subr.mxu0 0.0
      %2376 = vmatpush1.msra.mxu0 0.0
      %2377 = vmatprep.subr.mxu0 0.0
      %2378 = vmatpush1.msra.mxu0 0.0
      %2379 = vmatprep.subr.mxu0 0.0
      %2380 = vmatpush1.msra.mxu0 0.0
      %2381 = vmatprep.subr.mxu0 0.0
      %2382 = vmatpush1.msra.mxu0 0.0
      %2383 = vmatprep.subr.mxu0 0.0
      %2384 = vmatpush1.msra.mxu0 0.0
      %2385 = vmatprep.subr.mxu0 0.0
      %2386 = vmatpush1.msra.mxu0 0.0
      %2387 = vmatprep.subr.mxu0 0.0
      %2388 = vmatpush1.msra.mxu0 0.0
      %2389 = vmatprep.subr.mxu0 0.0
      %2390 = vmatpush1.msra.mxu0 0.0
      %2391 = vmatprep.subr.mxu0 0.0
      %2392 = vmatpush1.msra.mxu0 0.0
      %2393 = vmatprep.subr.mxu0 0.0
      %2394 = vmatpush1.msra.mxu0 0.0
      %2395 = vmatprep.subr.mxu0 0.0
      %2396 = vmatpush1.msra.mxu0 0.0
      %2397 = vmatprep.subr.mxu0 0.0
      %2398 = vmatpush1.msra.mxu0 0.0
      %2399 = vmatprep.subr.mxu0 0.0
      %2400 = vmatpush1.msra.mxu0 0.0
      %2401 = vmatprep.subr.mxu0 0.0
      %2402 = vmatpush1.msra.mxu0 0.0
      %2403 = vmatprep.subr.mxu0 0.0
      %2404 = vmatpush1.msra.mxu0 0.0
      %2405 = vmatprep.subr.mxu0 0.0
      %2406 = vmatpush1.msra.mxu0 0.0
      %2407 = vmatprep.subr.mxu0 0.0
      %2408 = vmatpush1.msra.mxu0 0.0
      %2409 = vmatprep.subr.mxu0 0.0
      %2410 = vmatpush1.msra.mxu0 0.0
      %2411 = vmatprep.subr.mxu0 0.0
      %2412 = vmatpush1.msra.mxu0 0.0
      %2413 = vmatprep.subr.mxu0 0.0
      %2414 = vmatpush1.msra.mxu0 0.0
      %2415 = vmatprep.subr.mxu0 0.0
      %2416 = vmatpush1.msra.mxu0 0.0
      %2417 = vmatprep.subr.mxu0 0.0
      %2418 = vmatpush1.msra.mxu0 0.0
      %2419 = vmatprep.subr.mxu0 0.0
      %2420 = vmatpush1.msra.mxu0 0.0
      %2421 = vmatprep.subr.mxu0 0.0
      %2422 = vmatpush1.msra.mxu0 0.0
      %2423 = vmatprep.subr.mxu0 0.0
      %2424 = vmatpush1.msra.mxu0 0.0
      %2425 = vmatprep.subr.mxu0 0.0
      %2426 = vmatpush1.msra.mxu0 0.0
      %2427 = vmatprep.subr.mxu0 0.0
      %2428 = vmatpush1.msra.mxu0 0.0
      %2429 = vmatprep.subr.mxu0 0.0
      %2430 = vmatpush1.msra.mxu0 0.0
      %2431 = vmatprep.subr.mxu0 0.0
      %2432 = vmatpush1.msra.mxu0 0.0
      %2433 = vmatprep.subr.mxu0 0.0
      %2434 = vmatpush1.msra.mxu0 0.0
      %2435 = vmatprep.mubr.f32.mxu0 0.0
      %2436 = vmatmul.mubr.f32.gmra.mrb[0].mxu0 %v2282
      %v2437 = vpop.f32.mrb[0].mxu0
      %v2438 = vadd.f32 0.0, %v2437
      %v2439 = vpop.f32.mrb[0].mxu0
      %v2440 = vadd.f32 0.0, %v2439
      %2441 = vdwg.mxu0
      %2442 = vmatprep.subr.mxu0 %v2294
      %2443 = vmatpush1.msra.mxu0 %v2292
      %2444 = vmatprep.subr.mxu0 0.0
      %2445 = vmatpush1.msra.mxu0 0.0
      %2446 = vmatprep.subr.mxu0 0.0
      %2447 = vmatpush1.msra.mxu0 0.0
      %2448 = vmatprep.subr.mxu0 0.0
      %2449 = vmatpush1.msra.mxu0 0.0
      %2450 = vmatprep.subr.mxu0 0.0
      %2451 = vmatpush1.msra.mxu0 0.0
      %2452 = vmatprep.subr.mxu0 0.0
      %2453 = vmatpush1.msra.mxu0 0.0
      %2454 = vmatprep.subr.mxu0 0.0
      %2455 = vmatpush1.msra.mxu0 0.0
      %2456 = vmatprep.subr.mxu0 0.0
      %2457 = vmatpush1.msra.mxu0 0.0
      %2458 = vmatprep.subr.mxu0 0.0
      %2459 = vmatpush1.msra.mxu0 0.0
      %2460 = vmatprep.subr.mxu0 0.0
      %2461 = vmatpush1.msra.mxu0 0.0
      %2462 = vmatprep.subr.mxu0 0.0
      %2463 = vmatpush1.msra.mxu0 0.0
      %2464 = vmatprep.subr.mxu0 0.0
      %2465 = vmatpush1.msra.mxu0 0.0
      %2466 = vmatprep.subr.mxu0 0.0
      %2467 = vmatpush1.msra.mxu0 0.0
      %2468 = vmatprep.subr.mxu0 0.0
      %2469 = vmatpush1.msra.mxu0 0.0
      %2470 = vmatprep.subr.mxu0 0.0
      %2471 = vmatpush1.msra.mxu0 0.0
      %2472 = vmatprep.subr.mxu0 0.0
      %2473 = vmatpush1.msra.mxu0 0.0
      %2474 = vmatprep.subr.mxu0 0.0
      %2475 = vmatpush1.msra.mxu0 0.0
      %2476 = vmatprep.subr.mxu0 0.0
      %2477 = vmatpush1.msra.mxu0 0.0
      %2478 = vmatprep.subr.mxu0 0.0
      %2479 = vmatpush1.msra.mxu0 0.0
      %2480 = vmatprep.subr.mxu0 0.0
      %2481 = vmatpush1.msra.mxu0 0.0
      %2482 = vmatprep.subr.mxu0 0.0
      %2483 = vmatpush1.msra.mxu0 0.0
      %2484 = vmatprep.subr.mxu0 0.0
      %2485 = vmatpush1.msra.mxu0 0.0
      %2486 = vmatprep.subr.mxu0 0.0
      %2487 = vmatpush1.msra.mxu0 0.0
      %2488 = vmatprep.subr.mxu0 0.0
      %2489 = vmatpush1.msra.mxu0 0.0
      %2490 = vmatprep.subr.mxu0 0.0
      %2491 = vmatpush1.msra.mxu0 0.0
      %2492 = vmatprep.subr.mxu0 0.0
      %2493 = vmatpush1.msra.mxu0 0.0
      %2494 = vmatprep.subr.mxu0 0.0
      %2495 = vmatpush1.msra.mxu0 0.0
      %2496 = vmatprep.subr.mxu0 0.0
      %2497 = vmatpush1.msra.mxu0 0.0
      %2498 = vmatprep.subr.mxu0 0.0
      %2499 = vmatpush1.msra.mxu0 0.0
      %2500 = vmatprep.subr.mxu0 0.0
      %2501 = vmatpush1.msra.mxu0 0.0
      %2502 = vmatprep.subr.mxu0 0.0
      %2503 = vmatpush1.msra.mxu0 0.0
      %2504 = vmatprep.subr.mxu0 0.0
      %2505 = vmatpush1.msra.mxu0 0.0
      %2506 = vmatprep.mubr.f32.mxu0 0.0
      %2507 = vmatmul.mubr.f32.gmra.mrb[0].mxu0 %v2282
      %v2508 = vpop.f32.mrb[0].mxu0
      %v2509 = vadd.f32 0.0, %v2508
      %v2510 = vpop.f32.mrb[0].mxu0
      %v2511 = vadd.f32 0.0, %v2510
      %2512 = vdwg.mxu0
      %2513 = vmatprep.subr.mxu0 %v2298
      %2514 = vmatpush1.msra.mxu0 %v2296
      %2515 = vmatprep.subr.mxu0 0.0
      %2516 = vmatpush1.msra.mxu0 0.0
      %2517 = vmatprep.subr.mxu0 0.0
      %2518 = vmatpush1.msra.mxu0 0.0
      %2519 = vmatprep.subr.mxu0 0.0
      %2520 = vmatpush1.msra.mxu0 0.0
      %2521 = vmatprep.subr.mxu0 0.0
      %2522 = vmatpush1.msra.mxu0 0.0
      %2523 = vmatprep.subr.mxu0 0.0
      %2524 = vmatpush1.msra.mxu0 0.0
      %2525 = vmatprep.subr.mxu0 0.0
      %2526 = vmatpush1.msra.mxu0 0.0
      %2527 = vmatprep.subr.mxu0 0.0
      %2528 = vmatpush1.msra.mxu0 0.0
      %2529 = vmatprep.subr.mxu0 0.0
      %2530 = vmatpush1.msra.mxu0 0.0
      %2531 = vmatprep.subr.mxu0 0.0
      %2532 = vmatpush1.msra.mxu0 0.0
      %2533 = vmatprep.subr.mxu0 0.0
      %2534 = vmatpush1.msra.mxu0 0.0
      %2535 = vmatprep.subr.mxu0 0.0
      %2536 = vmatpush1.msra.mxu0 0.0
      %2537 = vmatprep.subr.mxu0 0.0
      %2538 = vmatpush1.msra.mxu0 0.0
      %2539 = vmatprep.subr.mxu0 0.0
      %2540 = vmatpush1.msra.mxu0 0.0
      %2541 = vmatprep.subr.mxu0 0.0
      %2542 = vmatpush1.msra.mxu0 0.0
      %2543 = vmatprep.subr.mxu0 0.0
      %2544 = vmatpush1.msra.mxu0 0.0
      %2545 = vmatprep.subr.mxu0 0.0
      %2546 = vmatpush1.msra.mxu0 0.0
      %2547 = vmatprep.subr.mxu0 0.0
      %2548 = vmatpush1.msra.mxu0 0.0
      %2549 = vmatprep.subr.mxu0 0.0
      %2550 = vmatpush1.msra.mxu0 0.0
      %2551 = vmatprep.subr.mxu0 0.0
      %2552 = vmatpush1.msra.mxu0 0.0
      %2553 = vmatprep.subr.mxu0 0.0
      %2554 = vmatpush1.msra.mxu0 0.0
      %2555 = vmatprep.subr.mxu0 0.0
      %2556 = vmatpush1.msra.mxu0 0.0
      %2557 = vmatprep.subr.mxu0 0.0
      %2558 = vmatpush1.msra.mxu0 0.0
      %2559 = vmatprep.subr.mxu0 0.0
      %2560 = vmatpush1.msra.mxu0 0.0
      %2561 = vmatprep.subr.mxu0 0.0
      %2562 = vmatpush1.msra.mxu0 0.0
      %2563 = vmatprep.subr.mxu0 0.0
      %2564 = vmatpush1.msra.mxu0 0.0
      %2565 = vmatprep.subr.mxu0 0.0
      %2566 = vmatpush1.msra.mxu0 0.0
      %2567 = vmatprep.subr.mxu0 0.0
      %2568 = vmatpush1.msra.mxu0 0.0
      %2569 = vmatprep.subr.mxu0 0.0
      %2570 = vmatpush1.msra.mxu0 0.0
      %2571 = vmatprep.subr.mxu0 0.0
      %2572 = vmatpush1.msra.mxu0 0.0
      %2573 = vmatprep.subr.mxu0 0.0
      %2574 = vmatpush1.msra.mxu0 0.0
      %2575 = vmatprep.subr.mxu0 0.0
      %2576 = vmatpush1.msra.mxu0 0.0
      %2577 = vmatprep.mubr.f32.mxu0 0.0
      %2578 = vmatmul.mubr.f32.gmra.mrb[0].mxu0 %v2282
      %v2579 = vpop.f32.mrb[0].mxu0
      %v2580 = vadd.f32 0.0, %v2579
      %v2581 = vpop.f32.mrb[0].mxu0
      %v2582 = vadd.f32 0.0, %v2581
      %2583 = vdwg.mxu0
      %v2584 = vadd.f32 %v2230, %v2367
      %v2585 = vadd.f32 %v2231, %v2369
      %v2586 = vadd.f32 %v2232, %v2438
      %v2587 = vadd.f32 %v2233, %v2440
      %v2588 = vadd.f32 %v2234, %v2509
      %v2589 = vadd.f32 %v2235, %v2511
      %v2590 = vadd.f32 %v2236, %v2580
      %v2591 = vadd.f32 %v2237, %v2582
      %v2592 = vld [vmem:[%s165 + $0x4] sm:$0x77]
      %v2593 = vld [vmem:[%s165 + $0xc] sm:$0x77]
      %v2594 = vld [vmem:[%s165 + $0x14] sm:$0x77]
      %v2595 = vld [vmem:[%s165 + $0x1c] sm:$0x77]
      %v2596 = vld [vmem:[%s165 + $0x24] sm:$0x7]
      %s2597 = scalar_lea.vmem %s1, 56
      %v2598 = vld [vmem:[%s2597] sm:$0xff]
      %v2604 = vcombine.high %v2592, %v2592
      %v2605 = vcombine.high %v2593, %v2593
      %v2606 = vcombine.high %v2594, %v2594
      %v2607 = vcombine.high %v2595, %v2595
      %2608 = vrot.lane.b32.xlu0 %v2592, 62
      %v2609 = vpop.permute.xlu0 %2608
      %2610 = vrot.lane.b32.xlu0 %v2604, 62
      %v2611 = vpop.permute.xlu0 %2610
      %2612 = vrot.lane.b32.xlu0 %v2593, 62
      %v2613 = vpop.permute.xlu0 %2612
      %2614 = vrot.lane.b32.xlu0 %v2605, 62
      %v2615 = vpop.permute.xlu0 %2614
      %2616 = vrot.lane.b32.xlu0 %v2594, 62
      %v2617 = vpop.permute.xlu0 %2616
      %2618 = vrot.lane.b32.xlu0 %v2606, 62
      %v2619 = vpop.permute.xlu0 %2618
      %2620 = vrot.lane.b32.xlu0 %v2595, 62
      %v2621 = vpop.permute.xlu0 %2620
      %2622 = vrot.lane.b32.xlu0 %v2607, 62
      %v2623 = vpop.permute.xlu0 %2622
      %2624 = vrot.lane.b32.xlu0 %v2596, 62
      %v2625 = vpop.permute.xlu0 %2624
      %vm2626 = vcmask 506880
      %v2627 = vsel %vm2626, %v2609, %v2611
      %v2628 = vsel %vm2626, %v2611, %v2613
      %v2629 = vsel %vm2626, %v2613, %v2615
      %v2630 = vsel %vm2626, %v2615, %v2617
      %v2631 = vsel %vm2626, %v2617, %v2619
      %v2632 = vsel %vm2626, %v2619, %v2621
      %v2633 = vsel %vm2626, %v2621, %v2623
      %v2634 = vsel %vm2626, %v2623, %v2625
      %v2636 = vsel %vm216, %v2598, 0
      %v2638 = vsel %vm220, %v2627, 0
      %v2640 = vsel %vm220, %v2628, 0
      %v2642 = vsel %vm220, %v2629, 0
      %v2644 = vsel %vm220, %v2630, 0
      %v2646 = vsel %vm220, %v2631, 0
      %v2648 = vsel %vm220, %v2632, 0
      %v2650 = vsel %vm220, %v2633, 0
      %v2652 = vsel %vm220, %v2634, 0
      %2654 = vmatprep.subr.mxu0 %v2640
      %2655 = vmatpush1.msra.mxu0 %v2638
      %2656 = vmatprep.subr.mxu0 0.0
      %2657 = vmatpush1.msra.mxu0 0.0
      %2658 = vmatprep.subr.mxu0 0.0
      %2659 = vmatpush1.msra.mxu0 0.0
      %2660 = vmatprep.subr.mxu0 0.0
      %2661 = vmatpush1.msra.mxu0 0.0
      %2662 = vmatprep.subr.mxu0 0.0
      %2663 = vmatpush1.msra.mxu0 0.0
      %2664 = vmatprep.subr.mxu0 0.0
      %2665 = vmatpush1.msra.mxu0 0.0
      %2666 = vmatprep.subr.mxu0 0.0
      %2667 = vmatpush1.msra.mxu0 0.0
      %2668 = vmatprep.subr.mxu0 0.0
      %2669 = vmatpush1.msra.mxu0 0.0
      %2670 = vmatprep.subr.mxu0 0.0
      %2671 = vmatpush1.msra.mxu0 0.0
      %2672 = vmatprep.subr.mxu0 0.0
      %2673 = vmatpush1.msra.mxu0 0.0
      %2674 = vmatprep.subr.mxu0 0.0
      %2675 = vmatpush1.msra.mxu0 0.0
      %2676 = vmatprep.subr.mxu0 0.0
      %2677 = vmatpush1.msra.mxu0 0.0
      %2678 = vmatprep.subr.mxu0 0.0
      %2679 = vmatpush1.msra.mxu0 0.0
      %2680 = vmatprep.subr.mxu0 0.0
      %2681 = vmatpush1.msra.mxu0 0.0
      %2682 = vmatprep.subr.mxu0 0.0
      %2683 = vmatpush1.msra.mxu0 0.0
      %2684 = vmatprep.subr.mxu0 0.0
      %2685 = vmatpush1.msra.mxu0 0.0
      %2686 = vmatprep.subr.mxu0 0.0
      %2687 = vmatpush1.msra.mxu0 0.0
      %2688 = vmatprep.subr.mxu0 0.0
      %2689 = vmatpush1.msra.mxu0 0.0
      %2690 = vmatprep.subr.mxu0 0.0
      %2691 = vmatpush1.msra.mxu0 0.0
      %2692 = vmatprep.subr.mxu0 0.0
      %2693 = vmatpush1.msra.mxu0 0.0
      %2694 = vmatprep.subr.mxu0 0.0
      %2695 = vmatpush1.msra.mxu0 0.0
      %2696 = vmatprep.subr.mxu0 0.0
      %2697 = vmatpush1.msra.mxu0 0.0
      %2698 = vmatprep.subr.mxu0 0.0
      %2699 = vmatpush1.msra.mxu0 0.0
      %2700 = vmatprep.subr.mxu0 0.0
      %2701 = vmatpush1.msra.mxu0 0.0
      %2702 = vmatprep.subr.mxu0 0.0
      %2703 = vmatpush1.msra.mxu0 0.0
      %2704 = vmatprep.subr.mxu0 0.0
      %2705 = vmatpush1.msra.mxu0 0.0
      %2706 = vmatprep.subr.mxu0 0.0
      %2707 = vmatpush1.msra.mxu0 0.0
      %2708 = vmatprep.subr.mxu0 0.0
      %2709 = vmatpush1.msra.mxu0 0.0
      %2710 = vmatprep.subr.mxu0 0.0
      %2711 = vmatpush1.msra.mxu0 0.0
      %2712 = vmatprep.subr.mxu0 0.0
      %2713 = vmatpush1.msra.mxu0 0.0
      %2714 = vmatprep.subr.mxu0 0.0
      %2715 = vmatpush1.msra.mxu0 0.0
      %2716 = vmatprep.subr.mxu0 0.0
      %2717 = vmatpush1.msra.mxu0 0.0
      %2718 = vmatprep.mubr.f32.mxu0 0.0
      %2719 = vmatmul.mubr.f32.gmra.mrb[0].mxu0 %v2636
      %v2720 = vpop.f32.mrb[0].mxu0
      %v2721 = vadd.f32 0.0, %v2720
      %v2722 = vpop.f32.mrb[0].mxu0
      %v2723 = vadd.f32 0.0, %v2722
      %2724 = vdwg.mxu0
      %2725 = vmatprep.subr.mxu0 %v2644
      %2726 = vmatpush1.msra.mxu0 %v2642
      %2727 = vmatprep.subr.mxu0 0.0
      %2728 = vmatpush1.msra.mxu0 0.0
      %2729 = vmatprep.subr.mxu0 0.0
      %2730 = vmatpush1.msra.mxu0 0.0
      %2731 = vmatprep.subr.mxu0 0.0
      %2732 = vmatpush1.msra.mxu0 0.0
      %2733 = vmatprep.subr.mxu0 0.0
      %2734 = vmatpush1.msra.mxu0 0.0
      %2735 = vmatprep.subr.mxu0 0.0
      %2736 = vmatpush1.msra.mxu0 0.0
      %2737 = vmatprep.subr.mxu0 0.0
      %2738 = vmatpush1.msra.mxu0 0.0
      %2739 = vmatprep.subr.mxu0 0.0
      %2740 = vmatpush1.msra.mxu0 0.0
      %2741 = vmatprep.subr.mxu0 0.0
      %2742 = vmatpush1.msra.mxu0 0.0
      %2743 = vmatprep.subr.mxu0 0.0
      %2744 = vmatpush1.msra.mxu0 0.0
      %2745 = vmatprep.subr.mxu0 0.0
      %2746 = vmatpush1.msra.mxu0 0.0
      %2747 = vmatprep.subr.mxu0 0.0
      %2748 = vmatpush1.msra.mxu0 0.0
      %2749 = vmatprep.subr.mxu0 0.0
      %2750 = vmatpush1.msra.mxu0 0.0
      %2751 = vmatprep.subr.mxu0 0.0
      %2752 = vmatpush1.msra.mxu0 0.0
      %2753 = vmatprep.subr.mxu0 0.0
      %2754 = vmatpush1.msra.mxu0 0.0
      %2755 = vmatprep.subr.mxu0 0.0
      %2756 = vmatpush1.msra.mxu0 0.0
      %2757 = vmatprep.subr.mxu0 0.0
      %2758 = vmatpush1.msra.mxu0 0.0
      %2759 = vmatprep.subr.mxu0 0.0
      %2760 = vmatpush1.msra.mxu0 0.0
      %2761 = vmatprep.subr.mxu0 0.0
      %2762 = vmatpush1.msra.mxu0 0.0
      %2763 = vmatprep.subr.mxu0 0.0
      %2764 = vmatpush1.msra.mxu0 0.0
      %2765 = vmatprep.subr.mxu0 0.0
      %2766 = vmatpush1.msra.mxu0 0.0
      %2767 = vmatprep.subr.mxu0 0.0
      %2768 = vmatpush1.msra.mxu0 0.0
      %2769 = vmatprep.subr.mxu0 0.0
      %2770 = vmatpush1.msra.mxu0 0.0
      %2771 = vmatprep.subr.mxu0 0.0
      %2772 = vmatpush1.msra.mxu0 0.0
      %2773 = vmatprep.subr.mxu0 0.0
      %2774 = vmatpush1.msra.mxu0 0.0
      %2775 = vmatprep.subr.mxu0 0.0
      %2776 = vmatpush1.msra.mxu0 0.0
      %2777 = vmatprep.subr.mxu0 0.0
      %2778 = vmatpush1.msra.mxu0 0.0
      %2779 = vmatprep.subr.mxu0 0.0
      %2780 = vmatpush1.msra.mxu0 0.0
      %2781 = vmatprep.subr.mxu0 0.0
      %2782 = vmatpush1.msra.mxu0 0.0
      %2783 = vmatprep.subr.mxu0 0.0
      %2784 = vmatpush1.msra.mxu0 0.0
      %2785 = vmatprep.subr.mxu0 0.0
      %2786 = vmatpush1.msra.mxu0 0.0
      %2787 = vmatprep.subr.mxu0 0.0
      %2788 = vmatpush1.msra.mxu0 0.0
      %2789 = vmatprep.mubr.f32.mxu0 0.0
      %2790 = vmatmul.mubr.f32.gmra.mrb[0].mxu0 %v2636
      %v2791 = vpop.f32.mrb[0].mxu0
      %v2792 = vadd.f32 0.0, %v2791
      %v2793 = vpop.f32.mrb[0].mxu0
      %v2794 = vadd.f32 0.0, %v2793
      %2795 = vdwg.mxu0
      %2796 = vmatprep.subr.mxu0 %v2648
      %2797 = vmatpush1.msra.mxu0 %v2646
      %2798 = vmatprep.subr.mxu0 0.0
      %2799 = vmatpush1.msra.mxu0 0.0
      %2800 = vmatprep.subr.mxu0 0.0
      %2801 = vmatpush1.msra.mxu0 0.0
      %2802 = vmatprep.subr.mxu0 0.0
      %2803 = vmatpush1.msra.mxu0 0.0
      %2804 = vmatprep.subr.mxu0 0.0
      %2805 = vmatpush1.msra.mxu0 0.0
      %2806 = vmatprep.subr.mxu0 0.0
      %2807 = vmatpush1.msra.mxu0 0.0
      %2808 = vmatprep.subr.mxu0 0.0
      %2809 = vmatpush1.msra.mxu0 0.0
      %2810 = vmatprep.subr.mxu0 0.0
      %2811 = vmatpush1.msra.mxu0 0.0
      %2812 = vmatprep.subr.mxu0 0.0
      %2813 = vmatpush1.msra.mxu0 0.0
      %2814 = vmatprep.subr.mxu0 0.0
      %2815 = vmatpush1.msra.mxu0 0.0
      %2816 = vmatprep.subr.mxu0 0.0
      %2817 = vmatpush1.msra.mxu0 0.0
      %2818 = vmatprep.subr.mxu0 0.0
      %2819 = vmatpush1.msra.mxu0 0.0
      %2820 = vmatprep.subr.mxu0 0.0
      %2821 = vmatpush1.msra.mxu0 0.0
      %2822 = vmatprep.subr.mxu0 0.0
      %2823 = vmatpush1.msra.mxu0 0.0
      %2824 = vmatprep.subr.mxu0 0.0
      %2825 = vmatpush1.msra.mxu0 0.0
      %2826 = vmatprep.subr.mxu0 0.0
      %2827 = vmatpush1.msra.mxu0 0.0
      %2828 = vmatprep.subr.mxu0 0.0
      %2829 = vmatpush1.msra.mxu0 0.0
      %2830 = vmatprep.subr.mxu0 0.0
      %2831 = vmatpush1.msra.mxu0 0.0
      %2832 = vmatprep.subr.mxu0 0.0
      %2833 = vmatpush1.msra.mxu0 0.0
      %2834 = vmatprep.subr.mxu0 0.0
      %2835 = vmatpush1.msra.mxu0 0.0
      %2836 = vmatprep.subr.mxu0 0.0
      %2837 = vmatpush1.msra.mxu0 0.0
      %2838 = vmatprep.subr.mxu0 0.0
      %2839 = vmatpush1.msra.mxu0 0.0
      %2840 = vmatprep.subr.mxu0 0.0
      %2841 = vmatpush1.msra.mxu0 0.0
      %2842 = vmatprep.subr.mxu0 0.0
      %2843 = vmatpush1.msra.mxu0 0.0
      %2844 = vmatprep.subr.mxu0 0.0
      %2845 = vmatpush1.msra.mxu0 0.0
      %2846 = vmatprep.subr.mxu0 0.0
      %2847 = vmatpush1.msra.mxu0 0.0
      %2848 = vmatprep.subr.mxu0 0.0
      %2849 = vmatpush1.msra.mxu0 0.0
      %2850 = vmatprep.subr.mxu0 0.0
      %2851 = vmatpush1.msra.mxu0 0.0
      %2852 = vmatprep.subr.mxu0 0.0
      %2853 = vmatpush1.msra.mxu0 0.0
      %2854 = vmatprep.subr.mxu0 0.0
      %2855 = vmatpush1.msra.mxu0 0.0
      %2856 = vmatprep.subr.mxu0 0.0
      %2857 = vmatpush1.msra.mxu0 0.0
      %2858 = vmatprep.subr.mxu0 0.0
      %2859 = vmatpush1.msra.mxu0 0.0
      %2860 = vmatprep.mubr.f32.mxu0 0.0
      %2861 = vmatmul.mubr.f32.gmra.mrb[0].mxu0 %v2636
      %v2862 = vpop.f32.mrb[0].mxu0
      %v2863 = vadd.f32 0.0, %v2862
      %v2864 = vpop.f32.mrb[0].mxu0
      %v2865 = vadd.f32 0.0, %v2864
      %2866 = vdwg.mxu0
      %2867 = vmatprep.subr.mxu0 %v2652
      %2868 = vmatpush1.msra.mxu0 %v2650
      %2869 = vmatprep.subr.mxu0 0.0
      %2870 = vmatpush1.msra.mxu0 0.0
      %2871 = vmatprep.subr.mxu0 0.0
      %2872 = vmatpush1.msra.mxu0 0.0
      %2873 = vmatprep.subr.mxu0 0.0
      %2874 = vmatpush1.msra.mxu0 0.0
      %2875 = vmatprep.subr.mxu0 0.0
      %2876 = vmatpush1.msra.mxu0 0.0
      %2877 = vmatprep.subr.mxu0 0.0
      %2878 = vmatpush1.msra.mxu0 0.0
      %2879 = vmatprep.subr.mxu0 0.0
      %2880 = vmatpush1.msra.mxu0 0.0
      %2881 = vmatprep.subr.mxu0 0.0
      %2882 = vmatpush1.msra.mxu0 0.0
      %2883 = vmatprep.subr.mxu0 0.0
      %2884 = vmatpush1.msra.mxu0 0.0
      %2885 = vmatprep.subr.mxu0 0.0
      %2886 = vmatpush1.msra.mxu0 0.0
      %2887 = vmatprep.subr.mxu0 0.0
      %2888 = vmatpush1.msra.mxu0 0.0
      %2889 = vmatprep.subr.mxu0 0.0
      %2890 = vmatpush1.msra.mxu0 0.0
      %2891 = vmatprep.subr.mxu0 0.0
      %2892 = vmatpush1.msra.mxu0 0.0
      %2893 = vmatprep.subr.mxu0 0.0
      %2894 = vmatpush1.msra.mxu0 0.0
      %2895 = vmatprep.subr.mxu0 0.0
      %2896 = vmatpush1.msra.mxu0 0.0
      %2897 = vmatprep.subr.mxu0 0.0
      %2898 = vmatpush1.msra.mxu0 0.0
      %2899 = vmatprep.subr.mxu0 0.0
      %2900 = vmatpush1.msra.mxu0 0.0
      %2901 = vmatprep.subr.mxu0 0.0
      %2902 = vmatpush1.msra.mxu0 0.0
      %2903 = vmatprep.subr.mxu0 0.0
      %2904 = vmatpush1.msra.mxu0 0.0
      %2905 = vmatprep.subr.mxu0 0.0
      %2906 = vmatpush1.msra.mxu0 0.0
      %2907 = vmatprep.subr.mxu0 0.0
      %2908 = vmatpush1.msra.mxu0 0.0
      %2909 = vmatprep.subr.mxu0 0.0
      %2910 = vmatpush1.msra.mxu0 0.0
      %2911 = vmatprep.subr.mxu0 0.0
      %2912 = vmatpush1.msra.mxu0 0.0
      %2913 = vmatprep.subr.mxu0 0.0
      %2914 = vmatpush1.msra.mxu0 0.0
      %2915 = vmatprep.subr.mxu0 0.0
      %2916 = vmatpush1.msra.mxu0 0.0
      %2917 = vmatprep.subr.mxu0 0.0
      %2918 = vmatpush1.msra.mxu0 0.0
      %2919 = vmatprep.subr.mxu0 0.0
      %2920 = vmatpush1.msra.mxu0 0.0
      %2921 = vmatprep.subr.mxu0 0.0
      %2922 = vmatpush1.msra.mxu0 0.0
      %2923 = vmatprep.subr.mxu0 0.0
      %2924 = vmatpush1.msra.mxu0 0.0
      %2925 = vmatprep.subr.mxu0 0.0
      %2926 = vmatpush1.msra.mxu0 0.0
      %2927 = vmatprep.subr.mxu0 0.0
      %2928 = vmatpush1.msra.mxu0 0.0
      %2929 = vmatprep.subr.mxu0 0.0
      %2930 = vmatpush1.msra.mxu0 0.0
      %2931 = vmatprep.mubr.f32.mxu0 0.0
      %2932 = vmatmul.mubr.f32.gmra.mrb[0].mxu0 %v2636
      %v2933 = vpop.f32.mrb[0].mxu0
      %v2934 = vadd.f32 0.0, %v2933
      %v2935 = vpop.f32.mrb[0].mxu0
      %v2936 = vadd.f32 0.0, %v2935
      %2937 = vdwg.mxu0
      %v2938 = vadd.f32 %v2584, %v2721
      %v2939 = vadd.f32 %v2585, %v2723
      %v2940 = vadd.f32 %v2586, %v2792
      %v2941 = vadd.f32 %v2587, %v2794
      %v2942 = vadd.f32 %v2588, %v2863
      %v2943 = vadd.f32 %v2589, %v2865
      %v2944 = vadd.f32 %v2590, %v2934
      %v2945 = vadd.f32 %v2591, %v2936
      %v2946 = vld [vmem:[%s165 + $0x4] sm:$0x77]
      %v2947 = vld [vmem:[%s165 + $0xc] sm:$0x77]
      %v2948 = vld [vmem:[%s165 + $0x14] sm:$0x77]
      %v2949 = vld [vmem:[%s165 + $0x1c] sm:$0x77]
      %v2950 = vld [vmem:[%s165 + $0x24] sm:$0x7]
      %s2951 = scalar_lea.vmem %s1, 64
      %v2952 = vld [vmem:[%s2951] sm:$0xff]
      %v2958 = vcombine.high %v2946, %v2946
      %v2959 = vcombine.high %v2947, %v2947
      %v2960 = vcombine.high %v2948, %v2948
      %v2961 = vcombine.high %v2949, %v2949
      %2962 = vrot.lane.b32.xlu0 %v2946, 61
      %v2963 = vpop.permute.xlu0 %2962
      %2964 = vrot.lane.b32.xlu0 %v2958, 61
      %v2965 = vpop.permute.xlu0 %2964
      %2966 = vrot.lane.b32.xlu0 %v2947, 61
      %v2967 = vpop.permute.xlu0 %2966
      %2968 = vrot.lane.b32.xlu0 %v2959, 61
      %v2969 = vpop.permute.xlu0 %2968
      %2970 = vrot.lane.b32.xlu0 %v2948, 61
      %v2971 = vpop.permute.xlu0 %2970
      %2972 = vrot.lane.b32.xlu0 %v2960, 61
      %v2973 = vpop.permute.xlu0 %2972
      %2974 = vrot.lane.b32.xlu0 %v2949, 61
      %v2975 = vpop.permute.xlu0 %2974
      %2976 = vrot.lane.b32.xlu0 %v2961, 61
      %v2977 = vpop.permute.xlu0 %2976
      %2978 = vrot.lane.b32.xlu0 %v2950, 61
      %v2979 = vpop.permute.xlu0 %2978
      %vm2980 = vcmask 498688
      %v2981 = vsel %vm2980, %v2963, %v2965
      %v2982 = vsel %vm2980, %v2965, %v2967
      %v2983 = vsel %vm2980, %v2967, %v2969
      %v2984 = vsel %vm2980, %v2969, %v2971
      %v2985 = vsel %vm2980, %v2971, %v2973
      %v2986 = vsel %vm2980, %v2973, %v2975
      %v2987 = vsel %vm2980, %v2975, %v2977
      %v2988 = vsel %vm2980, %v2977, %v2979
      %v2990 = vsel %vm216, %v2952, 0
      %v2992 = vsel %vm220, %v2981, 0
      %v2994 = vsel %vm220, %v2982, 0
      %v2996 = vsel %vm220, %v2983, 0
      %v2998 = vsel %vm220, %v2984, 0
      %v3000 = vsel %vm220, %v2985, 0
      %v3002 = vsel %vm220, %v2986, 0
      %v3004 = vsel %vm220, %v2987, 0
      %v3006 = vsel %vm220, %v2988, 0
      %3008 = vmatprep.subr.mxu0 %v2994
      %3009 = vmatpush1.msra.mxu0 %v2992
      %3010 = vmatprep.subr.mxu0 0.0
      %3011 = vmatpush1.msra.mxu0 0.0
      %3012 = vmatprep.subr.mxu0 0.0
      %3013 = vmatpush1.msra.mxu0 0.0
      %3014 = vmatprep.subr.mxu0 0.0
      %3015 = vmatpush1.msra.mxu0 0.0
      %3016 = vmatprep.subr.mxu0 0.0
      %3017 = vmatpush1.msra.mxu0 0.0
      %3018 = vmatprep.subr.mxu0 0.0
      %3019 = vmatpush1.msra.mxu0 0.0
      %3020 = vmatprep.subr.mxu0 0.0
      %3021 = vmatpush1.msra.mxu0 0.0
      %3022 = vmatprep.subr.mxu0 0.0
      %3023 = vmatpush1.msra.mxu0 0.0
      %3024 = vmatprep.subr.mxu0 0.0
      %3025 = vmatpush1.msra.mxu0 0.0
      %3026 = vmatprep.subr.mxu0 0.0
      %3027 = vmatpush1.msra.mxu0 0.0
      %3028 = vmatprep.subr.mxu0 0.0
      %3029 = vmatpush1.msra.mxu0 0.0
      %3030 = vmatprep.subr.mxu0 0.0
      %3031 = vmatpush1.msra.mxu0 0.0
      %3032 = vmatprep.subr.mxu0 0.0
      %3033 = vmatpush1.msra.mxu0 0.0
      %3034 = vmatprep.subr.mxu0 0.0
      %3035 = vmatpush1.msra.mxu0 0.0
      %3036 = vmatprep.subr.mxu0 0.0
      %3037 = vmatpush1.msra.mxu0 0.0
      %3038 = vmatprep.subr.mxu0 0.0
      %3039 = vmatpush1.msra.mxu0 0.0
      %3040 = vmatprep.subr.mxu0 0.0
      %3041 = vmatpush1.msra.mxu0 0.0
      %3042 = vmatprep.subr.mxu0 0.0
      %3043 = vmatpush1.msra.mxu0 0.0
      %3044 = vmatprep.subr.mxu0 0.0
      %3045 = vmatpush1.msra.mxu0 0.0
      %3046 = vmatprep.subr.mxu0 0.0
      %3047 = vmatpush1.msra.mxu0 0.0
      %3048 = vmatprep.subr.mxu0 0.0
      %3049 = vmatpush1.msra.mxu0 0.0
      %3050 = vmatprep.subr.mxu0 0.0
      %3051 = vmatpush1.msra.mxu0 0.0
      %3052 = vmatprep.subr.mxu0 0.0
      %3053 = vmatpush1.msra.mxu0 0.0
      %3054 = vmatprep.subr.mxu0 0.0
      %3055 = vmatpush1.msra.mxu0 0.0
      %3056 = vmatprep.subr.mxu0 0.0
      %3057 = vmatpush1.msra.mxu0 0.0
      %3058 = vmatprep.subr.mxu0 0.0
      %3059 = vmatpush1.msra.mxu0 0.0
      %3060 = vmatprep.subr.mxu0 0.0
      %3061 = vmatpush1.msra.mxu0 0.0
      %3062 = vmatprep.subr.mxu0 0.0
      %3063 = vmatpush1.msra.mxu0 0.0
      %3064 = vmatprep.subr.mxu0 0.0
      %3065 = vmatpush1.msra.mxu0 0.0
      %3066 = vmatprep.subr.mxu0 0.0
      %3067 = vmatpush1.msra.mxu0 0.0
      %3068 = vmatprep.subr.mxu0 0.0
      %3069 = vmatpush1.msra.mxu0 0.0
      %3070 = vmatprep.subr.mxu0 0.0
      %3071 = vmatpush1.msra.mxu0 0.0
      %3072 = vmatprep.mubr.f32.mxu0 0.0
      %3073 = vmatmul.mubr.f32.gmra.mrb[0].mxu0 %v2990
      %v3074 = vpop.f32.mrb[0].mxu0
      %v3075 = vadd.f32 0.0, %v3074
      %v3076 = vpop.f32.mrb[0].mxu0
      %v3077 = vadd.f32 0.0, %v3076
      %3078 = vdwg.mxu0
      %3079 = vmatprep.subr.mxu0 %v2998
      %3080 = vmatpush1.msra.mxu0 %v2996
      %3081 = vmatprep.subr.mxu0 0.0
      %3082 = vmatpush1.msra.mxu0 0.0
      %3083 = vmatprep.subr.mxu0 0.0
      %3084 = vmatpush1.msra.mxu0 0.0
      %3085 = vmatprep.subr.mxu0 0.0
      %3086 = vmatpush1.msra.mxu0 0.0
      %3087 = vmatprep.subr.mxu0 0.0
      %3088 = vmatpush1.msra.mxu0 0.0
      %3089 = vmatprep.subr.mxu0 0.0
      %3090 = vmatpush1.msra.mxu0 0.0
      %3091 = vmatprep.subr.mxu0 0.0
      %3092 = vmatpush1.msra.mxu0 0.0
      %3093 = vmatprep.subr.mxu0 0.0
      %3094 = vmatpush1.msra.mxu0 0.0
      %3095 = vmatprep.subr.mxu0 0.0
      %3096 = vmatpush1.msra.mxu0 0.0
      %3097 = vmatprep.subr.mxu0 0.0
      %3098 = vmatpush1.msra.mxu0 0.0
      %3099 = vmatprep.subr.mxu0 0.0
      %3100 = vmatpush1.msra.mxu0 0.0
      %3101 = vmatprep.subr.mxu0 0.0
      %3102 = vmatpush1.msra.mxu0 0.0
      %3103 = vmatprep.subr.mxu0 0.0
      %3104 = vmatpush1.msra.mxu0 0.0
      %3105 = vmatprep.subr.mxu0 0.0
      %3106 = vmatpush1.msra.mxu0 0.0
      %3107 = vmatprep.subr.mxu0 0.0
      %3108 = vmatpush1.msra.mxu0 0.0
      %3109 = vmatprep.subr.mxu0 0.0
      %3110 = vmatpush1.msra.mxu0 0.0
      %3111 = vmatprep.subr.mxu0 0.0
      %3112 = vmatpush1.msra.mxu0 0.0
      %3113 = vmatprep.subr.mxu0 0.0
      %3114 = vmatpush1.msra.mxu0 0.0
      %3115 = vmatprep.subr.mxu0 0.0
      %3116 = vmatpush1.msra.mxu0 0.0
      %3117 = vmatprep.subr.mxu0 0.0
      %3118 = vmatpush1.msra.mxu0 0.0
      %3119 = vmatprep.subr.mxu0 0.0
      %3120 = vmatpush1.msra.mxu0 0.0
      %3121 = vmatprep.subr.mxu0 0.0
      %3122 = vmatpush1.msra.mxu0 0.0
      %3123 = vmatprep.subr.mxu0 0.0
      %3124 = vmatpush1.msra.mxu0 0.0
      %3125 = vmatprep.subr.mxu0 0.0
      %3126 = vmatpush1.msra.mxu0 0.0
      %3127 = vmatprep.subr.mxu0 0.0
      %3128 = vmatpush1.msra.mxu0 0.0
      %3129 = vmatprep.subr.mxu0 0.0
      %3130 = vmatpush1.msra.mxu0 0.0
      %3131 = vmatprep.subr.mxu0 0.0
      %3132 = vmatpush1.msra.mxu0 0.0
      %3133 = vmatprep.subr.mxu0 0.0
      %3134 = vmatpush1.msra.mxu0 0.0
      %3135 = vmatprep.subr.mxu0 0.0
      %3136 = vmatpush1.msra.mxu0 0.0
      %3137 = vmatprep.subr.mxu0 0.0
      %3138 = vmatpush1.msra.mxu0 0.0
      %3139 = vmatprep.subr.mxu0 0.0
      %3140 = vmatpush1.msra.mxu0 0.0
      %3141 = vmatprep.subr.mxu0 0.0
      %3142 = vmatpush1.msra.mxu0 0.0
      %3143 = vmatprep.mubr.f32.mxu0 0.0
      %3144 = vmatmul.mubr.f32.gmra.mrb[0].mxu0 %v2990
      %v3145 = vpop.f32.mrb[0].mxu0
      %v3146 = vadd.f32 0.0, %v3145
      %v3147 = vpop.f32.mrb[0].mxu0
      %v3148 = vadd.f32 0.0, %v3147
      %3149 = vdwg.mxu0
      %3150 = vmatprep.subr.mxu0 %v3002
      %3151 = vmatpush1.msra.mxu0 %v3000
      %3152 = vmatprep.subr.mxu0 0.0
      %3153 = vmatpush1.msra.mxu0 0.0
      %3154 = vmatprep.subr.mxu0 0.0
      %3155 = vmatpush1.msra.mxu0 0.0
      %3156 = vmatprep.subr.mxu0 0.0
      %3157 = vmatpush1.msra.mxu0 0.0
      %3158 = vmatprep.subr.mxu0 0.0
      %3159 = vmatpush1.msra.mxu0 0.0
      %3160 = vmatprep.subr.mxu0 0.0
      %3161 = vmatpush1.msra.mxu0 0.0
      %3162 = vmatprep.subr.mxu0 0.0
      %3163 = vmatpush1.msra.mxu0 0.0
      %3164 = vmatprep.subr.mxu0 0.0
      %3165 = vmatpush1.msra.mxu0 0.0
      %3166 = vmatprep.subr.mxu0 0.0
      %3167 = vmatpush1.msra.mxu0 0.0
      %3168 = vmatprep.subr.mxu0 0.0
      %3169 = vmatpush1.msra.mxu0 0.0
      %3170 = vmatprep.subr.mxu0 0.0
      %3171 = vmatpush1.msra.mxu0 0.0
      %3172 = vmatprep.subr.mxu0 0.0
      %3173 = vmatpush1.msra.mxu0 0.0
      %3174 = vmatprep.subr.mxu0 0.0
      %3175 = vmatpush1.msra.mxu0 0.0
      %3176 = vmatprep.subr.mxu0 0.0
      %3177 = vmatpush1.msra.mxu0 0.0
      %3178 = vmatprep.subr.mxu0 0.0
      %3179 = vmatpush1.msra.mxu0 0.0
      %3180 = vmatprep.subr.mxu0 0.0
      %3181 = vmatpush1.msra.mxu0 0.0
      %3182 = vmatprep.subr.mxu0 0.0
      %3183 = vmatpush1.msra.mxu0 0.0
      %3184 = vmatprep.subr.mxu0 0.0
      %3185 = vmatpush1.msra.mxu0 0.0
      %3186 = vmatprep.subr.mxu0 0.0
      %3187 = vmatpush1.msra.mxu0 0.0
      %3188 = vmatprep.subr.mxu0 0.0
      %3189 = vmatpush1.msra.mxu0 0.0
      %3190 = vmatprep.subr.mxu0 0.0
      %3191 = vmatpush1.msra.mxu0 0.0
      %3192 = vmatprep.subr.mxu0 0.0
      %3193 = vmatpush1.msra.mxu0 0.0
      %3194 = vmatprep.subr.mxu0 0.0
      %3195 = vmatpush1.msra.mxu0 0.0
      %3196 = vmatprep.subr.mxu0 0.0
      %3197 = vmatpush1.msra.mxu0 0.0
      %3198 = vmatprep.subr.mxu0 0.0
      %3199 = vmatpush1.msra.mxu0 0.0
      %3200 = vmatprep.subr.mxu0 0.0
      %3201 = vmatpush1.msra.mxu0 0.0
      %3202 = vmatprep.subr.mxu0 0.0
      %3203 = vmatpush1.msra.mxu0 0.0
      %3204 = vmatprep.subr.mxu0 0.0
      %3205 = vmatpush1.msra.mxu0 0.0
      %3206 = vmatprep.subr.mxu0 0.0
      %3207 = vmatpush1.msra.mxu0 0.0
      %3208 = vmatprep.subr.mxu0 0.0
      %3209 = vmatpush1.msra.mxu0 0.0
      %3210 = vmatprep.subr.mxu0 0.0
      %3211 = vmatpush1.msra.mxu0 0.0
      %3212 = vmatprep.subr.mxu0 0.0
      %3213 = vmatpush1.msra.mxu0 0.0
      %3214 = vmatprep.mubr.f32.mxu0 0.0
      %3215 = vmatmul.mubr.f32.gmra.mrb[0].mxu0 %v2990
      %v3216 = vpop.f32.mrb[0].mxu0
      %v3217 = vadd.f32 0.0, %v3216
      %v3218 = vpop.f32.mrb[0].mxu0
      %v3219 = vadd.f32 0.0, %v3218
      %3220 = vdwg.mxu0
      %3221 = vmatprep.subr.mxu0 %v3006
      %3222 = vmatpush1.msra.mxu0 %v3004
      %3223 = vmatprep.subr.mxu0 0.0
      %3224 = vmatpush1.msra.mxu0 0.0
      %3225 = vmatprep.subr.mxu0 0.0
      %3226 = vmatpush1.msra.mxu0 0.0
      %3227 = vmatprep.subr.mxu0 0.0
      %3228 = vmatpush1.msra.mxu0 0.0
      %3229 = vmatprep.subr.mxu0 0.0
      %3230 = vmatpush1.msra.mxu0 0.0
      %3231 = vmatprep.subr.mxu0 0.0
      %3232 = vmatpush1.msra.mxu0 0.0
      %3233 = vmatprep.subr.mxu0 0.0
      %3234 = vmatpush1.msra.mxu0 0.0
      %3235 = vmatprep.subr.mxu0 0.0
      %3236 = vmatpush1.msra.mxu0 0.0
      %3237 = vmatprep.subr.mxu0 0.0
      %3238 = vmatpush1.msra.mxu0 0.0
      %3239 = vmatprep.subr.mxu0 0.0
      %3240 = vmatpush1.msra.mxu0 0.0
      %3241 = vmatprep.subr.mxu0 0.0
      %3242 = vmatpush1.msra.mxu0 0.0
      %3243 = vmatprep.subr.mxu0 0.0
      %3244 = vmatpush1.msra.mxu0 0.0
      %3245 = vmatprep.subr.mxu0 0.0
      %3246 = vmatpush1.msra.mxu0 0.0
      %3247 = vmatprep.subr.mxu0 0.0
      %3248 = vmatpush1.msra.mxu0 0.0
      %3249 = vmatprep.subr.mxu0 0.0
      %3250 = vmatpush1.msra.mxu0 0.0
      %3251 = vmatprep.subr.mxu0 0.0
      %3252 = vmatpush1.msra.mxu0 0.0
      %3253 = vmatprep.subr.mxu0 0.0
      %3254 = vmatpush1.msra.mxu0 0.0
      %3255 = vmatprep.subr.mxu0 0.0
      %3256 = vmatpush1.msra.mxu0 0.0
      %3257 = vmatprep.subr.mxu0 0.0
      %3258 = vmatpush1.msra.mxu0 0.0
      %3259 = vmatprep.subr.mxu0 0.0
      %3260 = vmatpush1.msra.mxu0 0.0
      %3261 = vmatprep.subr.mxu0 0.0
      %3262 = vmatpush1.msra.mxu0 0.0
      %3263 = vmatprep.subr.mxu0 0.0
      %3264 = vmatpush1.msra.mxu0 0.0
      %3265 = vmatprep.subr.mxu0 0.0
      %3266 = vmatpush1.msra.mxu0 0.0
      %3267 = vmatprep.subr.mxu0 0.0
      %3268 = vmatpush1.msra.mxu0 0.0
      %3269 = vmatprep.subr.mxu0 0.0
      %3270 = vmatpush1.msra.mxu0 0.0
      %3271 = vmatprep.subr.mxu0 0.0
      %3272 = vmatpush1.msra.mxu0 0.0
      %3273 = vmatprep.subr.mxu0 0.0
      %3274 = vmatpush1.msra.mxu0 0.0
      %3275 = vmatprep.subr.mxu0 0.0
      %3276 = vmatpush1.msra.mxu0 0.0
      %3277 = vmatprep.subr.mxu0 0.0
      %3278 = vmatpush1.msra.mxu0 0.0
      %3279 = vmatprep.subr.mxu0 0.0
      %3280 = vmatpush1.msra.mxu0 0.0
      %3281 = vmatprep.subr.mxu0 0.0
      %3282 = vmatpush1.msra.mxu0 0.0
      %3283 = vmatprep.subr.mxu0 0.0
      %3284 = vmatpush1.msra.mxu0 0.0
      %3285 = vmatprep.mubr.f32.mxu0 0.0
      %3286 = vmatmul.mubr.f32.gmra.mrb[0].mxu0 %v2990
      %v3287 = vpop.f32.mrb[0].mxu0
      %v3288 = vadd.f32 0.0, %v3287
      %v3289 = vpop.f32.mrb[0].mxu0
      %v3290 = vadd.f32 0.0, %v3289
      %3291 = vdwg.mxu0
      %v3292 = vadd.f32 %v2938, %v3075
      %v3293 = vadd.f32 %v2939, %v3077
      %v3294 = vadd.f32 %v2940, %v3146
      %v3295 = vadd.f32 %v2941, %v3148
      %v3296 = vadd.f32 %v2942, %v3217
      %v3297 = vadd.f32 %v2943, %v3219
      %v3298 = vadd.f32 %v2944, %v3288
      %v3299 = vadd.f32 %v2945, %v3290
      %v3300 = vld [vmem:[%s2] sm:$0xff]
      %3302 = vset.pattern.permute.xlu0 0
      %3303 = vperm.xlu0 %3302, %v3300
      %v3304 = vpop.permute.xlu0 %3303
      %v3306 = vadd.f32 %v3292, %v3304
      %v3307 = vadd.f32 %v3293, %v3304
      %v3308 = vadd.f32 %v3294, %v3304
      %v3309 = vadd.f32 %v3295, %v3304
      %v3310 = vadd.f32 %v3296, %v3304
      %v3311 = vadd.f32 %v3297, %v3304
      %v3312 = vadd.f32 %v3298, %v3304
      %v3313 = vadd.f32 %v3299, %v3304
      %v3314 = vadd.f32 %v3306, 3.0
      %v3315 = vadd.f32 %v3307, 3.0
      %v3316 = vadd.f32 %v3308, 3.0
      %v3317 = vadd.f32 %v3309, 3.0
      %v3318 = vadd.f32 %v3310, 3.0
      %v3319 = vadd.f32 %v3311, 3.0
      %v3320 = vadd.f32 %v3312, 3.0
      %v3321 = vadd.f32 %v3313, 3.0
      %v3322 = vmax.f32 %v3314, 0.0
      %v3323 = vmax.f32 %v3315, 0.0
      %v3324 = vmax.f32 %v3316, 0.0
      %v3325 = vmax.f32 %v3317, 0.0
      %v3326 = vmax.f32 %v3318, 0.0
      %v3327 = vmax.f32 %v3319, 0.0
      %v3328 = vmax.f32 %v3320, 0.0
      %v3329 = vmax.f32 %v3321, 0.0
      %v3330 = vmin.f32 %v3322, 6.0
      %v3331 = vmin.f32 %v3323, 6.0
      %v3332 = vmin.f32 %v3324, 6.0
      %v3333 = vmin.f32 %v3325, 6.0
      %v3334 = vmin.f32 %v3326, 6.0
      %v3335 = vmin.f32 %v3327, 6.0
      %v3336 = vmin.f32 %v3328, 6.0
      %v3337 = vmin.f32 %v3329, 6.0
      %v3338 = vmul.f32 %v3306, %v3330
      %v3339 = vmul.f32 %v3307, %v3331
      %v3340 = vmul.f32 %v3308, %v3332
      %v3341 = vmul.f32 %v3309, %v3333
      %v3342 = vmul.f32 %v3310, %v3334
      %v3343 = vmul.f32 %v3311, %v3335
      %v3344 = vmul.f32 %v3312, %v3336
      %v3345 = vmul.f32 %v3313, %v3337
      %v3346 = vmul.f32 %v3338, 0.16666667
      %v3347 = vmul.f32 %v3339, 0.16666667
      %v3348 = vmul.f32 %v3340, 0.16666667
      %v3349 = vmul.f32 %v3341, 0.16666667
      %v3350 = vmul.f32 %v3342, 0.16666667
      %v3351 = vmul.f32 %v3343, 0.16666667
      %v3352 = vmul.f32 %v3344, 0.16666667
      %v3353 = vmul.f32 %v3345, 0.16666667
      %3354 = vst [vmem:[%s170] sm:$0xff] %v3346
      %3355 = vst [vmem:[%s170 + $0x8] sm:$0xff] %v3347
      %3356 = vst [vmem:[%s170 + $0x10] sm:$0xff] %v3348
      %3357 = vst [vmem:[%s170 + $0x18] sm:$0xff] %v3349
      %3358 = vst [vmem:[%s170 + $0x20] sm:$0xff] %v3350
      %3359 = vst [vmem:[%s170 + $0x28] sm:$0xff] %v3351
      %3360 = vst [vmem:[%s170 + $0x30] sm:$0xff] %v3352
      %3361 = vst [vmem:[%s170 + $0x38] sm:$0xff] %v3353
      %s3362 = smul.u32 8, %s14
      %p3363 = scmp.lt.s32.totalorder %s3362, 39
      %s3364 = scalar_select %p3363, %s3362, 39
      %s3365 = smul.addr %s3364, 8
      %s3366 = scalar_lea.vmem %s3, %s3365
      // Predicated region
      $region33: #{conv2d_hardswish_pallas.1} parent=31 // pred_check
        %p3367 = pneg %p100
      $region34: #{conv2d_hardswish_pallas.1} parent=31 // pred_check_branch
        %3369 = sbr.rel (%p3367) target = $region36
      $region35: #{conv2d_hardswish_pallas.1} parent=31 // pred_region
        %s3370 = smul.u32 8, %s14
      $region36: #{conv2d_hardswish_pallas.1} parent=31 // pred_fallthru
        _
    $region32: #{conv2d_hardswish_pallas.1} parent=5 // pred_fallthru
      _
    %p3371 = scmp.le.s32.totalorder 2, %s9
    // Predicated region
    $region37: #{conv2d_hardswish_pallas.1} parent=5 // pred_check
      %p3372 = pneg %p3371
    $region38: #{conv2d_hardswish_pallas.1} parent=5 // pred_check_branch
      %3374 = sbr.rel (%p3372) target = $region40
    $region39: #{conv2d_hardswish_pallas.1} parent=5 // pred_region
      %s3375 = ssub.s32 %s9, 2
      // Predicated region
      $region41: #{conv2d_hardswish_pallas.1} parent=39 // pred_check
        %p3376 = pneg %p106
      $region42: #{conv2d_hardswish_pallas.1} parent=39 // pred_check_branch
        %3378 = sbr.rel (%p3376) target = $region44
      $region43: #{conv2d_hardswish_pallas.1} parent=39 // pred_region
        %s3379 = smul.u32 8, %s15
        %p3380 = scmp.lt.s32.totalorder %s3379, 39
        %s3381 = scalar_select %p3380, %s3379, 39
        %s3382 = smul.addr %s3381, 8
        %s3383 = scalar_lea.vmem %s3, %s3382
      $region44: #{conv2d_hardswish_pallas.1} parent=39 // pred_fallthru
        _
    $region40: #{conv2d_hardswish_pallas.1} parent=5 // pred_fallthru
      _
  $region6: #{conv2d_hardswish_pallas.1} parent=0 // loop_footer
    %s13 = sadd.s32 1, %s9
  $region7: #{conv2d_hardswish_pallas.1} parent=0 // loop_footer_branch
    %8 = sbr.rel target = $region3
  $region8: #{conv2d_hardswish_pallas.1} parent=0 // loop_exit
    _

</llo_original>
